<compile_context>
chip_gen: v7x
topology: tpu7x:2x2x1
jax: 0.10.0
libtpu: 0.0.40
codegen_flags: <defaults>
</compile_context>

<pallas_src>
import jax
import jax.numpy as jnp
from jax import lax
from jax.experimental import pallas as pl
from jax.experimental.pallas import tpu as pltpu

_EPS = 1e-5
P = 128          # padded feature width (one full lane row)
L = 4            # number of EdgeConv layers


def _bn_train(x, gamma, beta):
    # BatchNorm1d, training mode: per-feature batch mean / biased variance.
    mu = jnp.mean(x, axis=0, keepdims=True)
    var = jnp.mean((x - mu) ** 2, axis=0, keepdims=True)
    scale = lax.rsqrt(var + _EPS) * gamma
    return (x - mu) * scale + beta


def gcn_kernel(src_ref, dst_ref, ef_ref, nf_ref,
               g1e_ref, b1e_ref, g1h_ref, b1h_ref, w1e_ref, w1h_ref, c1_ref,
               g2r_ref, b2r_ref, g2h_ref, b2h_ref, w2r_ref, w2h_ref, c2_ref,
               out_ref):
    n_edges = ef_ref.shape[0]
    n_nodes = nf_ref.shape[0]
    n_layers = w1e_ref.shape[0]

    src = src_ref[...]                                    # [E, 1] int32
    dst = dst_ref[...]                                    # [1, E] int32

    # One-hot gather / scatter operators built in-register from the index
    # vectors (computed once, reused by all 4 layers; no dense S/A from HBM).
    node_ids_e = lax.broadcasted_iota(jnp.int32, (n_edges, n_nodes), 1)
    src_oh = jnp.where(src == node_ids_e, 1.0, 0.0)       # [E, N]
    node_ids_n = lax.broadcasted_iota(jnp.int32, (n_nodes, n_edges), 0)
    dst_oh_t = jnp.where(node_ids_n == dst, 1.0, 0.0)     # [N, E]
    deg = jnp.sum(dst_oh_t, axis=1, keepdims=True)        # [N, 1] in-degree
    inv_deg = 1.0 / jnp.maximum(deg, 1.0)                 # exact; 0-deg nodes -> 0

    hid = nf_ref[...]                                     # [N, P] stays on-chip
    ef = ef_ref[...]                                      # [E, P]

    for l in range(n_layers):                             # static unroll, 4 layers fused
        # mlp1(cat(edge_feature, hid[src])) -- cat realized by splitting BN/W.
        src_h = jnp.dot(src_oh, hid, preferred_element_type=jnp.float32)   # gather
        xe = _bn_train(ef, g1e_ref[l], b1e_ref[l])
        xh = _bn_train(src_h, g1h_ref[l], b1h_ref[l])
        edge_out = jnp.maximum(
            jnp.dot(xe, w1e_ref[l], preferred_element_type=jnp.float32)
            + jnp.dot(xh, w1h_ref[l], preferred_element_type=jnp.float32)
            + c1_ref[l], 0.0)

        # fn.mean('msg','reduced_vector'): mean over incoming edges.
        reduced = jnp.dot(dst_oh_t, edge_out,
                          preferred_element_type=jnp.float32) * inv_deg

        # mlp2(cat(reduced_vector, hid))
        yr = _bn_train(reduced, g2r_ref[l], b2r_ref[l])
        yh = _bn_train(hid, g2h_ref[l], b2h_ref[l])
        hid = jnp.maximum(
            jnp.dot(yr, w2r_ref[l], preferred_element_type=jnp.float32)
            + jnp.dot(yh, w2h_ref[l], preferred_element_type=jnp.float32)
            + c2_ref[l], 0.0)

    out_ref[...] = hid                                    # [N, P] unmasked stores


# ------------------------------ host-side glue ------------------------------

def _pad_last(x, p=P):
    return jnp.pad(x, [(0, 0)] * (x.ndim - 1) + [(0, p - x.shape[-1])])


def _pad_mat(w, p=P):
    return jnp.pad(w, [(0, p - w.shape[0]), (0, p - w.shape[1])])


def build_kernel_params(layers):
    """Zero-pad each per-layer param to [1,P]/[P,P] and stack over layers."""
    stacked = []
    for part in (0, 1):            # mlp1, mlp2
        for idx in range(7):       # gamma_a, beta_a, gamma_b, beta_b, Wa, Wb, bias
            pad = _pad_mat if idx in (4, 5) else _pad_last
            stacked.append(jnp.stack([pad(layer[part][idx]) for layer in layers]))
    return tuple(stacked)


def gcn_forward(node_feat, edge_feat, src, dst, layers):
    n_nodes, n_edges = node_feat.shape[0], edge_feat.shape[0]
    out_dim = layers[-1][2]

    nf_p = _pad_last(node_feat.astype(jnp.float32))        # [N, P]
    ef_p = _pad_last(edge_feat.astype(jnp.float32))        # [E, P]
    src_c = src.astype(jnp.int32).reshape(n_edges, 1)      # [E, 1]
    dst_r = dst.astype(jnp.int32).reshape(1, n_edges)      # [1, E]
    params = build_kernel_params(layers)

    n_in = 4 + len(params)
    flops = 2 * L * (n_edges * n_nodes * P          # gather
                     + 2 * n_edges * P * P          # mlp1
                     + n_nodes * n_edges * P        # scatter-mean
                     + 2 * n_nodes * P * P)         # mlp2
    bytes_accessed = 4 * int(src_c.size + dst_r.size + ef_p.size + nf_p.size
                             + sum(int(p.size) for p in params) + n_nodes * P)
    cost = pl.CostEstimate(flops=int(flops),
                           transcendentals=int(L * 4 * P),
                           bytes_accessed=bytes_accessed)

    out_padded = pl.pallas_call(
        gcn_kernel,
        out_shape=jax.ShapeDtypeStruct((n_nodes, P), jnp.float32),
        in_specs=[pl.BlockSpec(memory_space=pltpu.MemorySpace.VMEM)] * n_in,
        out_specs=pl.BlockSpec(memory_space=pltpu.MemorySpace.VMEM),
        cost_estimate=cost,
    )(src_c, dst_r, ef_p, nf_p, *params)
    return out_padded[:, :out_dim]


def init_mlp_params(key, fan_in_split, fan_out):
    """MLP([fa+fb, fan_out]) params, with BN/Linear split along the cat boundary."""
    fa, fb = fan_in_split
    fan_in = fa + fb
    k_w, k_b = jax.random.split(key)
    bound = 1.0 / (fan_in ** 0.5)                 # nn.Linear default init range
    W = jax.random.uniform(k_w, (fan_in, fan_out), jnp.float32, -bound, bound)
    b = jax.random.uniform(k_b, (1, fan_out), jnp.float32, -bound, bound)
    gamma_a = jnp.ones((1, fa), jnp.float32)      # BN weight init = 1
    beta_a = jnp.zeros((1, fa), jnp.float32)      # BN bias init = 0
    gamma_b = jnp.ones((1, fb), jnp.float32)
    beta_b = jnp.zeros((1, fb), jnp.float32)
    return (gamma_a, beta_a, gamma_b, beta_b, W[:fa], W[fa:], b)


def ref_forward(node_feat, edge_feat, src, dst, layers):
    # pure-JAX reference with the module's exact math, for a correctness check
    n_nodes = node_feat.shape[0]
    deg = jnp.zeros((n_nodes,), jnp.float32).at[dst].add(1.0)
    inv_deg = (1.0 / jnp.maximum(deg, 1.0))[:, None]
    hid = node_feat
    for (p1, p2, _) in layers:
        g1e, b1e, g1h, b1h, w1e, w1h, c1 = p1
        g2r, b2r, g2h, b2h, w2r, w2h, c2 = p2
        src_h = hid[src]
        edge_out = jnp.maximum(
            _bn_train(edge_feat, g1e, b1e) @ w1e
            + _bn_train(src_h, g1h, b1h) @ w1h + c1, 0.0)
        summed = jnp.zeros((n_nodes, edge_out.shape[1]), jnp.float32).at[dst].add(edge_out)
        reduced = summed * inv_deg
        hid = jnp.maximum(
            _bn_train(reduced, g2r, b2r) @ w2r
            + _bn_train(hid, g2h, b2h) @ w2h + c2, 0.0)
    return hid


if __name__ == "__main__":
    key = jax.random.PRNGKey(0)
    ks = jax.random.split(key, 5)

    N, E = 16, 48                       # small synthetic graph
    src = jax.random.randint(ks[0], (E,), 0, N)
    dst = jax.random.randint(ks[1], (E,), 0, N)
    node_feat = jax.random.normal(ks[2], (N, 1), jnp.float32)   # g.ndata['feature']
    edge_feat = jax.random.normal(ks[3], (E, 2), jnp.float32)   # g.edata['feature']

    # (edge_feat_dim, hid_dim, mlp1_out, mlp2_out) implied by GCN.__init__
    layer_cfgs = [(2, 1, 9, 10), (2, 10, 10, 10), (2, 10, 10, 10), (2, 10, 10, 10)]
    pkeys = jax.random.split(ks[4], 2 * len(layer_cfgs))
    layers = []
    for i, (fe, fh, h1, h2) in enumerate(layer_cfgs):
        p1 = init_mlp_params(pkeys[2 * i], (fe, fh), h1)       # mlp1: cat(edge, src_hid)
        p2 = init_mlp_params(pkeys[2 * i + 1], (h1, fh), h2)   # mlp2: cat(reduced, hid)
        layers.append((p1, p2, h2))

    out = gcn_forward(node_feat, edge_feat, src, dst, layers)
    out = jax.block_until_ready(out)
    assert out.shape == (N, 10) and out.dtype == jnp.float32

    ref = ref_forward(node_feat, edge_feat, src, dst, layers)
    assert jnp.allclose(out, ref, atol=1e-3, rtol=1e-3), "kernel/ref mismatch"

    print("KERNEL_OK")
</pallas_src>

<mosaic_0001>
module attributes {stable_mosaic.version = 11 : i64} {
  func.func @gcn_kernel(%arg0: memref<48x1xi32, #tpu.memory_space<vmem>>, %arg1: memref<1x48xi32, #tpu.memory_space<vmem>>, %arg2: memref<48x128xf32, #tpu.memory_space<vmem>>, %arg3: memref<16x128xf32, #tpu.memory_space<vmem>>, %arg4: memref<4x1x128xf32, #tpu.memory_space<vmem>>, %arg5: memref<4x1x128xf32, #tpu.memory_space<vmem>>, %arg6: memref<4x1x128xf32, #tpu.memory_space<vmem>>, %arg7: memref<4x1x128xf32, #tpu.memory_space<vmem>>, %arg8: memref<4x128x128xf32, #tpu.memory_space<vmem>>, %arg9: memref<4x128x128xf32, #tpu.memory_space<vmem>>, %arg10: memref<4x1x128xf32, #tpu.memory_space<vmem>>, %arg11: memref<4x1x128xf32, #tpu.memory_space<vmem>>, %arg12: memref<4x1x128xf32, #tpu.memory_space<vmem>>, %arg13: memref<4x1x128xf32, #tpu.memory_space<vmem>>, %arg14: memref<4x1x128xf32, #tpu.memory_space<vmem>>, %arg15: memref<4x128x128xf32, #tpu.memory_space<vmem>>, %arg16: memref<4x128x128xf32, #tpu.memory_space<vmem>>, %arg17: memref<4x1x128xf32, #tpu.memory_space<vmem>>, %arg18: memref<16x128xf32, #tpu.memory_space<vmem>>) attributes {dimension_semantics = [], scalar_prefetch = 0 : i64, scratch_operands = 0 : i64, tpu.core_type = #tpu.core_type<tc>} {
    %c0 = arith.constant 0 : index
    %c0_0 = arith.constant 0 : index
    %0 = vector.load %arg0[%c0, %c0_0] : memref<48x1xi32, #tpu.memory_space<vmem>>, vector<48x1xi32>
    %c0_1 = arith.constant 0 : index
    %c0_2 = arith.constant 0 : index
    %1 = vector.load %arg1[%c0_1, %c0_2] : memref<1x48xi32, #tpu.memory_space<vmem>>, vector<1x48xi32>
    %2 = tpu.iota {dimensions = array<i32: 1>} : vector<48x16xi32>
    %3 = vector.broadcast %0 : vector<48x1xi32> to vector<48x16xi32>
    %4 = arith.cmpi eq, %3, %2 : vector<48x16xi32>
    %cst = arith.constant 1.000000e+00 : f32
    %cst_3 = arith.constant 0.000000e+00 : f32
    %5 = vector.broadcast %cst : f32 to vector<48x16xf32>
    %6 = vector.broadcast %cst_3 : f32 to vector<48x16xf32>
    %7 = arith.select %4, %5, %6 : vector<48x16xi1>, vector<48x16xf32>
    %8 = tpu.iota {dimensions = array<i32: 0>} : vector<16x48xi32>
    %9 = vector.broadcast %1 : vector<1x48xi32> to vector<16x48xi32>
    %10 = arith.cmpi eq, %8, %9 : vector<16x48xi32>
    %cst_4 = arith.constant 1.000000e+00 : f32
    %cst_5 = arith.constant 0.000000e+00 : f32
    %11 = vector.broadcast %cst_4 : f32 to vector<16x48xf32>
    %12 = vector.broadcast %cst_5 : f32 to vector<16x48xf32>
    %13 = arith.select %10, %11, %12 : vector<16x48xi1>, vector<16x48xf32>
    %cst_6 = arith.constant dense<0.000000e+00> : vector<16xf32>
    %14 = vector.multi_reduction <add>, %13, %cst_6 [1] : vector<16x48xf32> to vector<16xf32>
    %15 = vector.shape_cast %14 : vector<16xf32> to vector<16x1xf32>
    %cst_7 = arith.constant 1.000000e+00 : f32
    %16 = vector.broadcast %cst_7 : f32 to vector<16x1xf32>
    %17 = arith.maximumf %15, %16 : vector<16x1xf32>
    %cst_8 = arith.constant 1.000000e+00 : f32
    %18 = vector.broadcast %cst_8 : f32 to vector<16x1xf32>
    %19 = arith.divf %18, %17 : vector<16x1xf32>
    %c0_9 = arith.constant 0 : index
    %c0_10 = arith.constant 0 : index
    %20 = vector.load %arg3[%c0_9, %c0_10] : memref<16x128xf32, #tpu.memory_space<vmem>>, vector<16x128xf32>
    %c0_11 = arith.constant 0 : index
    %c0_12 = arith.constant 0 : index
    %21 = vector.load %arg2[%c0_11, %c0_12] : memref<48x128xf32, #tpu.memory_space<vmem>>, vector<48x128xf32>
    %cst_13 = arith.constant dense<0.000000e+00> : vector<48x128xf32>
    %22 = tpu.matmul %7, %20, %cst_13 {dimension_numbers = #tpu.dot_dimension_numbers<[1], [0], [0], [1], [0, 0, 1, 1], [], []>} : vector<48x16xf32>, vector<16x128xf32>, vector<48x128xf32> -> vector<48x128xf32>
    %c0_14 = arith.constant 0 : index
    %c0_15 = arith.constant 0 : index
    %c0_16 = arith.constant 0 : index
    %23 = vector.load %arg4[%c0_14, %c0_15, %c0_16] : memref<4x1x128xf32, #tpu.memory_space<vmem>>, vector<1x1x128xf32>
    %24 = vector.shape_cast %23 : vector<1x1x128xf32> to vector<1x128xf32>
    %c0_17 = arith.constant 0 : index
    %c0_18 = arith.constant 0 : index
    %c0_19 = arith.constant 0 : index
    %25 = vector.load %arg5[%c0_17, %c0_18, %c0_19] : memref<4x1x128xf32, #tpu.memory_space<vmem>>, vector<1x1x128xf32>
    %26 = vector.shape_cast %25 : vector<1x1x128xf32> to vector<1x128xf32>
    %cst_20 = arith.constant dense<0.000000e+00> : vector<128xf32>
    %27 = vector.multi_reduction <add>, %21, %cst_20 [0] : vector<48x128xf32> to vector<128xf32>
    %28 = vector.shape_cast %27 : vector<128xf32> to vector<1x128xf32>
    %cst_21 = arith.constant 4.800000e+01 : f32
    %29 = vector.broadcast %cst_21 : f32 to vector<1x128xf32>
    %30 = arith.divf %28, %29 : vector<1x128xf32>
    %31 = vector.broadcast %30 : vector<1x128xf32> to vector<48x128xf32>
    %32 = arith.subf %21, %31 : vector<48x128xf32>
    %33 = arith.mulf %32, %32 : vector<48x128xf32>
    %cst_22 = arith.constant dense<0.000000e+00> : vector<128xf32>
    %34 = vector.multi_reduction <add>, %33, %cst_22 [0] : vector<48x128xf32> to vector<128xf32>
    %35 = vector.shape_cast %34 : vector<128xf32> to vector<1x128xf32>
    %cst_23 = arith.constant 4.800000e+01 : f32
    %36 = vector.broadcast %cst_23 : f32 to vector<1x128xf32>
    %37 = arith.divf %35, %36 : vector<1x128xf32>
    %cst_24 = arith.constant 9.99999974E-6 : f32
    %38 = vector.broadcast %cst_24 : f32 to vector<1x128xf32>
    %39 = arith.addf %37, %38 : vector<1x128xf32>
    %40 = math.rsqrt %39 : vector<1x128xf32>
    %41 = arith.mulf %40, %24 : vector<1x128xf32>
    %42 = vector.broadcast %30 : vector<1x128xf32> to vector<48x128xf32>
    %43 = arith.subf %21, %42 : vector<48x128xf32>
    %44 = vector.broadcast %41 : vector<1x128xf32> to vector<48x128xf32>
    %45 = arith.mulf %43, %44 : vector<48x128xf32>
    %46 = vector.broadcast %26 : vector<1x128xf32> to vector<48x128xf32>
    %47 = arith.addf %45, %46 : vector<48x128xf32>
    %c0_25 = arith.constant 0 : index
    %c0_26 = arith.constant 0 : index
    %c0_27 = arith.constant 0 : index
    %48 = vector.load %arg6[%c0_25, %c0_26, %c0_27] : memref<4x1x128xf32, #tpu.memory_space<vmem>>, vector<1x1x128xf32>
    %49 = vector.shape_cast %48 : vector<1x1x128xf32> to vector<1x128xf32>
    %c0_28 = arith.constant 0 : index
    %c0_29 = arith.constant 0 : index
    %c0_30 = arith.constant 0 : index
    %50 = vector.load %arg7[%c0_28, %c0_29, %c0_30] : memref<4x1x128xf32, #tpu.memory_space<vmem>>, vector<1x1x128xf32>
    %51 = vector.shape_cast %50 : vector<1x1x128xf32> to vector<1x128xf32>
    %cst_31 = arith.constant dense<0.000000e+00> : vector<128xf32>
    %52 = vector.multi_reduction <add>, %22, %cst_31 [0] : vector<48x128xf32> to vector<128xf32>
    %53 = vector.shape_cast %52 : vector<128xf32> to vector<1x128xf32>
    %cst_32 = arith.constant 4.800000e+01 : f32
    %54 = vector.broadcast %cst_32 : f32 to vector<1x128xf32>
    %55 = arith.divf %53, %54 : vector<1x128xf32>
    %56 = vector.broadcast %55 : vector<1x128xf32> to vector<48x128xf32>
    %57 = arith.subf %22, %56 : vector<48x128xf32>
    %58 = arith.mulf %57, %57 : vector<48x128xf32>
    %cst_33 = arith.constant dense<0.000000e+00> : vector<128xf32>
    %59 = vector.multi_reduction <add>, %58, %cst_33 [0] : vector<48x128xf32> to vector<128xf32>
    %60 = vector.shape_cast %59 : vector<128xf32> to vector<1x128xf32>
    %cst_34 = arith.constant 4.800000e+01 : f32
    %61 = vector.broadcast %cst_34 : f32 to vector<1x128xf32>
    %62 = arith.divf %60, %61 : vector<1x128xf32>
    %cst_35 = arith.constant 9.99999974E-6 : f32
    %63 = vector.broadcast %cst_35 : f32 to vector<1x128xf32>
    %64 = arith.addf %62, %63 : vector<1x128xf32>
    %65 = math.rsqrt %64 : vector<1x128xf32>
    %66 = arith.mulf %65, %49 : vector<1x128xf32>
    %67 = vector.broadcast %55 : vector<1x128xf32> to vector<48x128xf32>
    %68 = arith.subf %22, %67 : vector<48x128xf32>
    %69 = vector.broadcast %66 : vector<1x128xf32> to vector<48x128xf32>
    %70 = arith.mulf %68, %69 : vector<48x128xf32>
    %71 = vector.broadcast %51 : vector<1x128xf32> to vector<48x128xf32>
    %72 = arith.addf %70, %71 : vector<48x128xf32>
    %c0_36 = arith.constant 0 : index
    %c0_37 = arith.constant 0 : index
    %c0_38 = arith.constant 0 : index
    %73 = vector.load %arg8[%c0_36, %c0_37, %c0_38] : memref<4x128x128xf32, #tpu.memory_space<vmem>>, vector<1x128x128xf32>
    %74 = vector.shape_cast %73 : vector<1x128x128xf32> to vector<128x128xf32>
    %cst_39 = arith.constant dense<0.000000e+00> : vector<48x128xf32>
    %75 = tpu.matmul %47, %74, %cst_39 {dimension_numbers = #tpu.dot_dimension_numbers<[1], [0], [0], [1], [0, 0, 1, 1], [], []>} : vector<48x128xf32>, vector<128x128xf32>, vector<48x128xf32> -> vector<48x128xf32>
    %c0_40 = arith.constant 0 : index
    %c0_41 = arith.constant 0 : index
    %c0_42 = arith.constant 0 : index
    %76 = vector.load %arg9[%c0_40, %c0_41, %c0_42] : memref<4x128x128xf32, #tpu.memory_space<vmem>>, vector<1x128x128xf32>
    %77 = vector.shape_cast %76 : vector<1x128x128xf32> to vector<128x128xf32>
    %cst_43 = arith.constant dense<0.000000e+00> : vector<48x128xf32>
    %78 = tpu.matmul %72, %77, %cst_43 {dimension_numbers = #tpu.dot_dimension_numbers<[1], [0], [0], [1], [0, 0, 1, 1], [], []>} : vector<48x128xf32>, vector<128x128xf32>, vector<48x128xf32> -> vector<48x128xf32>
    %79 = arith.addf %75, %78 : vector<48x128xf32>
    %c0_44 = arith.constant 0 : index
    %c0_45 = arith.constant 0 : index
    %c0_46 = arith.constant 0 : index
    %80 = vector.load %arg10[%c0_44, %c0_45, %c0_46] : memref<4x1x128xf32, #tpu.memory_space<vmem>>, vector<1x1x128xf32>
    %81 = vector.shape_cast %80 : vector<1x1x128xf32> to vector<1x128xf32>
    %82 = vector.broadcast %81 : vector<1x128xf32> to vector<48x128xf32>
    %83 = arith.addf %79, %82 : vector<48x128xf32>
    %cst_47 = arith.constant 0.000000e+00 : f32
    %84 = vector.broadcast %cst_47 : f32 to vector<48x128xf32>
    %85 = arith.maximumf %83, %84 : vector<48x128xf32>
    %cst_48 = arith.constant dense<0.000000e+00> : vector<16x128xf32>
    %86 = tpu.matmul %13, %85, %cst_48 {dimension_numbers = #tpu.dot_dimension_numbers<[1], [0], [0], [1], [0, 0, 1, 1], [], []>} : vector<16x48xf32>, vector<48x128xf32>, vector<16x128xf32> -> vector<16x128xf32>
    %87 = vector.broadcast %19 : vector<16x1xf32> to vector<16x128xf32>
    %88 = arith.mulf %86, %87 : vector<16x128xf32>
    %c0_49 = arith.constant 0 : index
    %c0_50 = arith.constant 0 : index
    %c0_51 = arith.constant 0 : index
    %89 = vector.load %arg11[%c0_49, %c0_50, %c0_51] : memref<4x1x128xf32, #tpu.memory_space<vmem>>, vector<1x1x128xf32>
    %90 = vector.shape_cast %89 : vector<1x1x128xf32> to vector<1x128xf32>
    %c0_52 = arith.constant 0 : index
    %c0_53 = arith.constant 0 : index
    %c0_54 = arith.constant 0 : index
    %91 = vector.load %arg12[%c0_52, %c0_53, %c0_54] : memref<4x1x128xf32, #tpu.memory_space<vmem>>, vector<1x1x128xf32>
    %92 = vector.shape_cast %91 : vector<1x1x128xf32> to vector<1x128xf32>
    %cst_55 = arith.constant dense<0.000000e+00> : vector<128xf32>
    %93 = vector.multi_reduction <add>, %88, %cst_55 [0] : vector<16x128xf32> to vector<128xf32>
    %94 = vector.shape_cast %93 : vector<128xf32> to vector<1x128xf32>
    %cst_56 = arith.constant 1.600000e+01 : f32
    %95 = vector.broadcast %cst_56 : f32 to vector<1x128xf32>
    %96 = arith.divf %94, %95 : vector<1x128xf32>
    %97 = vector.broadcast %96 : vector<1x128xf32> to vector<16x128xf32>
    %98 = arith.subf %88, %97 : vector<16x128xf32>
    %99 = arith.mulf %98, %98 : vector<16x128xf32>
    %cst_57 = arith.constant dense<0.000000e+00> : vector<128xf32>
    %100 = vector.multi_reduction <add>, %99, %cst_57 [0] : vector<16x128xf32> to vector<128xf32>
    %101 = vector.shape_cast %100 : vector<128xf32> to vector<1x128xf32>
    %cst_58 = arith.constant 1.600000e+01 : f32
    %102 = vector.broadcast %cst_58 : f32 to vector<1x128xf32>
    %103 = arith.divf %101, %102 : vector<1x128xf32>
    %cst_59 = arith.constant 9.99999974E-6 : f32
    %104 = vector.broadcast %cst_59 : f32 to vector<1x128xf32>
    %105 = arith.addf %103, %104 : vector<1x128xf32>
    %106 = math.rsqrt %105 : vector<1x128xf32>
    %107 = arith.mulf %106, %90 : vector<1x128xf32>
    %108 = vector.broadcast %96 : vector<1x128xf32> to vector<16x128xf32>
    %109 = arith.subf %88, %108 : vector<16x128xf32>
    %110 = vector.broadcast %107 : vector<1x128xf32> to vector<16x128xf32>
    %111 = arith.mulf %109, %110 : vector<16x128xf32>
    %112 = vector.broadcast %92 : vector<1x128xf32> to vector<16x128xf32>
    %113 = arith.addf %111, %112 : vector<16x128xf32>
    %c0_60 = arith.constant 0 : index
    %c0_61 = arith.constant 0 : index
    %c0_62 = arith.constant 0 : index
    %114 = vector.load %arg13[%c0_60, %c0_61, %c0_62] : memref<4x1x128xf32, #tpu.memory_space<vmem>>, vector<1x1x128xf32>
    %115 = vector.shape_cast %114 : vector<1x1x128xf32> to vector<1x128xf32>
    %c0_63 = arith.constant 0 : index
    %c0_64 = arith.constant 0 : index
    %c0_65 = arith.constant 0 : index
    %116 = vector.load %arg14[%c0_63, %c0_64, %c0_65] : memref<4x1x128xf32, #tpu.memory_space<vmem>>, vector<1x1x128xf32>
    %117 = vector.shape_cast %116 : vector<1x1x128xf32> to vector<1x128xf32>
    %cst_66 = arith.constant dense<0.000000e+00> : vector<128xf32>
    %118 = vector.multi_reduction <add>, %20, %cst_66 [0] : vector<16x128xf32> to vector<128xf32>
    %119 = vector.shape_cast %118 : vector<128xf32> to vector<1x128xf32>
    %cst_67 = arith.constant 1.600000e+01 : f32
    %120 = vector.broadcast %cst_67 : f32 to vector<1x128xf32>
    %121 = arith.divf %119, %120 : vector<1x128xf32>
    %122 = vector.broadcast %121 : vector<1x128xf32> to vector<16x128xf32>
    %123 = arith.subf %20, %122 : vector<16x128xf32>
    %124 = arith.mulf %123, %123 : vector<16x128xf32>
    %cst_68 = arith.constant dense<0.000000e+00> : vector<128xf32>
    %125 = vector.multi_reduction <add>, %124, %cst_68 [0] : vector<16x128xf32> to vector<128xf32>
    %126 = vector.shape_cast %125 : vector<128xf32> to vector<1x128xf32>
    %cst_69 = arith.constant 1.600000e+01 : f32
    %127 = vector.broadcast %cst_69 : f32 to vector<1x128xf32>
    %128 = arith.divf %126, %127 : vector<1x128xf32>
    %cst_70 = arith.constant 9.99999974E-6 : f32
    %129 = vector.broadcast %cst_70 : f32 to vector<1x128xf32>
    %130 = arith.addf %128, %129 : vector<1x128xf32>
    %131 = math.rsqrt %130 : vector<1x128xf32>
    %132 = arith.mulf %131, %115 : vector<1x128xf32>
    %133 = vector.broadcast %121 : vector<1x128xf32> to vector<16x128xf32>
    %134 = arith.subf %20, %133 : vector<16x128xf32>
    %135 = vector.broadcast %132 : vector<1x128xf32> to vector<16x128xf32>
    %136 = arith.mulf %134, %135 : vector<16x128xf32>
    %137 = vector.broadcast %117 : vector<1x128xf32> to vector<16x128xf32>
    %138 = arith.addf %136, %137 : vector<16x128xf32>
    %c0_71 = arith.constant 0 : index
    %c0_72 = arith.constant 0 : index
    %c0_73 = arith.constant 0 : index
    %139 = vector.load %arg15[%c0_71, %c0_72, %c0_73] : memref<4x128x128xf32, #tpu.memory_space<vmem>>, vector<1x128x128xf32>
    %140 = vector.shape_cast %139 : vector<1x128x128xf32> to vector<128x128xf32>
    %cst_74 = arith.constant dense<0.000000e+00> : vector<16x128xf32>
    %141 = tpu.matmul %113, %140, %cst_74 {dimension_numbers = #tpu.dot_dimension_numbers<[1], [0], [0], [1], [0, 0, 1, 1], [], []>} : vector<16x128xf32>, vector<128x128xf32>, vector<16x128xf32> -> vector<16x128xf32>
    %c0_75 = arith.constant 0 : index
    %c0_76 = arith.constant 0 : index
    %c0_77 = arith.constant 0 : index
    %142 = vector.load %arg16[%c0_75, %c0_76, %c0_77] : memref<4x128x128xf32, #tpu.memory_space<vmem>>, vector<1x128x128xf32>
    %143 = vector.shape_cast %142 : vector<1x128x128xf32> to vector<128x128xf32>
    %cst_78 = arith.constant dense<0.000000e+00> : vector<16x128xf32>
    %144 = tpu.matmul %138, %143, %cst_78 {dimension_numbers = #tpu.dot_dimension_numbers<[1], [0], [0], [1], [0, 0, 1, 1], [], []>} : vector<16x128xf32>, vector<128x128xf32>, vector<16x128xf32> -> vector<16x128xf32>
    %145 = arith.addf %141, %144 : vector<16x128xf32>
    %c0_79 = arith.constant 0 : index
    %c0_80 = arith.constant 0 : index
    %c0_81 = arith.constant 0 : index
    %146 = vector.load %arg17[%c0_79, %c0_80, %c0_81] : memref<4x1x128xf32, #tpu.memory_space<vmem>>, vector<1x1x128xf32>
    %147 = vector.shape_cast %146 : vector<1x1x128xf32> to vector<1x128xf32>
    %148 = vector.broadcast %147 : vector<1x128xf32> to vector<16x128xf32>
    %149 = arith.addf %145, %148 : vector<16x128xf32>
    %cst_82 = arith.constant 0.000000e+00 : f32
    %150 = vector.broadcast %cst_82 : f32 to vector<16x128xf32>
    %151 = arith.maximumf %149, %150 : vector<16x128xf32>
    %cst_83 = arith.constant dense<0.000000e+00> : vector<48x128xf32>
    %152 = tpu.matmul %7, %151, %cst_83 {dimension_numbers = #tpu.dot_dimension_numbers<[1], [0], [0], [1], [0, 0, 1, 1], [], []>} : vector<48x16xf32>, vector<16x128xf32>, vector<48x128xf32> -> vector<48x128xf32>
    %c1 = arith.constant 1 : index
    %c0_84 = arith.constant 0 : index
    %c0_85 = arith.constant 0 : index
    %153 = vector.load %arg4[%c1, %c0_84, %c0_85] : memref<4x1x128xf32, #tpu.memory_space<vmem>>, vector<1x1x128xf32>
    %154 = vector.shape_cast %153 : vector<1x1x128xf32> to vector<1x128xf32>
    %c1_86 = arith.constant 1 : index
    %c0_87 = arith.constant 0 : index
    %c0_88 = arith.constant 0 : index
    %155 = vector.load %arg5[%c1_86, %c0_87, %c0_88] : memref<4x1x128xf32, #tpu.memory_space<vmem>>, vector<1x1x128xf32>
    %156 = vector.shape_cast %155 : vector<1x1x128xf32> to vector<1x128xf32>
    %cst_89 = arith.constant dense<0.000000e+00> : vector<128xf32>
    %157 = vector.multi_reduction <add>, %21, %cst_89 [0] : vector<48x128xf32> to vector<128xf32>
    %158 = vector.shape_cast %157 : vector<128xf32> to vector<1x128xf32>
    %cst_90 = arith.constant 4.800000e+01 : f32
    %159 = vector.broadcast %cst_90 : f32 to vector<1x128xf32>
    %160 = arith.divf %158, %159 : vector<1x128xf32>
    %161 = vector.broadcast %160 : vector<1x128xf32> to vector<48x128xf32>
    %162 = arith.subf %21, %161 : vector<48x128xf32>
    %163 = arith.mulf %162, %162 : vector<48x128xf32>
    %cst_91 = arith.constant dense<0.000000e+00> : vector<128xf32>
    %164 = vector.multi_reduction <add>, %163, %cst_91 [0] : vector<48x128xf32> to vector<128xf32>
    %165 = vector.shape_cast %164 : vector<128xf32> to vector<1x128xf32>
    %cst_92 = arith.constant 4.800000e+01 : f32
    %166 = vector.broadcast %cst_92 : f32 to vector<1x128xf32>
    %167 = arith.divf %165, %166 : vector<1x128xf32>
    %cst_93 = arith.constant 9.99999974E-6 : f32
    %168 = vector.broadcast %cst_93 : f32 to vector<1x128xf32>
    %169 = arith.addf %167, %168 : vector<1x128xf32>
    %170 = math.rsqrt %169 : vector<1x128xf32>
    %171 = arith.mulf %170, %154 : vector<1x128xf32>
    %172 = vector.broadcast %160 : vector<1x128xf32> to vector<48x128xf32>
    %173 = arith.subf %21, %172 : vector<48x128xf32>
    %174 = vector.broadcast %171 : vector<1x128xf32> to vector<48x128xf32>
    %175 = arith.mulf %173, %174 : vector<48x128xf32>
    %176 = vector.broadcast %156 : vector<1x128xf32> to vector<48x128xf32>
    %177 = arith.addf %175, %176 : vector<48x128xf32>
    %c1_94 = arith.constant 1 : index
    %c0_95 = arith.constant 0 : index
    %c0_96 = arith.constant 0 : index
    %178 = vector.load %arg6[%c1_94, %c0_95, %c0_96] : memref<4x1x128xf32, #tpu.memory_space<vmem>>, vector<1x1x128xf32>
    %179 = vector.shape_cast %178 : vector<1x1x128xf32> to vector<1x128xf32>
    %c1_97 = arith.constant 1 : index
    %c0_98 = arith.constant 0 : index
    %c0_99 = arith.constant 0 : index
    %180 = vector.load %arg7[%c1_97, %c0_98, %c0_99] : memref<4x1x128xf32, #tpu.memory_space<vmem>>, vector<1x1x128xf32>
    %181 = vector.shape_cast %180 : vector<1x1x128xf32> to vector<1x128xf32>
    %cst_100 = arith.constant dense<0.000000e+00> : vector<128xf32>
    %182 = vector.multi_reduction <add>, %152, %cst_100 [0] : vector<48x128xf32> to vector<128xf32>
    %183 = vector.shape_cast %182 : vector<128xf32> to vector<1x128xf32>
    %cst_101 = arith.constant 4.800000e+01 : f32
    %184 = vector.broadcast %cst_101 : f32 to vector<1x128xf32>
    %185 = arith.divf %183, %184 : vector<1x128xf32>
    %186 = vector.broadcast %185 : vector<1x128xf32> to vector<48x128xf32>
    %187 = arith.subf %152, %186 : vector<48x128xf32>
    %188 = arith.mulf %187, %187 : vector<48x128xf32>
    %cst_102 = arith.constant dense<0.000000e+00> : vector<128xf32>
    %189 = vector.multi_reduction <add>, %188, %cst_102 [0] : vector<48x128xf32> to vector<128xf32>
    %190 = vector.shape_cast %189 : vector<128xf32> to vector<1x128xf32>
    %cst_103 = arith.constant 4.800000e+01 : f32
    %191 = vector.broadcast %cst_103 : f32 to vector<1x128xf32>
    %192 = arith.divf %190, %191 : vector<1x128xf32>
    %cst_104 = arith.constant 9.99999974E-6 : f32
    %193 = vector.broadcast %cst_104 : f32 to vector<1x128xf32>
    %194 = arith.addf %192, %193 : vector<1x128xf32>
    %195 = math.rsqrt %194 : vector<1x128xf32>
    %196 = arith.mulf %195, %179 : vector<1x128xf32>
    %197 = vector.broadcast %185 : vector<1x128xf32> to vector<48x128xf32>
    %198 = arith.subf %152, %197 : vector<48x128xf32>
    %199 = vector.broadcast %196 : vector<1x128xf32> to vector<48x128xf32>
    %200 = arith.mulf %198, %199 : vector<48x128xf32>
    %201 = vector.broadcast %181 : vector<1x128xf32> to vector<48x128xf32>
    %202 = arith.addf %200, %201 : vector<48x128xf32>
    %c1_105 = arith.constant 1 : index
    %c0_106 = arith.constant 0 : index
    %c0_107 = arith.constant 0 : index
    %203 = vector.load %arg8[%c1_105, %c0_106, %c0_107] : memref<4x128x128xf32, #tpu.memory_space<vmem>>, vector<1x128x128xf32>
    %204 = vector.shape_cast %203 : vector<1x128x128xf32> to vector<128x128xf32>
    %cst_108 = arith.constant dense<0.000000e+00> : vector<48x128xf32>
    %205 = tpu.matmul %177, %204, %cst_108 {dimension_numbers = #tpu.dot_dimension_numbers<[1], [0], [0], [1], [0, 0, 1, 1], [], []>} : vector<48x128xf32>, vector<128x128xf32>, vector<48x128xf32> -> vector<48x128xf32>
    %c1_109 = arith.constant 1 : index
    %c0_110 = arith.constant 0 : index
    %c0_111 = arith.constant 0 : index
    %206 = vector.load %arg9[%c1_109, %c0_110, %c0_111] : memref<4x128x128xf32, #tpu.memory_space<vmem>>, vector<1x128x128xf32>
    %207 = vector.shape_cast %206 : vector<1x128x128xf32> to vector<128x128xf32>
    %cst_112 = arith.constant dense<0.000000e+00> : vector<48x128xf32>
    %208 = tpu.matmul %202, %207, %cst_112 {dimension_numbers = #tpu.dot_dimension_numbers<[1], [0], [0], [1], [0, 0, 1, 1], [], []>} : vector<48x128xf32>, vector<128x128xf32>, vector<48x128xf32> -> vector<48x128xf32>
    %209 = arith.addf %205, %208 : vector<48x128xf32>
    %c1_113 = arith.constant 1 : index
    %c0_114 = arith.constant 0 : index
    %c0_115 = arith.constant 0 : index
    %210 = vector.load %arg10[%c1_113, %c0_114, %c0_115] : memref<4x1x128xf32, #tpu.memory_space<vmem>>, vector<1x1x128xf32>
    %211 = vector.shape_cast %210 : vector<1x1x128xf32> to vector<1x128xf32>
    %212 = vector.broadcast %211 : vector<1x128xf32> to vector<48x128xf32>
    %213 = arith.addf %209, %212 : vector<48x128xf32>
    %cst_116 = arith.constant 0.000000e+00 : f32
    %214 = vector.broadcast %cst_116 : f32 to vector<48x128xf32>
    %215 = arith.maximumf %213, %214 : vector<48x128xf32>
    %cst_117 = arith.constant dense<0.000000e+00> : vector<16x128xf32>
    %216 = tpu.matmul %13, %215, %cst_117 {dimension_numbers = #tpu.dot_dimension_numbers<[1], [0], [0], [1], [0, 0, 1, 1], [], []>} : vector<16x48xf32>, vector<48x128xf32>, vector<16x128xf32> -> vector<16x128xf32>
    %217 = vector.broadcast %19 : vector<16x1xf32> to vector<16x128xf32>
    %218 = arith.mulf %216, %217 : vector<16x128xf32>
    %c1_118 = arith.constant 1 : index
    %c0_119 = arith.constant 0 : index
    %c0_120 = arith.constant 0 : index
    %219 = vector.load %arg11[%c1_118, %c0_119, %c0_120] : memref<4x1x128xf32, #tpu.memory_space<vmem>>, vector<1x1x128xf32>
    %220 = vector.shape_cast %219 : vector<1x1x128xf32> to vector<1x128xf32>
    %c1_121 = arith.constant 1 : index
    %c0_122 = arith.constant 0 : index
    %c0_123 = arith.constant 0 : index
    %221 = vector.load %arg12[%c1_121, %c0_122, %c0_123] : memref<4x1x128xf32, #tpu.memory_space<vmem>>, vector<1x1x128xf32>
    %222 = vector.shape_cast %221 : vector<1x1x128xf32> to vector<1x128xf32>
    %cst_124 = arith.constant dense<0.000000e+00> : vector<128xf32>
    %223 = vector.multi_reduction <add>, %218, %cst_124 [0] : vector<16x128xf32> to vector<128xf32>
    %224 = vector.shape_cast %223 : vector<128xf32> to vector<1x128xf32>
    %cst_125 = arith.constant 1.600000e+01 : f32
    %225 = vector.broadcast %cst_125 : f32 to vector<1x128xf32>
    %226 = arith.divf %224, %225 : vector<1x128xf32>
    %227 = vector.broadcast %226 : vector<1x128xf32> to vector<16x128xf32>
    %228 = arith.subf %218, %227 : vector<16x128xf32>
    %229 = arith.mulf %228, %228 : vector<16x128xf32>
    %cst_126 = arith.constant dense<0.000000e+00> : vector<128xf32>
    %230 = vector.multi_reduction <add>, %229, %cst_126 [0] : vector<16x128xf32> to vector<128xf32>
    %231 = vector.shape_cast %230 : vector<128xf32> to vector<1x128xf32>
    %cst_127 = arith.constant 1.600000e+01 : f32
    %232 = vector.broadcast %cst_127 : f32 to vector<1x128xf32>
    %233 = arith.divf %231, %232 : vector<1x128xf32>
    %cst_128 = arith.constant 9.99999974E-6 : f32
    %234 = vector.broadcast %cst_128 : f32 to vector<1x128xf32>
    %235 = arith.addf %233, %234 : vector<1x128xf32>
    %236 = math.rsqrt %235 : vector<1x128xf32>
    %237 = arith.mulf %236, %220 : vector<1x128xf32>
    %238 = vector.broadcast %226 : vector<1x128xf32> to vector<16x128xf32>
    %239 = arith.subf %218, %238 : vector<16x128xf32>
    %240 = vector.broadcast %237 : vector<1x128xf32> to vector<16x128xf32>
    %241 = arith.mulf %239, %240 : vector<16x128xf32>
    %242 = vector.broadcast %222 : vector<1x128xf32> to vector<16x128xf32>
    %243 = arith.addf %241, %242 : vector<16x128xf32>
    %c1_129 = arith.constant 1 : index
    %c0_130 = arith.constant 0 : index
    %c0_131 = arith.constant 0 : index
    %244 = vector.load %arg13[%c1_129, %c0_130, %c0_131] : memref<4x1x128xf32, #tpu.memory_space<vmem>>, vector<1x1x128xf32>
    %245 = vector.shape_cast %244 : vector<1x1x128xf32> to vector<1x128xf32>
    %c1_132 = arith.constant 1 : index
    %c0_133 = arith.constant 0 : index
    %c0_134 = arith.constant 0 : index
    %246 = vector.load %arg14[%c1_132, %c0_133, %c0_134] : memref<4x1x128xf32, #tpu.memory_space<vmem>>, vector<1x1x128xf32>
    %247 = vector.shape_cast %246 : vector<1x1x128xf32> to vector<1x128xf32>
    %cst_135 = arith.constant dense<0.000000e+00> : vector<128xf32>
    %248 = vector.multi_reduction <add>, %151, %cst_135 [0] : vector<16x128xf32> to vector<128xf32>
    %249 = vector.shape_cast %248 : vector<128xf32> to vector<1x128xf32>
    %cst_136 = arith.constant 1.600000e+01 : f32
    %250 = vector.broadcast %cst_136 : f32 to vector<1x128xf32>
    %251 = arith.divf %249, %250 : vector<1x128xf32>
    %252 = vector.broadcast %251 : vector<1x128xf32> to vector<16x128xf32>
    %253 = arith.subf %151, %252 : vector<16x128xf32>
    %254 = arith.mulf %253, %253 : vector<16x128xf32>
    %cst_137 = arith.constant dense<0.000000e+00> : vector<128xf32>
    %255 = vector.multi_reduction <add>, %254, %cst_137 [0] : vector<16x128xf32> to vector<128xf32>
    %256 = vector.shape_cast %255 : vector<128xf32> to vector<1x128xf32>
    %cst_138 = arith.constant 1.600000e+01 : f32
    %257 = vector.broadcast %cst_138 : f32 to vector<1x128xf32>
    %258 = arith.divf %256, %257 : vector<1x128xf32>
    %cst_139 = arith.constant 9.99999974E-6 : f32
    %259 = vector.broadcast %cst_139 : f32 to vector<1x128xf32>
    %260 = arith.addf %258, %259 : vector<1x128xf32>
    %261 = math.rsqrt %260 : vector<1x128xf32>
    %262 = arith.mulf %261, %245 : vector<1x128xf32>
    %263 = vector.broadcast %251 : vector<1x128xf32> to vector<16x128xf32>
    %264 = arith.subf %151, %263 : vector<16x128xf32>
    %265 = vector.broadcast %262 : vector<1x128xf32> to vector<16x128xf32>
    %266 = arith.mulf %264, %265 : vector<16x128xf32>
    %267 = vector.broadcast %247 : vector<1x128xf32> to vector<16x128xf32>
    %268 = arith.addf %266, %267 : vector<16x128xf32>
    %c1_140 = arith.constant 1 : index
    %c0_141 = arith.constant 0 : index
    %c0_142 = arith.constant 0 : index
    %269 = vector.load %arg15[%c1_140, %c0_141, %c0_142] : memref<4x128x128xf32, #tpu.memory_space<vmem>>, vector<1x128x128xf32>
    %270 = vector.shape_cast %269 : vector<1x128x128xf32> to vector<128x128xf32>
    %cst_143 = arith.constant dense<0.000000e+00> : vector<16x128xf32>
    %271 = tpu.matmul %243, %270, %cst_143 {dimension_numbers = #tpu.dot_dimension_numbers<[1], [0], [0], [1], [0, 0, 1, 1], [], []>} : vector<16x128xf32>, vector<128x128xf32>, vector<16x128xf32> -> vector<16x128xf32>
    %c1_144 = arith.constant 1 : index
    %c0_145 = arith.constant 0 : index
    %c0_146 = arith.constant 0 : index
    %272 = vector.load %arg16[%c1_144, %c0_145, %c0_146] : memref<4x128x128xf32, #tpu.memory_space<vmem>>, vector<1x128x128xf32>
    %273 = vector.shape_cast %272 : vector<1x128x128xf32> to vector<128x128xf32>
    %cst_147 = arith.constant dense<0.000000e+00> : vector<16x128xf32>
    %274 = tpu.matmul %268, %273, %cst_147 {dimension_numbers = #tpu.dot_dimension_numbers<[1], [0], [0], [1], [0, 0, 1, 1], [], []>} : vector<16x128xf32>, vector<128x128xf32>, vector<16x128xf32> -> vector<16x128xf32>
    %275 = arith.addf %271, %274 : vector<16x128xf32>
    %c1_148 = arith.constant 1 : index
    %c0_149 = arith.constant 0 : index
    %c0_150 = arith.constant 0 : index
    %276 = vector.load %arg17[%c1_148, %c0_149, %c0_150] : memref<4x1x128xf32, #tpu.memory_space<vmem>>, vector<1x1x128xf32>
    %277 = vector.shape_cast %276 : vector<1x1x128xf32> to vector<1x128xf32>
    %278 = vector.broadcast %277 : vector<1x128xf32> to vector<16x128xf32>
    %279 = arith.addf %275, %278 : vector<16x128xf32>
    %cst_151 = arith.constant 0.000000e+00 : f32
    %280 = vector.broadcast %cst_151 : f32 to vector<16x128xf32>
    %281 = arith.maximumf %279, %280 : vector<16x128xf32>
    %cst_152 = arith.constant dense<0.000000e+00> : vector<48x128xf32>
    %282 = tpu.matmul %7, %281, %cst_152 {dimension_numbers = #tpu.dot_dimension_numbers<[1], [0], [0], [1], [0, 0, 1, 1], [], []>} : vector<48x16xf32>, vector<16x128xf32>, vector<48x128xf32> -> vector<48x128xf32>
    %c2 = arith.constant 2 : index
    %c0_153 = arith.constant 0 : index
    %c0_154 = arith.constant 0 : index
    %283 = vector.load %arg4[%c2, %c0_153, %c0_154] : memref<4x1x128xf32, #tpu.memory_space<vmem>>, vector<1x1x128xf32>
    %284 = vector.shape_cast %283 : vector<1x1x128xf32> to vector<1x128xf32>
    %c2_155 = arith.constant 2 : index
    %c0_156 = arith.constant 0 : index
    %c0_157 = arith.constant 0 : index
    %285 = vector.load %arg5[%c2_155, %c0_156, %c0_157] : memref<4x1x128xf32, #tpu.memory_space<vmem>>, vector<1x1x128xf32>
    %286 = vector.shape_cast %285 : vector<1x1x128xf32> to vector<1x128xf32>
    %cst_158 = arith.constant dense<0.000000e+00> : vector<128xf32>
    %287 = vector.multi_reduction <add>, %21, %cst_158 [0] : vector<48x128xf32> to vector<128xf32>
    %288 = vector.shape_cast %287 : vector<128xf32> to vector<1x128xf32>
    %cst_159 = arith.constant 4.800000e+01 : f32
    %289 = vector.broadcast %cst_159 : f32 to vector<1x128xf32>
    %290 = arith.divf %288, %289 : vector<1x128xf32>
    %291 = vector.broadcast %290 : vector<1x128xf32> to vector<48x128xf32>
    %292 = arith.subf %21, %291 : vector<48x128xf32>
    %293 = arith.mulf %292, %292 : vector<48x128xf32>
    %cst_160 = arith.constant dense<0.000000e+00> : vector<128xf32>
    %294 = vector.multi_reduction <add>, %293, %cst_160 [0] : vector<48x128xf32> to vector<128xf32>
    %295 = vector.shape_cast %294 : vector<128xf32> to vector<1x128xf32>
    %cst_161 = arith.constant 4.800000e+01 : f32
    %296 = vector.broadcast %cst_161 : f32 to vector<1x128xf32>
    %297 = arith.divf %295, %296 : vector<1x128xf32>
    %cst_162 = arith.constant 9.99999974E-6 : f32
    %298 = vector.broadcast %cst_162 : f32 to vector<1x128xf32>
    %299 = arith.addf %297, %298 : vector<1x128xf32>
    %300 = math.rsqrt %299 : vector<1x128xf32>
    %301 = arith.mulf %300, %284 : vector<1x128xf32>
    %302 = vector.broadcast %290 : vector<1x128xf32> to vector<48x128xf32>
    %303 = arith.subf %21, %302 : vector<48x128xf32>
    %304 = vector.broadcast %301 : vector<1x128xf32> to vector<48x128xf32>
    %305 = arith.mulf %303, %304 : vector<48x128xf32>
    %306 = vector.broadcast %286 : vector<1x128xf32> to vector<48x128xf32>
    %307 = arith.addf %305, %306 : vector<48x128xf32>
    %c2_163 = arith.constant 2 : index
    %c0_164 = arith.constant 0 : index
    %c0_165 = arith.constant 0 : index
    %308 = vector.load %arg6[%c2_163, %c0_164, %c0_165] : memref<4x1x128xf32, #tpu.memory_space<vmem>>, vector<1x1x128xf32>
    %309 = vector.shape_cast %308 : vector<1x1x128xf32> to vector<1x128xf32>
    %c2_166 = arith.constant 2 : index
    %c0_167 = arith.constant 0 : index
    %c0_168 = arith.constant 0 : index
    %310 = vector.load %arg7[%c2_166, %c0_167, %c0_168] : memref<4x1x128xf32, #tpu.memory_space<vmem>>, vector<1x1x128xf32>
    %311 = vector.shape_cast %310 : vector<1x1x128xf32> to vector<1x128xf32>
    %cst_169 = arith.constant dense<0.000000e+00> : vector<128xf32>
    %312 = vector.multi_reduction <add>, %282, %cst_169 [0] : vector<48x128xf32> to vector<128xf32>
    %313 = vector.shape_cast %312 : vector<128xf32> to vector<1x128xf32>
    %cst_170 = arith.constant 4.800000e+01 : f32
    %314 = vector.broadcast %cst_170 : f32 to vector<1x128xf32>
    %315 = arith.divf %313, %314 : vector<1x128xf32>
    %316 = vector.broadcast %315 : vector<1x128xf32> to vector<48x128xf32>
    %317 = arith.subf %282, %316 : vector<48x128xf32>
    %318 = arith.mulf %317, %317 : vector<48x128xf32>
    %cst_171 = arith.constant dense<0.000000e+00> : vector<128xf32>
    %319 = vector.multi_reduction <add>, %318, %cst_171 [0] : vector<48x128xf32> to vector<128xf32>
    %320 = vector.shape_cast %319 : vector<128xf32> to vector<1x128xf32>
    %cst_172 = arith.constant 4.800000e+01 : f32
    %321 = vector.broadcast %cst_172 : f32 to vector<1x128xf32>
    %322 = arith.divf %320, %321 : vector<1x128xf32>
    %cst_173 = arith.constant 9.99999974E-6 : f32
    %323 = vector.broadcast %cst_173 : f32 to vector<1x128xf32>
    %324 = arith.addf %322, %323 : vector<1x128xf32>
    %325 = math.rsqrt %324 : vector<1x128xf32>
    %326 = arith.mulf %325, %309 : vector<1x128xf32>
    %327 = vector.broadcast %315 : vector<1x128xf32> to vector<48x128xf32>
    %328 = arith.subf %282, %327 : vector<48x128xf32>
    %329 = vector.broadcast %326 : vector<1x128xf32> to vector<48x128xf32>
    %330 = arith.mulf %328, %329 : vector<48x128xf32>
    %331 = vector.broadcast %311 : vector<1x128xf32> to vector<48x128xf32>
    %332 = arith.addf %330, %331 : vector<48x128xf32>
    %c2_174 = arith.constant 2 : index
    %c0_175 = arith.constant 0 : index
    %c0_176 = arith.constant 0 : index
    %333 = vector.load %arg8[%c2_174, %c0_175, %c0_176] : memref<4x128x128xf32, #tpu.memory_space<vmem>>, vector<1x128x128xf32>
    %334 = vector.shape_cast %333 : vector<1x128x128xf32> to vector<128x128xf32>
    %cst_177 = arith.constant dense<0.000000e+00> : vector<48x128xf32>
    %335 = tpu.matmul %307, %334, %cst_177 {dimension_numbers = #tpu.dot_dimension_numbers<[1], [0], [0], [1], [0, 0, 1, 1], [], []>} : vector<48x128xf32>, vector<128x128xf32>, vector<48x128xf32> -> vector<48x128xf32>
    %c2_178 = arith.constant 2 : index
    %c0_179 = arith.constant 0 : index
    %c0_180 = arith.constant 0 : index
    %336 = vector.load %arg9[%c2_178, %c0_179, %c0_180] : memref<4x128x128xf32, #tpu.memory_space<vmem>>, vector<1x128x128xf32>
    %337 = vector.shape_cast %336 : vector<1x128x128xf32> to vector<128x128xf32>
    %cst_181 = arith.constant dense<0.000000e+00> : vector<48x128xf32>
    %338 = tpu.matmul %332, %337, %cst_181 {dimension_numbers = #tpu.dot_dimension_numbers<[1], [0], [0], [1], [0, 0, 1, 1], [], []>} : vector<48x128xf32>, vector<128x128xf32>, vector<48x128xf32> -> vector<48x128xf32>
    %339 = arith.addf %335, %338 : vector<48x128xf32>
    %c2_182 = arith.constant 2 : index
    %c0_183 = arith.constant 0 : index
    %c0_184 = arith.constant 0 : index
    %340 = vector.load %arg10[%c2_182, %c0_183, %c0_184] : memref<4x1x128xf32, #tpu.memory_space<vmem>>, vector<1x1x128xf32>
    %341 = vector.shape_cast %340 : vector<1x1x128xf32> to vector<1x128xf32>
    %342 = vector.broadcast %341 : vector<1x128xf32> to vector<48x128xf32>
    %343 = arith.addf %339, %342 : vector<48x128xf32>
    %cst_185 = arith.constant 0.000000e+00 : f32
    %344 = vector.broadcast %cst_185 : f32 to vector<48x128xf32>
    %345 = arith.maximumf %343, %344 : vector<48x128xf32>
    %cst_186 = arith.constant dense<0.000000e+00> : vector<16x128xf32>
    %346 = tpu.matmul %13, %345, %cst_186 {dimension_numbers = #tpu.dot_dimension_numbers<[1], [0], [0], [1], [0, 0, 1, 1], [], []>} : vector<16x48xf32>, vector<48x128xf32>, vector<16x128xf32> -> vector<16x128xf32>
    %347 = vector.broadcast %19 : vector<16x1xf32> to vector<16x128xf32>
    %348 = arith.mulf %346, %347 : vector<16x128xf32>
    %c2_187 = arith.constant 2 : index
    %c0_188 = arith.constant 0 : index
    %c0_189 = arith.constant 0 : index
    %349 = vector.load %arg11[%c2_187, %c0_188, %c0_189] : memref<4x1x128xf32, #tpu.memory_space<vmem>>, vector<1x1x128xf32>
    %350 = vector.shape_cast %349 : vector<1x1x128xf32> to vector<1x128xf32>
    %c2_190 = arith.constant 2 : index
    %c0_191 = arith.constant 0 : index
    %c0_192 = arith.constant 0 : index
    %351 = vector.load %arg12[%c2_190, %c0_191, %c0_192] : memref<4x1x128xf32, #tpu.memory_space<vmem>>, vector<1x1x128xf32>
    %352 = vector.shape_cast %351 : vector<1x1x128xf32> to vector<1x128xf32>
    %cst_193 = arith.constant dense<0.000000e+00> : vector<128xf32>
    %353 = vector.multi_reduction <add>, %348, %cst_193 [0] : vector<16x128xf32> to vector<128xf32>
    %354 = vector.shape_cast %353 : vector<128xf32> to vector<1x128xf32>
    %cst_194 = arith.constant 1.600000e+01 : f32
    %355 = vector.broadcast %cst_194 : f32 to vector<1x128xf32>
    %356 = arith.divf %354, %355 : vector<1x128xf32>
    %357 = vector.broadcast %356 : vector<1x128xf32> to vector<16x128xf32>
    %358 = arith.subf %348, %357 : vector<16x128xf32>
    %359 = arith.mulf %358, %358 : vector<16x128xf32>
    %cst_195 = arith.constant dense<0.000000e+00> : vector<128xf32>
    %360 = vector.multi_reduction <add>, %359, %cst_195 [0] : vector<16x128xf32> to vector<128xf32>
    %361 = vector.shape_cast %360 : vector<128xf32> to vector<1x128xf32>
    %cst_196 = arith.constant 1.600000e+01 : f32
    %362 = vector.broadcast %cst_196 : f32 to vector<1x128xf32>
    %363 = arith.divf %361, %362 : vector<1x128xf32>
    %cst_197 = arith.constant 9.99999974E-6 : f32
    %364 = vector.broadcast %cst_197 : f32 to vector<1x128xf32>
    %365 = arith.addf %363, %364 : vector<1x128xf32>
    %366 = math.rsqrt %365 : vector<1x128xf32>
    %367 = arith.mulf %366, %350 : vector<1x128xf32>
    %368 = vector.broadcast %356 : vector<1x128xf32> to vector<16x128xf32>
    %369 = arith.subf %348, %368 : vector<16x128xf32>
    %370 = vector.broadcast %367 : vector<1x128xf32> to vector<16x128xf32>
    %371 = arith.mulf %369, %370 : vector<16x128xf32>
    %372 = vector.broadcast %352 : vector<1x128xf32> to vector<16x128xf32>
    %373 = arith.addf %371, %372 : vector<16x128xf32>
    %c2_198 = arith.constant 2 : index
    %c0_199 = arith.constant 0 : index
    %c0_200 = arith.constant 0 : index
    %374 = vector.load %arg13[%c2_198, %c0_199, %c0_200] : memref<4x1x128xf32, #tpu.memory_space<vmem>>, vector<1x1x128xf32>
    %375 = vector.shape_cast %374 : vector<1x1x128xf32> to vector<1x128xf32>
    %c2_201 = arith.constant 2 : index
    %c0_202 = arith.constant 0 : index
    %c0_203 = arith.constant 0 : index
    %376 = vector.load %arg14[%c2_201, %c0_202, %c0_203] : memref<4x1x128xf32, #tpu.memory_space<vmem>>, vector<1x1x128xf32>
    %377 = vector.shape_cast %376 : vector<1x1x128xf32> to vector<1x128xf32>
    %cst_204 = arith.constant dense<0.000000e+00> : vector<128xf32>
    %378 = vector.multi_reduction <add>, %281, %cst_204 [0] : vector<16x128xf32> to vector<128xf32>
    %379 = vector.shape_cast %378 : vector<128xf32> to vector<1x128xf32>
    %cst_205 = arith.constant 1.600000e+01 : f32
    %380 = vector.broadcast %cst_205 : f32 to vector<1x128xf32>
    %381 = arith.divf %379, %380 : vector<1x128xf32>
    %382 = vector.broadcast %381 : vector<1x128xf32> to vector<16x128xf32>
    %383 = arith.subf %281, %382 : vector<16x128xf32>
    %384 = arith.mulf %383, %383 : vector<16x128xf32>
    %cst_206 = arith.constant dense<0.000000e+00> : vector<128xf32>
    %385 = vector.multi_reduction <add>, %384, %cst_206 [0] : vector<16x128xf32> to vector<128xf32>
    %386 = vector.shape_cast %385 : vector<128xf32> to vector<1x128xf32>
    %cst_207 = arith.constant 1.600000e+01 : f32
    %387 = vector.broadcast %cst_207 : f32 to vector<1x128xf32>
    %388 = arith.divf %386, %387 : vector<1x128xf32>
    %cst_208 = arith.constant 9.99999974E-6 : f32
    %389 = vector.broadcast %cst_208 : f32 to vector<1x128xf32>
    %390 = arith.addf %388, %389 : vector<1x128xf32>
    %391 = math.rsqrt %390 : vector<1x128xf32>
    %392 = arith.mulf %391, %375 : vector<1x128xf32>
    %393 = vector.broadcast %381 : vector<1x128xf32> to vector<16x128xf32>
    %394 = arith.subf %281, %393 : vector<16x128xf32>
    %395 = vector.broadcast %392 : vector<1x128xf32> to vector<16x128xf32>
    %396 = arith.mulf %394, %395 : vector<16x128xf32>
    %397 = vector.broadcast %377 : vector<1x128xf32> to vector<16x128xf32>
    %398 = arith.addf %396, %397 : vector<16x128xf32>
    %c2_209 = arith.constant 2 : index
    %c0_210 = arith.constant 0 : index
    %c0_211 = arith.constant 0 : index
    %399 = vector.load %arg15[%c2_209, %c0_210, %c0_211] : memref<4x128x128xf32, #tpu.memory_space<vmem>>, vector<1x128x128xf32>
    %400 = vector.shape_cast %399 : vector<1x128x128xf32> to vector<128x128xf32>
    %cst_212 = arith.constant dense<0.000000e+00> : vector<16x128xf32>
    %401 = tpu.matmul %373, %400, %cst_212 {dimension_numbers = #tpu.dot_dimension_numbers<[1], [0], [0], [1], [0, 0, 1, 1], [], []>} : vector<16x128xf32>, vector<128x128xf32>, vector<16x128xf32> -> vector<16x128xf32>
    %c2_213 = arith.constant 2 : index
    %c0_214 = arith.constant 0 : index
    %c0_215 = arith.constant 0 : index
    %402 = vector.load %arg16[%c2_213, %c0_214, %c0_215] : memref<4x128x128xf32, #tpu.memory_space<vmem>>, vector<1x128x128xf32>
    %403 = vector.shape_cast %402 : vector<1x128x128xf32> to vector<128x128xf32>
    %cst_216 = arith.constant dense<0.000000e+00> : vector<16x128xf32>
    %404 = tpu.matmul %398, %403, %cst_216 {dimension_numbers = #tpu.dot_dimension_numbers<[1], [0], [0], [1], [0, 0, 1, 1], [], []>} : vector<16x128xf32>, vector<128x128xf32>, vector<16x128xf32> -> vector<16x128xf32>
    %405 = arith.addf %401, %404 : vector<16x128xf32>
    %c2_217 = arith.constant 2 : index
    %c0_218 = arith.constant 0 : index
    %c0_219 = arith.constant 0 : index
    %406 = vector.load %arg17[%c2_217, %c0_218, %c0_219] : memref<4x1x128xf32, #tpu.memory_space<vmem>>, vector<1x1x128xf32>
    %407 = vector.shape_cast %406 : vector<1x1x128xf32> to vector<1x128xf32>
    %408 = vector.broadcast %407 : vector<1x128xf32> to vector<16x128xf32>
    %409 = arith.addf %405, %408 : vector<16x128xf32>
    %cst_220 = arith.constant 0.000000e+00 : f32
    %410 = vector.broadcast %cst_220 : f32 to vector<16x128xf32>
    %411 = arith.maximumf %409, %410 : vector<16x128xf32>
    %cst_221 = arith.constant dense<0.000000e+00> : vector<48x128xf32>
    %412 = tpu.matmul %7, %411, %cst_221 {dimension_numbers = #tpu.dot_dimension_numbers<[1], [0], [0], [1], [0, 0, 1, 1], [], []>} : vector<48x16xf32>, vector<16x128xf32>, vector<48x128xf32> -> vector<48x128xf32>
    %c3 = arith.constant 3 : index
    %c0_222 = arith.constant 0 : index
    %c0_223 = arith.constant 0 : index
    %413 = vector.load %arg4[%c3, %c0_222, %c0_223] : memref<4x1x128xf32, #tpu.memory_space<vmem>>, vector<1x1x128xf32>
    %414 = vector.shape_cast %413 : vector<1x1x128xf32> to vector<1x128xf32>
    %c3_224 = arith.constant 3 : index
    %c0_225 = arith.constant 0 : index
    %c0_226 = arith.constant 0 : index
    %415 = vector.load %arg5[%c3_224, %c0_225, %c0_226] : memref<4x1x128xf32, #tpu.memory_space<vmem>>, vector<1x1x128xf32>
    %416 = vector.shape_cast %415 : vector<1x1x128xf32> to vector<1x128xf32>
    %cst_227 = arith.constant dense<0.000000e+00> : vector<128xf32>
    %417 = vector.multi_reduction <add>, %21, %cst_227 [0] : vector<48x128xf32> to vector<128xf32>
    %418 = vector.shape_cast %417 : vector<128xf32> to vector<1x128xf32>
    %cst_228 = arith.constant 4.800000e+01 : f32
    %419 = vector.broadcast %cst_228 : f32 to vector<1x128xf32>
    %420 = arith.divf %418, %419 : vector<1x128xf32>
    %421 = vector.broadcast %420 : vector<1x128xf32> to vector<48x128xf32>
    %422 = arith.subf %21, %421 : vector<48x128xf32>
    %423 = arith.mulf %422, %422 : vector<48x128xf32>
    %cst_229 = arith.constant dense<0.000000e+00> : vector<128xf32>
    %424 = vector.multi_reduction <add>, %423, %cst_229 [0] : vector<48x128xf32> to vector<128xf32>
    %425 = vector.shape_cast %424 : vector<128xf32> to vector<1x128xf32>
    %cst_230 = arith.constant 4.800000e+01 : f32
    %426 = vector.broadcast %cst_230 : f32 to vector<1x128xf32>
    %427 = arith.divf %425, %426 : vector<1x128xf32>
    %cst_231 = arith.constant 9.99999974E-6 : f32
    %428 = vector.broadcast %cst_231 : f32 to vector<1x128xf32>
    %429 = arith.addf %427, %428 : vector<1x128xf32>
    %430 = math.rsqrt %429 : vector<1x128xf32>
    %431 = arith.mulf %430, %414 : vector<1x128xf32>
    %432 = vector.broadcast %420 : vector<1x128xf32> to vector<48x128xf32>
    %433 = arith.subf %21, %432 : vector<48x128xf32>
    %434 = vector.broadcast %431 : vector<1x128xf32> to vector<48x128xf32>
    %435 = arith.mulf %433, %434 : vector<48x128xf32>
    %436 = vector.broadcast %416 : vector<1x128xf32> to vector<48x128xf32>
    %437 = arith.addf %435, %436 : vector<48x128xf32>
    %c3_232 = arith.constant 3 : index
    %c0_233 = arith.constant 0 : index
    %c0_234 = arith.constant 0 : index
    %438 = vector.load %arg6[%c3_232, %c0_233, %c0_234] : memref<4x1x128xf32, #tpu.memory_space<vmem>>, vector<1x1x128xf32>
    %439 = vector.shape_cast %438 : vector<1x1x128xf32> to vector<1x128xf32>
    %c3_235 = arith.constant 3 : index
    %c0_236 = arith.constant 0 : index
    %c0_237 = arith.constant 0 : index
    %440 = vector.load %arg7[%c3_235, %c0_236, %c0_237] : memref<4x1x128xf32, #tpu.memory_space<vmem>>, vector<1x1x128xf32>
    %441 = vector.shape_cast %440 : vector<1x1x128xf32> to vector<1x128xf32>
    %cst_238 = arith.constant dense<0.000000e+00> : vector<128xf32>
    %442 = vector.multi_reduction <add>, %412, %cst_238 [0] : vector<48x128xf32> to vector<128xf32>
    %443 = vector.shape_cast %442 : vector<128xf32> to vector<1x128xf32>
    %cst_239 = arith.constant 4.800000e+01 : f32
    %444 = vector.broadcast %cst_239 : f32 to vector<1x128xf32>
    %445 = arith.divf %443, %444 : vector<1x128xf32>
    %446 = vector.broadcast %445 : vector<1x128xf32> to vector<48x128xf32>
    %447 = arith.subf %412, %446 : vector<48x128xf32>
    %448 = arith.mulf %447, %447 : vector<48x128xf32>
    %cst_240 = arith.constant dense<0.000000e+00> : vector<128xf32>
    %449 = vector.multi_reduction <add>, %448, %cst_240 [0] : vector<48x128xf32> to vector<128xf32>
    %450 = vector.shape_cast %449 : vector<128xf32> to vector<1x128xf32>
    %cst_241 = arith.constant 4.800000e+01 : f32
    %451 = vector.broadcast %cst_241 : f32 to vector<1x128xf32>
    %452 = arith.divf %450, %451 : vector<1x128xf32>
    %cst_242 = arith.constant 9.99999974E-6 : f32
    %453 = vector.broadcast %cst_242 : f32 to vector<1x128xf32>
    %454 = arith.addf %452, %453 : vector<1x128xf32>
    %455 = math.rsqrt %454 : vector<1x128xf32>
    %456 = arith.mulf %455, %439 : vector<1x128xf32>
    %457 = vector.broadcast %445 : vector<1x128xf32> to vector<48x128xf32>
    %458 = arith.subf %412, %457 : vector<48x128xf32>
    %459 = vector.broadcast %456 : vector<1x128xf32> to vector<48x128xf32>
    %460 = arith.mulf %458, %459 : vector<48x128xf32>
    %461 = vector.broadcast %441 : vector<1x128xf32> to vector<48x128xf32>
    %462 = arith.addf %460, %461 : vector<48x128xf32>
    %c3_243 = arith.constant 3 : index
    %c0_244 = arith.constant 0 : index
    %c0_245 = arith.constant 0 : index
    %463 = vector.load %arg8[%c3_243, %c0_244, %c0_245] : memref<4x128x128xf32, #tpu.memory_space<vmem>>, vector<1x128x128xf32>
    %464 = vector.shape_cast %463 : vector<1x128x128xf32> to vector<128x128xf32>
    %cst_246 = arith.constant dense<0.000000e+00> : vector<48x128xf32>
    %465 = tpu.matmul %437, %464, %cst_246 {dimension_numbers = #tpu.dot_dimension_numbers<[1], [0], [0], [1], [0, 0, 1, 1], [], []>} : vector<48x128xf32>, vector<128x128xf32>, vector<48x128xf32> -> vector<48x128xf32>
    %c3_247 = arith.constant 3 : index
    %c0_248 = arith.constant 0 : index
    %c0_249 = arith.constant 0 : index
    %466 = vector.load %arg9[%c3_247, %c0_248, %c0_249] : memref<4x128x128xf32, #tpu.memory_space<vmem>>, vector<1x128x128xf32>
    %467 = vector.shape_cast %466 : vector<1x128x128xf32> to vector<128x128xf32>
    %cst_250 = arith.constant dense<0.000000e+00> : vector<48x128xf32>
    %468 = tpu.matmul %462, %467, %cst_250 {dimension_numbers = #tpu.dot_dimension_numbers<[1], [0], [0], [1], [0, 0, 1, 1], [], []>} : vector<48x128xf32>, vector<128x128xf32>, vector<48x128xf32> -> vector<48x128xf32>
    %469 = arith.addf %465, %468 : vector<48x128xf32>
    %c3_251 = arith.constant 3 : index
    %c0_252 = arith.constant 0 : index
    %c0_253 = arith.constant 0 : index
    %470 = vector.load %arg10[%c3_251, %c0_252, %c0_253] : memref<4x1x128xf32, #tpu.memory_space<vmem>>, vector<1x1x128xf32>
    %471 = vector.shape_cast %470 : vector<1x1x128xf32> to vector<1x128xf32>
    %472 = vector.broadcast %471 : vector<1x128xf32> to vector<48x128xf32>
    %473 = arith.addf %469, %472 : vector<48x128xf32>
    %cst_254 = arith.constant 0.000000e+00 : f32
    %474 = vector.broadcast %cst_254 : f32 to vector<48x128xf32>
    %475 = arith.maximumf %473, %474 : vector<48x128xf32>
    %cst_255 = arith.constant dense<0.000000e+00> : vector<16x128xf32>
    %476 = tpu.matmul %13, %475, %cst_255 {dimension_numbers = #tpu.dot_dimension_numbers<[1], [0], [0], [1], [0, 0, 1, 1], [], []>} : vector<16x48xf32>, vector<48x128xf32>, vector<16x128xf32> -> vector<16x128xf32>
    %477 = vector.broadcast %19 : vector<16x1xf32> to vector<16x128xf32>
    %478 = arith.mulf %476, %477 : vector<16x128xf32>
    %c3_256 = arith.constant 3 : index
    %c0_257 = arith.constant 0 : index
    %c0_258 = arith.constant 0 : index
    %479 = vector.load %arg11[%c3_256, %c0_257, %c0_258] : memref<4x1x128xf32, #tpu.memory_space<vmem>>, vector<1x1x128xf32>
    %480 = vector.shape_cast %479 : vector<1x1x128xf32> to vector<1x128xf32>
    %c3_259 = arith.constant 3 : index
    %c0_260 = arith.constant 0 : index
    %c0_261 = arith.constant 0 : index
    %481 = vector.load %arg12[%c3_259, %c0_260, %c0_261] : memref<4x1x128xf32, #tpu.memory_space<vmem>>, vector<1x1x128xf32>
    %482 = vector.shape_cast %481 : vector<1x1x128xf32> to vector<1x128xf32>
    %cst_262 = arith.constant dense<0.000000e+00> : vector<128xf32>
    %483 = vector.multi_reduction <add>, %478, %cst_262 [0] : vector<16x128xf32> to vector<128xf32>
    %484 = vector.shape_cast %483 : vector<128xf32> to vector<1x128xf32>
    %cst_263 = arith.constant 1.600000e+01 : f32
    %485 = vector.broadcast %cst_263 : f32 to vector<1x128xf32>
    %486 = arith.divf %484, %485 : vector<1x128xf32>
    %487 = vector.broadcast %486 : vector<1x128xf32> to vector<16x128xf32>
    %488 = arith.subf %478, %487 : vector<16x128xf32>
    %489 = arith.mulf %488, %488 : vector<16x128xf32>
    %cst_264 = arith.constant dense<0.000000e+00> : vector<128xf32>
    %490 = vector.multi_reduction <add>, %489, %cst_264 [0] : vector<16x128xf32> to vector<128xf32>
    %491 = vector.shape_cast %490 : vector<128xf32> to vector<1x128xf32>
    %cst_265 = arith.constant 1.600000e+01 : f32
    %492 = vector.broadcast %cst_265 : f32 to vector<1x128xf32>
    %493 = arith.divf %491, %492 : vector<1x128xf32>
    %cst_266 = arith.constant 9.99999974E-6 : f32
    %494 = vector.broadcast %cst_266 : f32 to vector<1x128xf32>
    %495 = arith.addf %493, %494 : vector<1x128xf32>
    %496 = math.rsqrt %495 : vector<1x128xf32>
    %497 = arith.mulf %496, %480 : vector<1x128xf32>
    %498 = vector.broadcast %486 : vector<1x128xf32> to vector<16x128xf32>
    %499 = arith.subf %478, %498 : vector<16x128xf32>
    %500 = vector.broadcast %497 : vector<1x128xf32> to vector<16x128xf32>
    %501 = arith.mulf %499, %500 : vector<16x128xf32>
    %502 = vector.broadcast %482 : vector<1x128xf32> to vector<16x128xf32>
    %503 = arith.addf %501, %502 : vector<16x128xf32>
    %c3_267 = arith.constant 3 : index
    %c0_268 = arith.constant 0 : index
    %c0_269 = arith.constant 0 : index
    %504 = vector.load %arg13[%c3_267, %c0_268, %c0_269] : memref<4x1x128xf32, #tpu.memory_space<vmem>>, vector<1x1x128xf32>
    %505 = vector.shape_cast %504 : vector<1x1x128xf32> to vector<1x128xf32>
    %c3_270 = arith.constant 3 : index
    %c0_271 = arith.constant 0 : index
    %c0_272 = arith.constant 0 : index
    %506 = vector.load %arg14[%c3_270, %c0_271, %c0_272] : memref<4x1x128xf32, #tpu.memory_space<vmem>>, vector<1x1x128xf32>
    %507 = vector.shape_cast %506 : vector<1x1x128xf32> to vector<1x128xf32>
    %cst_273 = arith.constant dense<0.000000e+00> : vector<128xf32>
    %508 = vector.multi_reduction <add>, %411, %cst_273 [0] : vector<16x128xf32> to vector<128xf32>
    %509 = vector.shape_cast %508 : vector<128xf32> to vector<1x128xf32>
    %cst_274 = arith.constant 1.600000e+01 : f32
    %510 = vector.broadcast %cst_274 : f32 to vector<1x128xf32>
    %511 = arith.divf %509, %510 : vector<1x128xf32>
    %512 = vector.broadcast %511 : vector<1x128xf32> to vector<16x128xf32>
    %513 = arith.subf %411, %512 : vector<16x128xf32>
    %514 = arith.mulf %513, %513 : vector<16x128xf32>
    %cst_275 = arith.constant dense<0.000000e+00> : vector<128xf32>
    %515 = vector.multi_reduction <add>, %514, %cst_275 [0] : vector<16x128xf32> to vector<128xf32>
    %516 = vector.shape_cast %515 : vector<128xf32> to vector<1x128xf32>
    %cst_276 = arith.constant 1.600000e+01 : f32
    %517 = vector.broadcast %cst_276 : f32 to vector<1x128xf32>
    %518 = arith.divf %516, %517 : vector<1x128xf32>
    %cst_277 = arith.constant 9.99999974E-6 : f32
    %519 = vector.broadcast %cst_277 : f32 to vector<1x128xf32>
    %520 = arith.addf %518, %519 : vector<1x128xf32>
    %521 = math.rsqrt %520 : vector<1x128xf32>
    %522 = arith.mulf %521, %505 : vector<1x128xf32>
    %523 = vector.broadcast %511 : vector<1x128xf32> to vector<16x128xf32>
    %524 = arith.subf %411, %523 : vector<16x128xf32>
    %525 = vector.broadcast %522 : vector<1x128xf32> to vector<16x128xf32>
    %526 = arith.mulf %524, %525 : vector<16x128xf32>
    %527 = vector.broadcast %507 : vector<1x128xf32> to vector<16x128xf32>
    %528 = arith.addf %526, %527 : vector<16x128xf32>
    %c3_278 = arith.constant 3 : index
    %c0_279 = arith.constant 0 : index
    %c0_280 = arith.constant 0 : index
    %529 = vector.load %arg15[%c3_278, %c0_279, %c0_280] : memref<4x128x128xf32, #tpu.memory_space<vmem>>, vector<1x128x128xf32>
    %530 = vector.shape_cast %529 : vector<1x128x128xf32> to vector<128x128xf32>
    %cst_281 = arith.constant dense<0.000000e+00> : vector<16x128xf32>
    %531 = tpu.matmul %503, %530, %cst_281 {dimension_numbers = #tpu.dot_dimension_numbers<[1], [0], [0], [1], [0, 0, 1, 1], [], []>} : vector<16x128xf32>, vector<128x128xf32>, vector<16x128xf32> -> vector<16x128xf32>
    %c3_282 = arith.constant 3 : index
    %c0_283 = arith.constant 0 : index
    %c0_284 = arith.constant 0 : index
    %532 = vector.load %arg16[%c3_282, %c0_283, %c0_284] : memref<4x128x128xf32, #tpu.memory_space<vmem>>, vector<1x128x128xf32>
    %533 = vector.shape_cast %532 : vector<1x128x128xf32> to vector<128x128xf32>
    %cst_285 = arith.constant dense<0.000000e+00> : vector<16x128xf32>
    %534 = tpu.matmul %528, %533, %cst_285 {dimension_numbers = #tpu.dot_dimension_numbers<[1], [0], [0], [1], [0, 0, 1, 1], [], []>} : vector<16x128xf32>, vector<128x128xf32>, vector<16x128xf32> -> vector<16x128xf32>
    %535 = arith.addf %531, %534 : vector<16x128xf32>
    %c3_286 = arith.constant 3 : index
    %c0_287 = arith.constant 0 : index
    %c0_288 = arith.constant 0 : index
    %536 = vector.load %arg17[%c3_286, %c0_287, %c0_288] : memref<4x1x128xf32, #tpu.memory_space<vmem>>, vector<1x1x128xf32>
    %537 = vector.shape_cast %536 : vector<1x1x128xf32> to vector<1x128xf32>
    %538 = vector.broadcast %537 : vector<1x128xf32> to vector<16x128xf32>
    %539 = arith.addf %535, %538 : vector<16x128xf32>
    %cst_289 = arith.constant 0.000000e+00 : f32
    %540 = vector.broadcast %cst_289 : f32 to vector<16x128xf32>
    %541 = arith.maximumf %539, %540 : vector<16x128xf32>
    %c0_290 = arith.constant 0 : index
    %c0_291 = arith.constant 0 : index
    %542 = vector.load %arg18[%c0_290, %c0_291] : memref<16x128xf32, #tpu.memory_space<vmem>>, vector<16x128xf32>
    tpu.vector_store %arg18[%c0_290, %c0_291], %541 {strides = array<i32>} : memref<16x128xf32, #tpu.memory_space<vmem>>, vector<16x128xf32>,
    return
  }
}

</mosaic_0001>

<llo_original>
// kernel: tpu_custom_call.1
$region0: #{tpu_custom_call.1}
  #allocation0 [shape = 'u32[]', space=smem, size = 0x4, offset = 0x4, fixed_abs, tag = 'smem constant byte address 0x4 - core index']
  #allocation1 [shape = 'u32[144,128]{1,0:T(1,128)}', space=vmem, size = 0x12000, scoped, tag = 'internal scratch']
  %s0 = inlined_call_operand.vmem [shape: s32[48,1], index: 0, kind: input, shape index: {}]
  %s1 = inlined_call_operand.hbm [shape: s32[1,48], index: 1, kind: input, shape index: {}]
  %s2 = inlined_call_operand.vmem [shape: f32[48,128], index: 2, kind: input, shape index: {}]
  %s3 = inlined_call_operand.hbm [shape: f32[16,128], index: 3, kind: input, shape index: {}]
  %s4 = inlined_call_operand.vmem [shape: f32[4,1,128], index: 4, kind: input, shape index: {}]
  %s5 = inlined_call_operand.vmem [shape: f32[4,1,128], index: 5, kind: input, shape index: {}]
  %s6 = inlined_call_operand.vmem [shape: f32[4,1,128], index: 6, kind: input, shape index: {}]
  %s7 = inlined_call_operand.vmem [shape: f32[4,1,128], index: 7, kind: input, shape index: {}]
  %s8 = inlined_call_operand.hbm [shape: f32[4,128,128], index: 8, kind: input, shape index: {}]
  %s9 = inlined_call_operand.hbm [shape: f32[4,128,128], index: 9, kind: input, shape index: {}]
  %s10 = inlined_call_operand.vmem [shape: f32[4,1,128], index: 10, kind: input, shape index: {}]
  %s11 = inlined_call_operand.vmem [shape: f32[4,1,128], index: 11, kind: input, shape index: {}]
  %s12 = inlined_call_operand.vmem [shape: f32[4,1,128], index: 12, kind: input, shape index: {}]
  %s13 = inlined_call_operand.vmem [shape: f32[4,1,128], index: 13, kind: input, shape index: {}]
  %s14 = inlined_call_operand.vmem [shape: f32[4,1,128], index: 14, kind: input, shape index: {}]
  %s15 = inlined_call_operand.hbm [shape: f32[4,128,128], index: 15, kind: input, shape index: {}]
  %s16 = inlined_call_operand.hbm [shape: f32[4,128,128], index: 16, kind: input, shape index: {}]
  %s17 = inlined_call_operand.vmem [shape: f32[4,1,128], index: 17, kind: input, shape index: {}]
  %s18 = inlined_call_operand.hbm [shape: f32[16,128], index: 18, kind: output, shape index: {}]
  %s19 = sld [smem:[#allocation0]]
  $region106: #{tpu_custom_call.1} parent=0
    _
  %s21 = ssub.s32 1, %s19
  %s22 = scalar_select 0, %s21, %s19
  $region1: #{tpu_custom_call.1} parent=0
    #allocation2 [shape = 'u8[512]{0}', space=vmem, size = 0x400, scoped, tag = 'input window, operand 1, single buffered']
    #allocation3 [shape = 's32[1]{0}', space=sflag, size = 0x4, scoped, tag = 'scoped memory for tpu_custom_call.1']
    #allocation4 [shape = 's32[1]{0}', space=sflag, size = 0x4, scoped, tag = 'scoped memory for tpu_custom_call.1']
    #allocation5 [shape = 'u8[8192]{0}', space=vmem, size = 0x2000, scoped, tag = 'input window, operand 3, single buffered']
    #allocation6 [shape = 's32[1]{0}', space=sflag, size = 0x4, scoped, tag = 'scoped memory for tpu_custom_call.1']
    #allocation7 [shape = 'u8[262144]{0}', space=vmem, size = 0x40000, scoped, tag = 'input window, operand 8, single buffered']
    #allocation8 [shape = 'u8[262144]{0}', space=vmem, size = 0x40000, scoped, tag = 'input window, operand 9, single buffered']
    #allocation9 [shape = 's32[1]{0}', space=sflag, size = 0x4, scoped, tag = 'scoped memory for tpu_custom_call.1']
    #allocation10 [shape = 'u8[262144]{0}', space=vmem, size = 0x40000, scoped, tag = 'input window, operand 15, single buffered']
    #allocation11 [shape = 'u8[262144]{0}', space=vmem, size = 0x40000, scoped, tag = 'input window, operand 16, single buffered']
    #allocation12 [shape = 's32[1]{0}', space=sflag, size = 0x4, scoped, tag = 'scoped memory for tpu_custom_call.1']
    #allocation13 [shape = 'u8[8192]{0}', space=vmem, size = 0x2000, scoped, tag = 'output window, operand 0, single buffered']
    %23 = vsyncpa [#allocation3], 0
    %24 = vsyncpa [#allocation6], 0
    %25 = vsyncpa [#allocation9], 0
    %26 = vsyncpa [#allocation12], 0
    %27 = vsyncpa [#allocation4], 0
    // Predicated region
    $region2: #{tpu_custom_call.1} parent=1 // pred_check
      _
    $region3: #{tpu_custom_call.1} parent=1 // pred_check_branch
      %29 = sbr.rel (0) target = $region5
    $region4: #{tpu_custom_call.1} parent=1 // pred_region
      _
    $region5: #{tpu_custom_call.1} parent=1 // pred_fallthru
      _
    // Predicated region
    $region6: #{tpu_custom_call.1} parent=1 // pred_check
      _
    $region7: #{tpu_custom_call.1} parent=1 // pred_check_branch
      %31 = sbr.rel (0) target = $region9
    $region8: #{tpu_custom_call.1} parent=1 // pred_region
      %s33 = ssub.s32 16, 16
      %34 = vsyncadd [#allocation3], %s33
      %s36 = sshll.u32 [#allocation2], 4
      %s37 = int_to_ptr.vmem [resolvable:$true] %s36
      %39 = dma.hbm_to_vmem [thread:$0]  %s1, 16, %s37, [#allocation3]
    $region9: #{tpu_custom_call.1} parent=1 // pred_fallthru
      _
    // Predicated region
    $region10: #{tpu_custom_call.1} parent=1 // pred_check
      _
    $region11: #{tpu_custom_call.1} parent=1 // pred_check_branch
      %41 = sbr.rel (0) target = $region13
    $region12: #{tpu_custom_call.1} parent=1 // pred_region
      _
    $region13: #{tpu_custom_call.1} parent=1 // pred_fallthru
      _
    // Predicated region
    $region14: #{tpu_custom_call.1} parent=1 // pred_check
      _
    $region15: #{tpu_custom_call.1} parent=1 // pred_check_branch
      %43 = sbr.rel (0) target = $region17
    $region16: #{tpu_custom_call.1} parent=1 // pred_region
      %s45 = ssub.s32 256, 256
      %46 = vsyncadd [#allocation6], %s45
      %s47 = sshll.u32 [#allocation5], 4
      %s48 = int_to_ptr.vmem [resolvable:$true] %s47
      %53 = dma.hbm_to_vmem [thread:$0]  %s3, 256, %s48, [#allocation6], 128, 128, 8
    $region17: #{tpu_custom_call.1} parent=1 // pred_fallthru
      _
    // Predicated region
    $region18: #{tpu_custom_call.1} parent=1 // pred_check
      _
    $region19: #{tpu_custom_call.1} parent=1 // pred_check_branch
      %55 = sbr.rel (0) target = $region21
    $region20: #{tpu_custom_call.1} parent=1 // pred_region
      _
    $region21: #{tpu_custom_call.1} parent=1 // pred_fallthru
      _
    // Predicated region
    $region22: #{tpu_custom_call.1} parent=1 // pred_check
      _
    $region23: #{tpu_custom_call.1} parent=1 // pred_check_branch
      %57 = sbr.rel (0) target = $region25
    $region24: #{tpu_custom_call.1} parent=1 // pred_region
      _
    $region25: #{tpu_custom_call.1} parent=1 // pred_fallthru
      _
    // Predicated region
    $region26: #{tpu_custom_call.1} parent=1 // pred_check
      _
    $region27: #{tpu_custom_call.1} parent=1 // pred_check_branch
      %59 = sbr.rel (0) target = $region29
    $region28: #{tpu_custom_call.1} parent=1 // pred_region
      _
    $region29: #{tpu_custom_call.1} parent=1 // pred_fallthru
      _
    // Predicated region
    $region30: #{tpu_custom_call.1} parent=1 // pred_check
      _
    $region31: #{tpu_custom_call.1} parent=1 // pred_check_branch
      %61 = sbr.rel (0) target = $region33
    $region32: #{tpu_custom_call.1} parent=1 // pred_region
      _
    $region33: #{tpu_custom_call.1} parent=1 // pred_fallthru
      _
    // Predicated region
    $region34: #{tpu_custom_call.1} parent=1 // pred_check
      _
    $region35: #{tpu_custom_call.1} parent=1 // pred_check_branch
      %63 = sbr.rel (0) target = $region37
    $region36: #{tpu_custom_call.1} parent=1 // pred_region
      %s65 = ssub.s32 8192, 8192
      %66 = vsyncadd [#allocation6], %s65
      %s67 = sshll.u32 [#allocation7], 4
      %s68 = int_to_ptr.vmem [resolvable:$true] %s67
      %73 = dma.hbm_to_vmem [thread:$0]  %s8, 8192, %s68, [#allocation6], 128, 128, 8
    $region37: #{tpu_custom_call.1} parent=1 // pred_fallthru
      _
    // Predicated region
    $region38: #{tpu_custom_call.1} parent=1 // pred_check
      _
    $region39: #{tpu_custom_call.1} parent=1 // pred_check_branch
      %75 = sbr.rel (0) target = $region41
    $region40: #{tpu_custom_call.1} parent=1 // pred_region
      %s77 = ssub.s32 8192, 8192
      %78 = vsyncadd [#allocation9], %s77
      %s79 = sshll.u32 [#allocation8], 4
      %s80 = int_to_ptr.vmem [resolvable:$true] %s79
      %85 = dma.hbm_to_vmem [thread:$0]  %s9, 8192, %s80, [#allocation9], 128, 128, 8
    $region41: #{tpu_custom_call.1} parent=1 // pred_fallthru
      _
    // Predicated region
    $region42: #{tpu_custom_call.1} parent=1 // pred_check
      _
    $region43: #{tpu_custom_call.1} parent=1 // pred_check_branch
      %87 = sbr.rel (0) target = $region45
    $region44: #{tpu_custom_call.1} parent=1 // pred_region
      _
    $region45: #{tpu_custom_call.1} parent=1 // pred_fallthru
      _
    // Predicated region
    $region46: #{tpu_custom_call.1} parent=1 // pred_check
      _
    $region47: #{tpu_custom_call.1} parent=1 // pred_check_branch
      %89 = sbr.rel (0) target = $region49
    $region48: #{tpu_custom_call.1} parent=1 // pred_region
      _
    $region49: #{tpu_custom_call.1} parent=1 // pred_fallthru
      _
    // Predicated region
    $region50: #{tpu_custom_call.1} parent=1 // pred_check
      _
    $region51: #{tpu_custom_call.1} parent=1 // pred_check_branch
      %91 = sbr.rel (0) target = $region53
    $region52: #{tpu_custom_call.1} parent=1 // pred_region
      _
    $region53: #{tpu_custom_call.1} parent=1 // pred_fallthru
      _
    // Predicated region
    $region54: #{tpu_custom_call.1} parent=1 // pred_check
      _
    $region55: #{tpu_custom_call.1} parent=1 // pred_check_branch
      %93 = sbr.rel (0) target = $region57
    $region56: #{tpu_custom_call.1} parent=1 // pred_region
      _
    $region57: #{tpu_custom_call.1} parent=1 // pred_fallthru
      _
    // Predicated region
    $region58: #{tpu_custom_call.1} parent=1 // pred_check
      _
    $region59: #{tpu_custom_call.1} parent=1 // pred_check_branch
      %95 = sbr.rel (0) target = $region61
    $region60: #{tpu_custom_call.1} parent=1 // pred_region
      _
    $region61: #{tpu_custom_call.1} parent=1 // pred_fallthru
      _
    // Predicated region
    $region62: #{tpu_custom_call.1} parent=1 // pred_check
      _
    $region63: #{tpu_custom_call.1} parent=1 // pred_check_branch
      %97 = sbr.rel (0) target = $region65
    $region64: #{tpu_custom_call.1} parent=1 // pred_region
      %s99 = ssub.s32 8192, 8192
      %100 = vsyncadd [#allocation9], %s99
      %s101 = sshll.u32 [#allocation10], 4
      %s102 = int_to_ptr.vmem [resolvable:$true] %s101
      %107 = dma.hbm_to_vmem [thread:$0]  %s15, 8192, %s102, [#allocation9], 128, 128, 8
    $region65: #{tpu_custom_call.1} parent=1 // pred_fallthru
      _
    // Predicated region
    $region66: #{tpu_custom_call.1} parent=1 // pred_check
      _
    $region67: #{tpu_custom_call.1} parent=1 // pred_check_branch
      %109 = sbr.rel (0) target = $region69
    $region68: #{tpu_custom_call.1} parent=1 // pred_region
      %s111 = ssub.s32 8192, 8192
      %112 = vsyncadd [#allocation12], %s111
      %s113 = sshll.u32 [#allocation11], 4
      %s114 = int_to_ptr.vmem [resolvable:$true] %s113
      %119 = dma.hbm_to_vmem [thread:$0]  %s16, 8192, %s114, [#allocation12], 128, 128, 8
    $region69: #{tpu_custom_call.1} parent=1 // pred_fallthru
      _
    // Predicated region
    $region70: #{tpu_custom_call.1} parent=1 // pred_check
      _
    $region71: #{tpu_custom_call.1} parent=1 // pred_check_branch
      %121 = sbr.rel (0) target = $region73
    $region72: #{tpu_custom_call.1} parent=1 // pred_region
      _
    $region73: #{tpu_custom_call.1} parent=1 // pred_fallthru
      _
    // Predicated region
    $region74: #{tpu_custom_call.1} parent=1 // pred_check
      _
    $region75: #{tpu_custom_call.1} parent=1 // pred_check_branch
      %123 = sbr.rel (0) target = $region77
    $region76: #{tpu_custom_call.1} parent=1 // pred_region
      %124 = dma.done [#allocation3], 16
    $region77: #{tpu_custom_call.1} parent=1 // pred_fallthru
      _
    // Predicated region
    $region78: #{tpu_custom_call.1} parent=1 // pred_check
      _
    $region79: #{tpu_custom_call.1} parent=1 // pred_check_branch
      %126 = sbr.rel (0) target = $region81
    $region80: #{tpu_custom_call.1} parent=1 // pred_region
      %127 = dma.done [#allocation6], 256
    $region81: #{tpu_custom_call.1} parent=1 // pred_fallthru
      _
    // Predicated region
    $region82: #{tpu_custom_call.1} parent=1 // pred_check
      _
    $region83: #{tpu_custom_call.1} parent=1 // pred_check_branch
      %129 = sbr.rel (0) target = $region85
    $region84: #{tpu_custom_call.1} parent=1 // pred_region
      %130 = dma.done [#allocation6], 8192
    $region85: #{tpu_custom_call.1} parent=1 // pred_fallthru
      _
    // Predicated region
    $region86: #{tpu_custom_call.1} parent=1 // pred_check
      _
    $region87: #{tpu_custom_call.1} parent=1 // pred_check_branch
      %132 = sbr.rel (0) target = $region89
    $region88: #{tpu_custom_call.1} parent=1 // pred_region
      %133 = dma.done [#allocation9], 8192
    $region89: #{tpu_custom_call.1} parent=1 // pred_fallthru
      _
    // Predicated region
    $region90: #{tpu_custom_call.1} parent=1 // pred_check
      _
    $region91: #{tpu_custom_call.1} parent=1 // pred_check_branch
      %135 = sbr.rel (0) target = $region93
    $region92: #{tpu_custom_call.1} parent=1 // pred_region
      %136 = dma.done [#allocation9], 8192
    $region93: #{tpu_custom_call.1} parent=1 // pred_fallthru
      _
    // Predicated region
    $region94: #{tpu_custom_call.1} parent=1 // pred_check
      _
    $region95: #{tpu_custom_call.1} parent=1 // pred_check_branch
      %138 = sbr.rel (0) target = $region97
    $region96: #{tpu_custom_call.1} parent=1 // pred_region
      %139 = dma.done [#allocation12], 8192
    $region97: #{tpu_custom_call.1} parent=1 // pred_fallthru
      _
    %v140 = vld [vmem:[%s0] sm:$0xff]
    %v141 = vld [vmem:[%s0 + $0x8] sm:$0xff]
    %v142 = vld [vmem:[%s0 + $0x10] sm:$0xff]
    %v143 = vld [vmem:[%s0 + $0x18] sm:$0xff]
    %v144 = vld [vmem:[%s0 + $0x20] sm:$0xff]
    %v145 = vld [vmem:[%s0 + $0x28] sm:$0xff]
    %v146 = vld [vmem:[#allocation2] sm:$0x1]
    %v147 = vlaneseq
    %v148 = vand.u32 %v147, 127
    %149 = vset.pattern.permute.xlu0 0
    %150 = vperm.xlu0 %149, %v140
    %v151 = vpop.permute.xlu0 %150
    %152 = vset.pattern.permute.xlu0 0
    %153 = vperm.xlu0 %152, %v141
    %v154 = vpop.permute.xlu0 %153
    %155 = vset.pattern.permute.xlu0 0
    %156 = vperm.xlu0 %155, %v142
    %v157 = vpop.permute.xlu0 %156
    %158 = vset.pattern.permute.xlu0 0
    %159 = vperm.xlu0 %158, %v143
    %v160 = vpop.permute.xlu0 %159
    %161 = vset.pattern.permute.xlu0 0
    %162 = vperm.xlu0 %161, %v144
    %v163 = vpop.permute.xlu0 %162
    %164 = vset.pattern.permute.xlu0 0
    %165 = vperm.xlu0 %164, %v145
    %v166 = vpop.permute.xlu0 %165
    %vm167 = vcmp.eq.s32.totalorder %v151, %v148
    %vm168 = vcmp.eq.s32.totalorder %v154, %v148
    %vm169 = vcmp.eq.s32.totalorder %v157, %v148
    %vm170 = vcmp.eq.s32.totalorder %v160, %v148
    %vm171 = vcmp.eq.s32.totalorder %v163, %v148
    %vm172 = vcmp.eq.s32.totalorder %v166, %v148
    %v173 = vsel %vm167, 1.0, 0.0
    %v174 = vsel %vm168, 1.0, 0.0
    %v175 = vsel %vm169, 1.0, 0.0
    %v176 = vsel %vm170, 1.0, 0.0
    %v177 = vsel %vm171, 1.0, 0.0
    %v178 = vsel %vm172, 1.0, 0.0
    %v179 = vlaneseq
    %v180 = vshrl.u32 %v179, 7
    %v181 = vadd.s32 %v180, 8
    %v182 = vlaneseq
    %v183 = vshrl.u32 %v182, 7
    %v184 = vsub.s32 0, %v183
    %v185 = vrot.slane %v146, %v184
    %vm186 = vcmp.eq.s32.totalorder %v180, %v185
    %vm187 = vcmp.eq.s32.totalorder %v181, %v185
    %v188 = vsel %vm186, 1.0, 0.0
    %v189 = vsel %vm187, 1.0, 0.0
    %vm190 = vcmask 392192
    %v191 = vsel %vm190, %v188, 0.0
    %192 = vadd.xlane.f32.xlu0 %v191
    %v193 = vpop.xlane.xlu0 %192
    %v194 = vsel %vm190, %v189, 0.0
    %195 = vadd.xlane.f32.xlu0 %v194
    %v196 = vpop.xlane.xlu0 %195
    %v197 = vmax.f32 %v193, 1.0
    %v198 = vmax.f32 %v196, 1.0
    %v199 = vrcp.pop %v197
    %v200 = vmul.f32 1.0, %v199
    %v201 = vrcp.pop %v198
    %v202 = vmul.f32 1.0, %v201
    %v203 = vld [vmem:[#allocation5] sm:$0xff]
    %v204 = vld [vmem:[#allocation5 + $0x8] sm:$0xff]
    %v205 = vld [vmem:[%s2] sm:$0xff]
    %v206 = vld [vmem:[%s2 + $0x8] sm:$0xff]
    %v207 = vld [vmem:[%s2 + $0x10] sm:$0xff]
    %v208 = vld [vmem:[%s2 + $0x18] sm:$0xff]
    %v209 = vld [vmem:[%s2 + $0x20] sm:$0xff]
    %v210 = vld [vmem:[%s2 + $0x28] sm:$0xff]
    %vm211 = vcmask 130048
    %v213 = vsel %vm211, %v173, 0
    %v216 = vsel %vm211, %v174, 0
    %v219 = vsel %vm211, %v175, 0
    %v222 = vsel %vm211, %v176, 0
    %v225 = vsel %vm211, %v177, 0
    %v228 = vsel %vm211, %v178, 0
    %230 = vmatprep.subr.mxu0 0.0
    %231 = vmatpush1.msra.mxu0 %v203
    %232 = vmatprep.subr.mxu0 0.0
    %233 = vmatpush1.msra.mxu0 %v204
    %234 = vmatprep.subr.mxu0 0.0
    %235 = vmatpush1.msra.mxu0 0.0
    %236 = vmatprep.subr.mxu0 0.0
    %237 = vmatpush1.msra.mxu0 0.0
    %238 = vmatprep.subr.mxu0 0.0
    %239 = vmatpush1.msra.mxu0 0.0
    %240 = vmatprep.subr.mxu0 0.0
    %241 = vmatpush1.msra.mxu0 0.0
    %242 = vmatprep.subr.mxu0 0.0
    %243 = vmatpush1.msra.mxu0 0.0
    %244 = vmatprep.subr.mxu0 0.0
    %245 = vmatpush1.msra.mxu0 0.0
    %246 = vmatprep.subr.mxu0 0.0
    %247 = vmatpush1.msra.mxu0 0.0
    %248 = vmatprep.subr.mxu0 0.0
    %249 = vmatpush1.msra.mxu0 0.0
    %250 = vmatprep.subr.mxu0 0.0
    %251 = vmatpush1.msra.mxu0 0.0
    %252 = vmatprep.subr.mxu0 0.0
    %253 = vmatpush1.msra.mxu0 0.0
    %254 = vmatprep.subr.mxu0 0.0
    %255 = vmatpush1.msra.mxu0 0.0
    %256 = vmatprep.subr.mxu0 0.0
    %257 = vmatpush1.msra.mxu0 0.0
    %258 = vmatprep.subr.mxu0 0.0
    %259 = vmatpush1.msra.mxu0 0.0
    %260 = vmatprep.subr.mxu0 0.0
    %261 = vmatpush1.msra.mxu0 0.0
    %262 = vmatprep.subr.mxu0 0.0
    %263 = vmatpush1.msra.mxu0 0.0
    %264 = vmatprep.subr.mxu0 0.0
    %265 = vmatpush1.msra.mxu0 0.0
    %266 = vmatprep.subr.mxu0 0.0
    %267 = vmatpush1.msra.mxu0 0.0
    %268 = vmatprep.subr.mxu0 0.0
    %269 = vmatpush1.msra.mxu0 0.0
    %270 = vmatprep.subr.mxu0 0.0
    %271 = vmatpush1.msra.mxu0 0.0
    %272 = vmatprep.subr.mxu0 0.0
    %273 = vmatpush1.msra.mxu0 0.0
    %274 = vmatprep.subr.mxu0 0.0
    %275 = vmatpush1.msra.mxu0 0.0
    %276 = vmatprep.subr.mxu0 0.0
    %277 = vmatpush1.msra.mxu0 0.0
    %278 = vmatprep.subr.mxu0 0.0
    %279 = vmatpush1.msra.mxu0 0.0
    %280 = vmatprep.subr.mxu0 0.0
    %281 = vmatpush1.msra.mxu0 0.0
    %282 = vmatprep.subr.mxu0 0.0
    %283 = vmatpush1.msra.mxu0 0.0
    %284 = vmatprep.subr.mxu0 0.0
    %285 = vmatpush1.msra.mxu0 0.0
    %286 = vmatprep.subr.mxu0 0.0
    %287 = vmatpush1.msra.mxu0 0.0
    %288 = vmatprep.subr.mxu0 0.0
    %289 = vmatpush1.msra.mxu0 0.0
    %290 = vmatprep.subr.mxu0 0.0
    %291 = vmatpush1.msra.mxu0 0.0
    %292 = vmatprep.subr.mxu0 0.0
    %293 = vmatpush1.msra.mxu0 0.0
    %294 = vmatprep.mubr.f32.mxu0 0.0
    %295 = vmatmul.mubr.f32.gmra.mrb[0].mxu0 %v213
    %v296 = vpop.f32.mrb[0].mxu0
    %v297 = vadd.f32 0.0, %v296
    %v298 = vpop.f32.mrb[0].mxu0
    %299 = vmatprep.mubr.f32.mxu0 0.0
    %300 = vmatmul.mubr.f32.gmra.mrb[0].mxu0 %v216
    %v301 = vpop.f32.mrb[0].mxu0
    %v302 = vadd.f32 0.0, %v301
    %v303 = vpop.f32.mrb[0].mxu0
    %304 = vmatprep.mubr.f32.mxu0 0.0
    %305 = vmatmul.mubr.f32.gmra.mrb[0].mxu0 %v219
    %v306 = vpop.f32.mrb[0].mxu0
    %v307 = vadd.f32 0.0, %v306
    %v308 = vpop.f32.mrb[0].mxu0
    %309 = vmatprep.mubr.f32.mxu0 0.0
    %310 = vmatmul.mubr.f32.gmra.mrb[0].mxu0 %v222
    %v311 = vpop.f32.mrb[0].mxu0
    %v312 = vadd.f32 0.0, %v311
    %v313 = vpop.f32.mrb[0].mxu0
    %314 = vmatprep.mubr.f32.mxu0 0.0
    %315 = vmatmul.mubr.f32.gmra.mrb[0].mxu0 %v225
    %v316 = vpop.f32.mrb[0].mxu0
    %v317 = vadd.f32 0.0, %v316
    %v318 = vpop.f32.mrb[0].mxu0
    %319 = vmatprep.mubr.f32.mxu0 0.0
    %320 = vmatmul.mubr.f32.gmra.mrb[0].mxu0 %v228
    %v321 = vpop.f32.mrb[0].mxu0
    %v322 = vadd.f32 0.0, %v321
    %v323 = vpop.f32.mrb[0].mxu0
    %324 = vdwg.mxu0
    %v325 = vld [vmem:[%s4] sm:$0x1]
    %v326 = vld [vmem:[%s5] sm:$0x1]
    %v327 = vadd.f32 %v205, %v206
    %v328 = vadd.f32 %v327, %v207
    %v329 = vadd.f32 %v328, %v208
    %v330 = vadd.f32 %v329, %v209
    %v331 = vadd.f32 %v330, %v210
    %v332 = vrot.slane %v331, 4
    %v333 = vadd.f32 %v331, %v332
    %v334 = vrot.slane %v333, 2
    %v335 = vadd.f32 %v333, %v334
    %v336 = vrot.slane %v335, 1
    %v337 = vadd.f32 %v335, %v336
    %v338 = vrcp.pop 48.0
    %v339 = vmul.f32 %v337, %v338
    %v340 = vsub.f32 %v205, %v339
    %v341 = vsub.f32 %v206, %v339
    %v342 = vsub.f32 %v207, %v339
    %v343 = vsub.f32 %v208, %v339
    %v344 = vsub.f32 %v209, %v339
    %v345 = vsub.f32 %v210, %v339
    %v346 = vmul.f32 %v340, %v340
    %v347 = vmul.f32 %v341, %v341
    %v348 = vmul.f32 %v342, %v342
    %v349 = vmul.f32 %v343, %v343
    %v350 = vmul.f32 %v344, %v344
    %v351 = vmul.f32 %v345, %v345
    %v352 = vadd.f32 %v346, %v347
    %v353 = vadd.f32 %v352, %v348
    %v354 = vadd.f32 %v353, %v349
    %v355 = vadd.f32 %v354, %v350
    %v356 = vadd.f32 %v355, %v351
    %v357 = vrot.slane %v356, 4
    %v358 = vadd.f32 %v356, %v357
    %v359 = vrot.slane %v358, 2
    %v360 = vadd.f32 %v358, %v359
    %v361 = vrot.slane %v360, 1
    %v362 = vadd.f32 %v360, %v361
    %v363 = vmul.f32 %v362, %v338
    %v364 = vadd.f32 %v363, 1e-05
    %v365 = vrsqrt.pop %v364
    %v366 = vmul.f32 %v365, %v325
    %v367 = vlaneseq
    %v368 = vshrl.u32 %v367, 7
    %v369 = vsub.s32 0, %v368
    %v370 = vrot.slane %v366, %v369
    %v371 = vmul.f32 %v340, %v370
    %v372 = vmul.f32 %v341, %v370
    %v373 = vmul.f32 %v342, %v370
    %v374 = vmul.f32 %v343, %v370
    %v375 = vmul.f32 %v344, %v370
    %v376 = vmul.f32 %v345, %v370
    %v378 = vlaneseq
    %v379 = vshrl.u32 %v378, 7
    %v380 = vsub.s32 0, %v379
    %v381 = vrot.slane %v326, %v380
    %v383 = vadd.f32 %v371, %v381
    %v384 = vadd.f32 %v372, %v381
    %v385 = vadd.f32 %v373, %v381
    %v386 = vadd.f32 %v374, %v381
    %v387 = vadd.f32 %v375, %v381
    %v388 = vadd.f32 %v376, %v381
    %v389 = vld [vmem:[%s6] sm:$0x1]
    %v390 = vld [vmem:[%s7] sm:$0x1]
    %v391 = vadd.f32 %v297, %v302
    %v392 = vadd.f32 %v391, %v307
    %v393 = vadd.f32 %v392, %v312
    %v394 = vadd.f32 %v393, %v317
    %v395 = vadd.f32 %v394, %v322
    %v396 = vrot.slane %v395, 4
    %v397 = vadd.f32 %v395, %v396
    %v398 = vrot.slane %v397, 2
    %v399 = vadd.f32 %v397, %v398
    %v400 = vrot.slane %v399, 1
    %v401 = vadd.f32 %v399, %v400
    %v402 = vmul.f32 %v401, %v338
    %v403 = vsub.f32 %v297, %v402
    %v404 = vsub.f32 %v302, %v402
    %v405 = vsub.f32 %v307, %v402
    %v406 = vsub.f32 %v312, %v402
    %v407 = vsub.f32 %v317, %v402
    %v408 = vsub.f32 %v322, %v402
    %v409 = vmul.f32 %v403, %v403
    %v410 = vmul.f32 %v404, %v404
    %v411 = vmul.f32 %v405, %v405
    %v412 = vmul.f32 %v406, %v406
    %v413 = vmul.f32 %v407, %v407
    %v414 = vmul.f32 %v408, %v408
    %v415 = vadd.f32 %v409, %v410
    %v416 = vadd.f32 %v415, %v411
    %v417 = vadd.f32 %v416, %v412
    %v418 = vadd.f32 %v417, %v413
    %v419 = vadd.f32 %v418, %v414
    %v420 = vrot.slane %v419, 4
    %v421 = vadd.f32 %v419, %v420
    %v422 = vrot.slane %v421, 2
    %v423 = vadd.f32 %v421, %v422
    %v424 = vrot.slane %v423, 1
    %v425 = vadd.f32 %v423, %v424
    %v426 = vmul.f32 %v425, %v338
    %v427 = vadd.f32 %v426, 1e-05
    %v428 = vrsqrt.pop %v427
    %v429 = vmul.f32 %v428, %v389
    %v430 = vlaneseq
    %v431 = vshrl.u32 %v430, 7
    %v432 = vsub.s32 0, %v431
    %v433 = vrot.slane %v429, %v432
    %v434 = vmul.f32 %v403, %v433
    %v435 = vmul.f32 %v404, %v433
    %v436 = vmul.f32 %v405, %v433
    %v437 = vmul.f32 %v406, %v433
    %v438 = vmul.f32 %v407, %v433
    %v439 = vmul.f32 %v408, %v433
    %v441 = vlaneseq
    %v442 = vshrl.u32 %v441, 7
    %v443 = vsub.s32 0, %v442
    %v444 = vrot.slane %v390, %v443
    %v446 = vadd.f32 %v434, %v444
    %v447 = vadd.f32 %v435, %v444
    %v448 = vadd.f32 %v436, %v444
    %v449 = vadd.f32 %v437, %v444
    %v450 = vadd.f32 %v438, %v444
    %v451 = vadd.f32 %v439, %v444
    %v452 = vld [vmem:[#allocation7] sm:$0xff]
    %v453 = vld [vmem:[#allocation7 + $0x8] sm:$0xff]
    %v454 = vld [vmem:[#allocation7 + $0x10] sm:$0xff]
    %v455 = vld [vmem:[#allocation7 + $0x18] sm:$0xff]
    %v456 = vld [vmem:[#allocation7 + $0x20] sm:$0xff]
    %v457 = vld [vmem:[#allocation7 + $0x28] sm:$0xff]
    %v458 = vld [vmem:[#allocation7 + $0x30] sm:$0xff]
    %v459 = vld [vmem:[#allocation7 + $0x38] sm:$0xff]
    %v460 = vld [vmem:[#allocation7 + $0x40] sm:$0xff]
    %v461 = vld [vmem:[#allocation7 + $0x48] sm:$0xff]
    %v462 = vld [vmem:[#allocation7 + $0x50] sm:$0xff]
    %v463 = vld [vmem:[#allocation7 + $0x58] sm:$0xff]
    %v464 = vld [vmem:[#allocation7 + $0x60] sm:$0xff]
    %v465 = vld [vmem:[#allocation7 + $0x68] sm:$0xff]
    %v466 = vld [vmem:[#allocation7 + $0x70] sm:$0xff]
    %v467 = vld [vmem:[#allocation7 + $0x78] sm:$0xff]
    %v468 = vld [vmem:[#allocation8] sm:$0xff]
    %v469 = vld [vmem:[#allocation8 + $0x8] sm:$0xff]
    %v470 = vld [vmem:[#allocation8 + $0x10] sm:$0xff]
    %v471 = vld [vmem:[#allocation8 + $0x18] sm:$0xff]
    %v472 = vld [vmem:[#allocation8 + $0x20] sm:$0xff]
    %v473 = vld [vmem:[#allocation8 + $0x28] sm:$0xff]
    %v474 = vld [vmem:[#allocation8 + $0x30] sm:$0xff]
    %v475 = vld [vmem:[#allocation8 + $0x38] sm:$0xff]
    %v476 = vld [vmem:[#allocation8 + $0x40] sm:$0xff]
    %v477 = vld [vmem:[#allocation8 + $0x48] sm:$0xff]
    %v478 = vld [vmem:[#allocation8 + $0x50] sm:$0xff]
    %v479 = vld [vmem:[#allocation8 + $0x58] sm:$0xff]
    %v480 = vld [vmem:[#allocation8 + $0x60] sm:$0xff]
    %v481 = vld [vmem:[#allocation8 + $0x68] sm:$0xff]
    %v482 = vld [vmem:[#allocation8 + $0x70] sm:$0xff]
    %v483 = vld [vmem:[#allocation8 + $0x78] sm:$0xff]
    %484 = vmatprep.subr.mxu0 0.0
    %485 = vmatpush1.msra.mxu0 %v468
    %486 = vmatprep.subr.mxu0 0.0
    %487 = vmatpush1.msra.mxu0 %v469
    %488 = vmatprep.subr.mxu0 0.0
    %489 = vmatpush1.msra.mxu0 %v470
    %490 = vmatprep.subr.mxu0 0.0
    %491 = vmatpush1.msra.mxu0 %v471
    %492 = vmatprep.subr.mxu0 0.0
    %493 = vmatpush1.msra.mxu0 %v472
    %494 = vmatprep.subr.mxu0 0.0
    %495 = vmatpush1.msra.mxu0 %v473
    %496 = vmatprep.subr.mxu0 0.0
    %497 = vmatpush1.msra.mxu0 %v474
    %498 = vmatprep.subr.mxu0 0.0
    %499 = vmatpush1.msra.mxu0 %v475
    %500 = vmatprep.subr.mxu0 0.0
    %501 = vmatpush1.msra.mxu0 %v476
    %502 = vmatprep.subr.mxu0 0.0
    %503 = vmatpush1.msra.mxu0 %v477
    %504 = vmatprep.subr.mxu0 0.0
    %505 = vmatpush1.msra.mxu0 %v478
    %506 = vmatprep.subr.mxu0 0.0
    %507 = vmatpush1.msra.mxu0 %v479
    %508 = vmatprep.subr.mxu0 0.0
    %509 = vmatpush1.msra.mxu0 %v480
    %510 = vmatprep.subr.mxu0 0.0
    %511 = vmatpush1.msra.mxu0 %v481
    %512 = vmatprep.subr.mxu0 0.0
    %513 = vmatpush1.msra.mxu0 %v482
    %514 = vmatprep.subr.mxu0 0.0
    %515 = vmatpush1.msra.mxu0 %v483
    %516 = vmatprep.subr.mxu0 0.0
    %517 = vmatpush1.msra.mxu0 0.0
    %518 = vmatprep.subr.mxu0 0.0
    %519 = vmatpush1.msra.mxu0 0.0
    %520 = vmatprep.subr.mxu0 0.0
    %521 = vmatpush1.msra.mxu0 0.0
    %522 = vmatprep.subr.mxu0 0.0
    %523 = vmatpush1.msra.mxu0 0.0
    %524 = vmatprep.subr.mxu0 0.0
    %525 = vmatpush1.msra.mxu0 0.0
    %526 = vmatprep.subr.mxu0 0.0
    %527 = vmatpush1.msra.mxu0 0.0
    %528 = vmatprep.subr.mxu0 0.0
    %529 = vmatpush1.msra.mxu0 0.0
    %530 = vmatprep.subr.mxu0 0.0
    %531 = vmatpush1.msra.mxu0 0.0
    %532 = vmatprep.subr.mxu0 0.0
    %533 = vmatpush1.msra.mxu0 0.0
    %534 = vmatprep.subr.mxu0 0.0
    %535 = vmatpush1.msra.mxu0 0.0
    %536 = vmatprep.subr.mxu0 0.0
    %537 = vmatpush1.msra.mxu0 0.0
    %538 = vmatprep.subr.mxu0 0.0
    %539 = vmatpush1.msra.mxu0 0.0
    %540 = vmatprep.subr.mxu0 0.0
    %541 = vmatpush1.msra.mxu0 0.0
    %542 = vmatprep.subr.mxu0 0.0
    %543 = vmatpush1.msra.mxu0 0.0
    %544 = vmatprep.subr.mxu0 0.0
    %545 = vmatpush1.msra.mxu0 0.0
    %546 = vmatprep.subr.mxu0 0.0
    %547 = vmatpush1.msra.mxu0 0.0
    %548 = vmatprep.mubr.f32.mxu0 0.0
    %549 = vmatmul.mubr.f32.gmra.mrb[0].mxu0 %v446
    %v550 = vpop.f32.mrb[0].mxu0
    %v551 = vadd.f32 0.0, %v550
    %v552 = vpop.f32.mrb[0].mxu0
    %553 = vmatprep.mubr.f32.mxu0 0.0
    %554 = vmatmul.mubr.f32.gmra.mrb[0].mxu0 %v447
    %v555 = vpop.f32.mrb[0].mxu0
    %v556 = vadd.f32 0.0, %v555
    %v557 = vpop.f32.mrb[0].mxu0
    %558 = vmatprep.mubr.f32.mxu0 0.0
    %559 = vmatmul.mubr.f32.gmra.mrb[0].mxu0 %v448
    %v560 = vpop.f32.mrb[0].mxu0
    %v561 = vadd.f32 0.0, %v560
    %v562 = vpop.f32.mrb[0].mxu0
    %563 = vmatprep.mubr.f32.mxu0 0.0
    %564 = vmatmul.mubr.f32.gmra.mrb[0].mxu0 %v449
    %v565 = vpop.f32.mrb[0].mxu0
    %v566 = vadd.f32 0.0, %v565
    %v567 = vpop.f32.mrb[0].mxu0
    %568 = vmatprep.mubr.f32.mxu0 0.0
    %569 = vmatmul.mubr.f32.gmra.mrb[0].mxu0 %v450
    %v570 = vpop.f32.mrb[0].mxu0
    %v571 = vadd.f32 0.0, %v570
    %v572 = vpop.f32.mrb[0].mxu0
    %573 = vmatprep.mubr.f32.mxu0 0.0
    %574 = vmatmul.mubr.f32.gmra.mrb[0].mxu0 %v451
    %v575 = vpop.f32.mrb[0].mxu0
    %v576 = vadd.f32 0.0, %v575
    %v577 = vpop.f32.mrb[0].mxu0
    %578 = vdwg.mxu0
    %579 = vmatprep.subr.mxu0 0.0
    %580 = vmatpush1.msra.mxu0 %v452
    %581 = vmatprep.subr.mxu0 0.0
    %582 = vmatpush1.msra.mxu0 %v453
    %583 = vmatprep.subr.mxu0 0.0
    %584 = vmatpush1.msra.mxu0 %v454
    %585 = vmatprep.subr.mxu0 0.0
    %586 = vmatpush1.msra.mxu0 %v455
    %587 = vmatprep.subr.mxu0 0.0
    %588 = vmatpush1.msra.mxu0 %v456
    %589 = vmatprep.subr.mxu0 0.0
    %590 = vmatpush1.msra.mxu0 %v457
    %591 = vmatprep.subr.mxu0 0.0
    %592 = vmatpush1.msra.mxu0 %v458
    %593 = vmatprep.subr.mxu0 0.0
    %594 = vmatpush1.msra.mxu0 %v459
    %595 = vmatprep.subr.mxu0 0.0
    %596 = vmatpush1.msra.mxu0 %v460
    %597 = vmatprep.subr.mxu0 0.0
    %598 = vmatpush1.msra.mxu0 %v461
    %599 = vmatprep.subr.mxu0 0.0
    %600 = vmatpush1.msra.mxu0 %v462
    %601 = vmatprep.subr.mxu0 0.0
    %602 = vmatpush1.msra.mxu0 %v463
    %603 = vmatprep.subr.mxu0 0.0
    %604 = vmatpush1.msra.mxu0 %v464
    %605 = vmatprep.subr.mxu0 0.0
    %606 = vmatpush1.msra.mxu0 %v465
    %607 = vmatprep.subr.mxu0 0.0
    %608 = vmatpush1.msra.mxu0 %v466
    %609 = vmatprep.subr.mxu0 0.0
    %610 = vmatpush1.msra.mxu0 %v467
    %611 = vmatprep.subr.mxu0 0.0
    %612 = vmatpush1.msra.mxu0 0.0
    %613 = vmatprep.subr.mxu0 0.0
    %614 = vmatpush1.msra.mxu0 0.0
    %615 = vmatprep.subr.mxu0 0.0
    %616 = vmatpush1.msra.mxu0 0.0
    %617 = vmatprep.subr.mxu0 0.0
    %618 = vmatpush1.msra.mxu0 0.0
    %619 = vmatprep.subr.mxu0 0.0
    %620 = vmatpush1.msra.mxu0 0.0
    %621 = vmatprep.subr.mxu0 0.0
    %622 = vmatpush1.msra.mxu0 0.0
    %623 = vmatprep.subr.mxu0 0.0
    %624 = vmatpush1.msra.mxu0 0.0
    %625 = vmatprep.subr.mxu0 0.0
    %626 = vmatpush1.msra.mxu0 0.0
    %627 = vmatprep.subr.mxu0 0.0
    %628 = vmatpush1.msra.mxu0 0.0
    %629 = vmatprep.subr.mxu0 0.0
    %630 = vmatpush1.msra.mxu0 0.0
    %631 = vmatprep.subr.mxu0 0.0
    %632 = vmatpush1.msra.mxu0 0.0
    %633 = vmatprep.subr.mxu0 0.0
    %634 = vmatpush1.msra.mxu0 0.0
    %635 = vmatprep.subr.mxu0 0.0
    %636 = vmatpush1.msra.mxu0 0.0
    %637 = vmatprep.subr.mxu0 0.0
    %638 = vmatpush1.msra.mxu0 0.0
    %639 = vmatprep.subr.mxu0 0.0
    %640 = vmatpush1.msra.mxu0 0.0
    %641 = vmatprep.subr.mxu0 0.0
    %642 = vmatpush1.msra.mxu0 0.0
    %643 = vmatprep.mubr.f32.mxu0 0.0
    %644 = vmatmul.mubr.f32.gmra.mrb[0].mxu0 %v383
    %v645 = vpop.f32.mrb[0].mxu0
    %v646 = vadd.f32 %v551, %v645
    %v647 = vpop.f32.mrb[0].mxu0
    %648 = vmatprep.mubr.f32.mxu0 0.0
    %649 = vmatmul.mubr.f32.gmra.mrb[0].mxu0 %v384
    %v650 = vpop.f32.mrb[0].mxu0
    %v651 = vadd.f32 %v556, %v650
    %v652 = vpop.f32.mrb[0].mxu0
    %653 = vmatprep.mubr.f32.mxu0 0.0
    %654 = vmatmul.mubr.f32.gmra.mrb[0].mxu0 %v385
    %v655 = vpop.f32.mrb[0].mxu0
    %v656 = vadd.f32 %v561, %v655
    %v657 = vpop.f32.mrb[0].mxu0
    %658 = vmatprep.mubr.f32.mxu0 0.0
    %659 = vmatmul.mubr.f32.gmra.mrb[0].mxu0 %v386
    %v660 = vpop.f32.mrb[0].mxu0
    %v661 = vadd.f32 %v566, %v660
    %v662 = vpop.f32.mrb[0].mxu0
    %663 = vmatprep.mubr.f32.mxu0 0.0
    %664 = vmatmul.mubr.f32.gmra.mrb[0].mxu0 %v387
    %v665 = vpop.f32.mrb[0].mxu0
    %v666 = vadd.f32 %v571, %v665
    %v667 = vpop.f32.mrb[0].mxu0
    %668 = vmatprep.mubr.f32.mxu0 0.0
    %669 = vmatmul.mubr.f32.gmra.mrb[0].mxu0 %v388
    %v670 = vpop.f32.mrb[0].mxu0
    %v671 = vadd.f32 %v576, %v670
    %v672 = vpop.f32.mrb[0].mxu0
    %673 = vdwg.mxu0
    %v674 = vld [vmem:[%s10] sm:$0x1]
    %v676 = vlaneseq
    %v677 = vshrl.u32 %v676, 7
    %v678 = vsub.s32 0, %v677
    %v679 = vrot.slane %v674, %v678
    %v681 = vadd.f32 %v646, %v679
    %v682 = vadd.f32 %v651, %v679
    %v683 = vadd.f32 %v656, %v679
    %v684 = vadd.f32 %v661, %v679
    %v685 = vadd.f32 %v666, %v679
    %v686 = vadd.f32 %v671, %v679
    %v687 = vmax.f32 %v681, 0.0
    %v688 = vmax.f32 %v682, 0.0
    %v689 = vmax.f32 %v683, 0.0
    %v690 = vmax.f32 %v684, 0.0
    %v691 = vmax.f32 %v685, 0.0
    %v692 = vmax.f32 %v686, 0.0
    %v694 = vsel %vm190, %v188, 0
    %v697 = vsel %vm190, %v189, 0
    %699 = vmatprep.subr.mxu0 0.0
    %700 = vmatpush1.msra.mxu0 %v687
    %701 = vmatprep.subr.mxu0 0.0
    %702 = vmatpush1.msra.mxu0 %v688
    %703 = vmatprep.subr.mxu0 0.0
    %704 = vmatpush1.msra.mxu0 %v689
    %705 = vmatprep.subr.mxu0 0.0
    %706 = vmatpush1.msra.mxu0 %v690
    %707 = vmatprep.subr.mxu0 0.0
    %708 = vmatpush1.msra.mxu0 %v691
    %709 = vmatprep.subr.mxu0 0.0
    %710 = vmatpush1.msra.mxu0 %v692
    %711 = vmatprep.subr.mxu0 0.0
    %712 = vmatpush1.msra.mxu0 0.0
    %713 = vmatprep.subr.mxu0 0.0
    %714 = vmatpush1.msra.mxu0 0.0
    %715 = vmatprep.subr.mxu0 0.0
    %716 = vmatpush1.msra.mxu0 0.0
    %717 = vmatprep.subr.mxu0 0.0
    %718 = vmatpush1.msra.mxu0 0.0
    %719 = vmatprep.subr.mxu0 0.0
    %720 = vmatpush1.msra.mxu0 0.0
    %721 = vmatprep.subr.mxu0 0.0
    %722 = vmatpush1.msra.mxu0 0.0
    %723 = vmatprep.subr.mxu0 0.0
    %724 = vmatpush1.msra.mxu0 0.0
    %725 = vmatprep.subr.mxu0 0.0
    %726 = vmatpush1.msra.mxu0 0.0
    %727 = vmatprep.subr.mxu0 0.0
    %728 = vmatpush1.msra.mxu0 0.0
    %729 = vmatprep.subr.mxu0 0.0
    %730 = vmatpush1.msra.mxu0 0.0
    %731 = vmatprep.subr.mxu0 0.0
    %732 = vmatpush1.msra.mxu0 0.0
    %733 = vmatprep.subr.mxu0 0.0
    %734 = vmatpush1.msra.mxu0 0.0
    %735 = vmatprep.subr.mxu0 0.0
    %736 = vmatpush1.msra.mxu0 0.0
    %737 = vmatprep.subr.mxu0 0.0
    %738 = vmatpush1.msra.mxu0 0.0
    %739 = vmatprep.subr.mxu0 0.0
    %740 = vmatpush1.msra.mxu0 0.0
    %741 = vmatprep.subr.mxu0 0.0
    %742 = vmatpush1.msra.mxu0 0.0
    %743 = vmatprep.subr.mxu0 0.0
    %744 = vmatpush1.msra.mxu0 0.0
    %745 = vmatprep.subr.mxu0 0.0
    %746 = vmatpush1.msra.mxu0 0.0
    %747 = vmatprep.subr.mxu0 0.0
    %748 = vmatpush1.msra.mxu0 0.0
    %749 = vmatprep.subr.mxu0 0.0
    %750 = vmatpush1.msra.mxu0 0.0
    %751 = vmatprep.subr.mxu0 0.0
    %752 = vmatpush1.msra.mxu0 0.0
    %753 = vmatprep.subr.mxu0 0.0
    %754 = vmatpush1.msra.mxu0 0.0
    %755 = vmatprep.subr.mxu0 0.0
    %756 = vmatpush1.msra.mxu0 0.0
    %757 = vmatprep.subr.mxu0 0.0
    %758 = vmatpush1.msra.mxu0 0.0
    %759 = vmatprep.subr.mxu0 0.0
    %760 = vmatpush1.msra.mxu0 0.0
    %761 = vmatprep.subr.mxu0 0.0
    %762 = vmatpush1.msra.mxu0 0.0
    %763 = vmatprep.mubr.f32.mxu0 0.0
    %764 = vmatmul.mubr.f32.gmra.mrb[0].mxu0 %v694
    %v765 = vpop.f32.mrb[0].mxu0
    %v766 = vadd.f32 0.0, %v765
    %v767 = vpop.f32.mrb[0].mxu0
    %768 = vmatprep.mubr.f32.mxu0 0.0
    %769 = vmatmul.mubr.f32.gmra.mrb[0].mxu0 %v697
    %v770 = vpop.f32.mrb[0].mxu0
    %v771 = vadd.f32 0.0, %v770
    %v772 = vpop.f32.mrb[0].mxu0
    %773 = vdwg.mxu0
    %v774 = vmul.f32 %v766, %v200
    %v775 = vmul.f32 %v771, %v202
    %v776 = vld [vmem:[%s11] sm:$0x1]
    %v777 = vld [vmem:[%s12] sm:$0x1]
    %v778 = vadd.f32 %v774, %v775
    %v779 = vrot.slane %v778, 4
    %v780 = vadd.f32 %v778, %v779
    %v781 = vrot.slane %v780, 2
    %v782 = vadd.f32 %v780, %v781
    %v783 = vrot.slane %v782, 1
    %v784 = vadd.f32 %v782, %v783
    %v785 = vrcp.pop 16.0
    %v786 = vmul.f32 %v784, %v785
    %v787 = vsub.f32 %v774, %v786
    %v788 = vsub.f32 %v775, %v786
    %v789 = vmul.f32 %v787, %v787
    %v790 = vmul.f32 %v788, %v788
    %v791 = vadd.f32 %v789, %v790
    %v792 = vrot.slane %v791, 4
    %v793 = vadd.f32 %v791, %v792
    %v794 = vrot.slane %v793, 2
    %v795 = vadd.f32 %v793, %v794
    %v796 = vrot.slane %v795, 1
    %v797 = vadd.f32 %v795, %v796
    %v798 = vmul.f32 %v797, %v785
    %v799 = vadd.f32 %v798, 1e-05
    %v800 = vrsqrt.pop %v799
    %v801 = vmul.f32 %v800, %v776
    %v802 = vlaneseq
    %v803 = vshrl.u32 %v802, 7
    %v804 = vsub.s32 0, %v803
    %v805 = vrot.slane %v801, %v804
    %v806 = vmul.f32 %v787, %v805
    %v807 = vmul.f32 %v788, %v805
    %v809 = vlaneseq
    %v810 = vshrl.u32 %v809, 7
    %v811 = vsub.s32 0, %v810
    %v812 = vrot.slane %v777, %v811
    %v814 = vadd.f32 %v806, %v812
    %v815 = vadd.f32 %v807, %v812
    %v816 = vld [vmem:[%s13] sm:$0x1]
    %v817 = vld [vmem:[%s14] sm:$0x1]
    %v818 = vadd.f32 %v203, %v204
    %v819 = vrot.slane %v818, 4
    %v820 = vadd.f32 %v818, %v819
    %v821 = vrot.slane %v820, 2
    %v822 = vadd.f32 %v820, %v821
    %v823 = vrot.slane %v822, 1
    %v824 = vadd.f32 %v822, %v823
    %v825 = vmul.f32 %v824, %v785
    %v826 = vsub.f32 %v203, %v825
    %v827 = vsub.f32 %v204, %v825
    %v828 = vmul.f32 %v826, %v826
    %v829 = vmul.f32 %v827, %v827
    %v830 = vadd.f32 %v828, %v829
    %v831 = vrot.slane %v830, 4
    %v832 = vadd.f32 %v830, %v831
    %v833 = vrot.slane %v832, 2
    %v834 = vadd.f32 %v832, %v833
    %v835 = vrot.slane %v834, 1
    %v836 = vadd.f32 %v834, %v835
    %v837 = vmul.f32 %v836, %v785
    %v838 = vadd.f32 %v837, 1e-05
    %v839 = vrsqrt.pop %v838
    %v840 = vmul.f32 %v839, %v816
    %v841 = vlaneseq
    %v842 = vshrl.u32 %v841, 7
    %v843 = vsub.s32 0, %v842
    %v844 = vrot.slane %v840, %v843
    %v845 = vmul.f32 %v826, %v844
    %v846 = vmul.f32 %v827, %v844
    %v848 = vlaneseq
    %v849 = vshrl.u32 %v848, 7
    %v850 = vsub.s32 0, %v849
    %v851 = vrot.slane %v817, %v850
    %v853 = vadd.f32 %v845, %v851
    %v854 = vadd.f32 %v846, %v851
    %v855 = vld [vmem:[#allocation10] sm:$0xff]
    %v856 = vld [vmem:[#allocation10 + $0x8] sm:$0xff]
    %v857 = vld [vmem:[#allocation10 + $0x10] sm:$0xff]
    %v858 = vld [vmem:[#allocation10 + $0x18] sm:$0xff]
    %v859 = vld [vmem:[#allocation10 + $0x20] sm:$0xff]
    %v860 = vld [vmem:[#allocation10 + $0x28] sm:$0xff]
    %v861 = vld [vmem:[#allocation10 + $0x30] sm:$0xff]
    %v862 = vld [vmem:[#allocation10 + $0x38] sm:$0xff]
    %v863 = vld [vmem:[#allocation10 + $0x40] sm:$0xff]
    %v864 = vld [vmem:[#allocation10 + $0x48] sm:$0xff]
    %v865 = vld [vmem:[#allocation10 + $0x50] sm:$0xff]
    %v866 = vld [vmem:[#allocation10 + $0x58] sm:$0xff]
    %v867 = vld [vmem:[#allocation10 + $0x60] sm:$0xff]
    %v868 = vld [vmem:[#allocation10 + $0x68] sm:$0xff]
    %v869 = vld [vmem:[#allocation10 + $0x70] sm:$0xff]
    %v870 = vld [vmem:[#allocation10 + $0x78] sm:$0xff]
    %v871 = vld [vmem:[#allocation11] sm:$0xff]
    %v872 = vld [vmem:[#allocation11 + $0x8] sm:$0xff]
    %v873 = vld [vmem:[#allocation11 + $0x10] sm:$0xff]
    %v874 = vld [vmem:[#allocation11 + $0x18] sm:$0xff]
    %v875 = vld [vmem:[#allocation11 + $0x20] sm:$0xff]
    %v876 = vld [vmem:[#allocation11 + $0x28] sm:$0xff]
    %v877 = vld [vmem:[#allocation11 + $0x30] sm:$0xff]
    %v878 = vld [vmem:[#allocation11 + $0x38] sm:$0xff]
    %v879 = vld [vmem:[#allocation11 + $0x40] sm:$0xff]
    %v880 = vld [vmem:[#allocation11 + $0x48] sm:$0xff]
    %v881 = vld [vmem:[#allocation11 + $0x50] sm:$0xff]
    %v882 = vld [vmem:[#allocation11 + $0x58] sm:$0xff]
    %v883 = vld [vmem:[#allocation11 + $0x60] sm:$0xff]
    %v884 = vld [vmem:[#allocation11 + $0x68] sm:$0xff]
    %v885 = vld [vmem:[#allocation11 + $0x70] sm:$0xff]
    %v886 = vld [vmem:[#allocation11 + $0x78] sm:$0xff]
    %887 = vmatprep.subr.mxu0 0.0
    %888 = vmatpush1.msra.mxu0 %v871
    %889 = vmatprep.subr.mxu0 0.0
    %890 = vmatpush1.msra.mxu0 %v872
    %891 = vmatprep.subr.mxu0 0.0
    %892 = vmatpush1.msra.mxu0 %v873
    %893 = vmatprep.subr.mxu0 0.0
    %894 = vmatpush1.msra.mxu0 %v874
    %895 = vmatprep.subr.mxu0 0.0
    %896 = vmatpush1.msra.mxu0 %v875
    %897 = vmatprep.subr.mxu0 0.0
    %898 = vmatpush1.msra.mxu0 %v876
    %899 = vmatprep.subr.mxu0 0.0
    %900 = vmatpush1.msra.mxu0 %v877
    %901 = vmatprep.subr.mxu0 0.0
    %902 = vmatpush1.msra.mxu0 %v878
    %903 = vmatprep.subr.mxu0 0.0
    %904 = vmatpush1.msra.mxu0 %v879
    %905 = vmatprep.subr.mxu0 0.0
    %906 = vmatpush1.msra.mxu0 %v880
    %907 = vmatprep.subr.mxu0 0.0
    %908 = vmatpush1.msra.mxu0 %v881
    %909 = vmatprep.subr.mxu0 0.0
    %910 = vmatpush1.msra.mxu0 %v882
    %911 = vmatprep.subr.mxu0 0.0
    %912 = vmatpush1.msra.mxu0 %v883
    %913 = vmatprep.subr.mxu0 0.0
    %914 = vmatpush1.msra.mxu0 %v884
    %915 = vmatprep.subr.mxu0 0.0
    %916 = vmatpush1.msra.mxu0 %v885
    %917 = vmatprep.subr.mxu0 0.0
    %918 = vmatpush1.msra.mxu0 %v886
    %919 = vmatprep.subr.mxu0 0.0
    %920 = vmatpush1.msra.mxu0 0.0
    %921 = vmatprep.subr.mxu0 0.0
    %922 = vmatpush1.msra.mxu0 0.0
    %923 = vmatprep.subr.mxu0 0.0
    %924 = vmatpush1.msra.mxu0 0.0
    %925 = vmatprep.subr.mxu0 0.0
    %926 = vmatpush1.msra.mxu0 0.0
    %927 = vmatprep.subr.mxu0 0.0
    %928 = vmatpush1.msra.mxu0 0.0
    %929 = vmatprep.subr.mxu0 0.0
    %930 = vmatpush1.msra.mxu0 0.0
    %931 = vmatprep.subr.mxu0 0.0
    %932 = vmatpush1.msra.mxu0 0.0
    %933 = vmatprep.subr.mxu0 0.0
    %934 = vmatpush1.msra.mxu0 0.0
    %935 = vmatprep.subr.mxu0 0.0
    %936 = vmatpush1.msra.mxu0 0.0
    %937 = vmatprep.subr.mxu0 0.0
    %938 = vmatpush1.msra.mxu0 0.0
    %939 = vmatprep.subr.mxu0 0.0
    %940 = vmatpush1.msra.mxu0 0.0
    %941 = vmatprep.subr.mxu0 0.0
    %942 = vmatpush1.msra.mxu0 0.0
    %943 = vmatprep.subr.mxu0 0.0
    %944 = vmatpush1.msra.mxu0 0.0
    %945 = vmatprep.subr.mxu0 0.0
    %946 = vmatpush1.msra.mxu0 0.0
    %947 = vmatprep.subr.mxu0 0.0
    %948 = vmatpush1.msra.mxu0 0.0
    %949 = vmatprep.subr.mxu0 0.0
    %950 = vmatpush1.msra.mxu0 0.0
    %951 = vmatprep.mubr.f32.mxu0 0.0
    %952 = vmatmul.mubr.f32.gmra.mrb[0].mxu0 %v853
    %v953 = vpop.f32.mrb[0].mxu0
    %v954 = vadd.f32 0.0, %v953
    %v955 = vpop.f32.mrb[0].mxu0
    %956 = vmatprep.mubr.f32.mxu0 0.0
    %957 = vmatmul.mubr.f32.gmra.mrb[0].mxu0 %v854
    %v958 = vpop.f32.mrb[0].mxu0
    %v959 = vadd.f32 0.0, %v958
    %v960 = vpop.f32.mrb[0].mxu0
    %961 = vdwg.mxu0
    %962 = vmatprep.subr.mxu0 0.0
    %963 = vmatpush1.msra.mxu0 %v855
    %964 = vmatprep.subr.mxu0 0.0
    %965 = vmatpush1.msra.mxu0 %v856
    %966 = vmatprep.subr.mxu0 0.0
    %967 = vmatpush1.msra.mxu0 %v857
    %968 = vmatprep.subr.mxu0 0.0
    %969 = vmatpush1.msra.mxu0 %v858
    %970 = vmatprep.subr.mxu0 0.0
    %971 = vmatpush1.msra.mxu0 %v859
    %972 = vmatprep.subr.mxu0 0.0
    %973 = vmatpush1.msra.mxu0 %v860
    %974 = vmatprep.subr.mxu0 0.0
    %975 = vmatpush1.msra.mxu0 %v861
    %976 = vmatprep.subr.mxu0 0.0
    %977 = vmatpush1.msra.mxu0 %v862
    %978 = vmatprep.subr.mxu0 0.0
    %979 = vmatpush1.msra.mxu0 %v863
    %980 = vmatprep.subr.mxu0 0.0
    %981 = vmatpush1.msra.mxu0 %v864
    %982 = vmatprep.subr.mxu0 0.0
    %983 = vmatpush1.msra.mxu0 %v865
    %984 = vmatprep.subr.mxu0 0.0
    %985 = vmatpush1.msra.mxu0 %v866
    %986 = vmatprep.subr.mxu0 0.0
    %987 = vmatpush1.msra.mxu0 %v867
    %988 = vmatprep.subr.mxu0 0.0
    %989 = vmatpush1.msra.mxu0 %v868
    %990 = vmatprep.subr.mxu0 0.0
    %991 = vmatpush1.msra.mxu0 %v869
    %992 = vmatprep.subr.mxu0 0.0
    %993 = vmatpush1.msra.mxu0 %v870
    %994 = vmatprep.subr.mxu0 0.0
    %995 = vmatpush1.msra.mxu0 0.0
    %996 = vmatprep.subr.mxu0 0.0
    %997 = vmatpush1.msra.mxu0 0.0
    %998 = vmatprep.subr.mxu0 0.0
    %999 = vmatpush1.msra.mxu0 0.0
    %1000 = vmatprep.subr.mxu0 0.0
    %1001 = vmatpush1.msra.mxu0 0.0
    %1002 = vmatprep.subr.mxu0 0.0
    %1003 = vmatpush1.msra.mxu0 0.0
    %1004 = vmatprep.subr.mxu0 0.0
    %1005 = vmatpush1.msra.mxu0 0.0
    %1006 = vmatprep.subr.mxu0 0.0
    %1007 = vmatpush1.msra.mxu0 0.0
    %1008 = vmatprep.subr.mxu0 0.0
    %1009 = vmatpush1.msra.mxu0 0.0
    %1010 = vmatprep.subr.mxu0 0.0
    %1011 = vmatpush1.msra.mxu0 0.0
    %1012 = vmatprep.subr.mxu0 0.0
    %1013 = vmatpush1.msra.mxu0 0.0
    %1014 = vmatprep.subr.mxu0 0.0
    %1015 = vmatpush1.msra.mxu0 0.0
    %1016 = vmatprep.subr.mxu0 0.0
    %1017 = vmatpush1.msra.mxu0 0.0
    %1018 = vmatprep.subr.mxu0 0.0
    %1019 = vmatpush1.msra.mxu0 0.0
    %1020 = vmatprep.subr.mxu0 0.0
    %1021 = vmatpush1.msra.mxu0 0.0
    %1022 = vmatprep.subr.mxu0 0.0
    %1023 = vmatpush1.msra.mxu0 0.0
    %1024 = vmatprep.subr.mxu0 0.0
    %1025 = vmatpush1.msra.mxu0 0.0
    %1026 = vmatprep.mubr.f32.mxu0 0.0
    %1027 = vmatmul.mubr.f32.gmra.mrb[0].mxu0 %v814
    %v1028 = vpop.f32.mrb[0].mxu0
    %v1029 = vadd.f32 %v954, %v1028
    %v1030 = vpop.f32.mrb[0].mxu0
    %1031 = vmatprep.mubr.f32.mxu0 0.0
    %1032 = vmatmul.mubr.f32.gmra.mrb[0].mxu0 %v815
    %v1033 = vpop.f32.mrb[0].mxu0
    %v1034 = vadd.f32 %v959, %v1033
    %v1035 = vpop.f32.mrb[0].mxu0
    %1036 = vdwg.mxu0
    %v1037 = vld [vmem:[%s17] sm:$0x1]
    %v1039 = vlaneseq
    %v1040 = vshrl.u32 %v1039, 7
    %v1041 = vsub.s32 0, %v1040
    %v1042 = vrot.slane %v1037, %v1041
    %v1044 = vadd.f32 %v1029, %v1042
    %v1045 = vadd.f32 %v1034, %v1042
    %v1046 = vmax.f32 %v1044, 0.0
    %v1047 = vmax.f32 %v1045, 0.0
    %1048 = vmatprep.subr.mxu0 0.0
    %1049 = vmatpush1.msra.mxu0 %v1046
    %1050 = vmatprep.subr.mxu0 0.0
    %1051 = vmatpush1.msra.mxu0 %v1047
    %1052 = vmatprep.subr.mxu0 0.0
    %1053 = vmatpush1.msra.mxu0 0.0
    %1054 = vmatprep.subr.mxu0 0.0
    %1055 = vmatpush1.msra.mxu0 0.0
    %1056 = vmatprep.subr.mxu0 0.0
    %1057 = vmatpush1.msra.mxu0 0.0
    %1058 = vmatprep.subr.mxu0 0.0
    %1059 = vmatpush1.msra.mxu0 0.0
    %1060 = vmatprep.subr.mxu0 0.0
    %1061 = vmatpush1.msra.mxu0 0.0
    %1062 = vmatprep.subr.mxu0 0.0
    %1063 = vmatpush1.msra.mxu0 0.0
    %1064 = vmatprep.subr.mxu0 0.0
    %1065 = vmatpush1.msra.mxu0 0.0
    %1066 = vmatprep.subr.mxu0 0.0
    %1067 = vmatpush1.msra.mxu0 0.0
    %1068 = vmatprep.subr.mxu0 0.0
    %1069 = vmatpush1.msra.mxu0 0.0
    %1070 = vmatprep.subr.mxu0 0.0
    %1071 = vmatpush1.msra.mxu0 0.0
    %1072 = vmatprep.subr.mxu0 0.0
    %1073 = vmatpush1.msra.mxu0 0.0
    %1074 = vmatprep.subr.mxu0 0.0
    %1075 = vmatpush1.msra.mxu0 0.0
    %1076 = vmatprep.subr.mxu0 0.0
    %1077 = vmatpush1.msra.mxu0 0.0
    %1078 = vmatprep.subr.mxu0 0.0
    %1079 = vmatpush1.msra.mxu0 0.0
    %1080 = vmatprep.subr.mxu0 0.0
    %1081 = vmatpush1.msra.mxu0 0.0
    %1082 = vmatprep.subr.mxu0 0.0
    %1083 = vmatpush1.msra.mxu0 0.0
    %1084 = vmatprep.subr.mxu0 0.0
    %1085 = vmatpush1.msra.mxu0 0.0
    %1086 = vmatprep.subr.mxu0 0.0
    %1087 = vmatpush1.msra.mxu0 0.0
    %1088 = vmatprep.subr.mxu0 0.0
    %1089 = vmatpush1.msra.mxu0 0.0
    %1090 = vmatprep.subr.mxu0 0.0
    %1091 = vmatpush1.msra.mxu0 0.0
    %1092 = vmatprep.subr.mxu0 0.0
    %1093 = vmatpush1.msra.mxu0 0.0
    %1094 = vmatprep.subr.mxu0 0.0
    %1095 = vmatpush1.msra.mxu0 0.0
    %1096 = vmatprep.subr.mxu0 0.0
    %1097 = vmatpush1.msra.mxu0 0.0
    %1098 = vmatprep.subr.mxu0 0.0
    %1099 = vmatpush1.msra.mxu0 0.0
    %1100 = vmatprep.subr.mxu0 0.0
    %1101 = vmatpush1.msra.mxu0 0.0
    %1102 = vmatprep.subr.mxu0 0.0
    %1103 = vmatpush1.msra.mxu0 0.0
    %1104 = vmatprep.subr.mxu0 0.0
    %1105 = vmatpush1.msra.mxu0 0.0
    %1106 = vmatprep.subr.mxu0 0.0
    %1107 = vmatpush1.msra.mxu0 0.0
    %1108 = vmatprep.subr.mxu0 0.0
    %1109 = vmatpush1.msra.mxu0 0.0
    %1110 = vmatprep.subr.mxu0 0.0
    %1111 = vmatpush1.msra.mxu0 0.0
    %1112 = vmatprep.mubr.f32.mxu0 0.0
    %1113 = vmatmul.mubr.f32.gmra.mrb[0].mxu0 %v213
    %v1114 = vpop.f32.mrb[0].mxu0
    %v1115 = vadd.f32 0.0, %v1114
    %v1116 = vpop.f32.mrb[0].mxu0
    %1117 = vmatprep.mubr.f32.mxu0 0.0
    %1118 = vmatmul.mubr.f32.gmra.mrb[0].mxu0 %v216
    %v1119 = vpop.f32.mrb[0].mxu0
    %v1120 = vadd.f32 0.0, %v1119
    %v1121 = vpop.f32.mrb[0].mxu0
    %1122 = vmatprep.mubr.f32.mxu0 0.0
    %1123 = vmatmul.mubr.f32.gmra.mrb[0].mxu0 %v219
    %v1124 = vpop.f32.mrb[0].mxu0
    %v1125 = vadd.f32 0.0, %v1124
    %v1126 = vpop.f32.mrb[0].mxu0
    %1127 = vmatprep.mubr.f32.mxu0 0.0
    %1128 = vmatmul.mubr.f32.gmra.mrb[0].mxu0 %v222
    %v1129 = vpop.f32.mrb[0].mxu0
    %v1130 = vadd.f32 0.0, %v1129
    %v1131 = vpop.f32.mrb[0].mxu0
    %1132 = vmatprep.mubr.f32.mxu0 0.0
    %1133 = vmatmul.mubr.f32.gmra.mrb[0].mxu0 %v225
    %v1134 = vpop.f32.mrb[0].mxu0
    %v1135 = vadd.f32 0.0, %v1134
    %v1136 = vpop.f32.mrb[0].mxu0
    %1137 = vmatprep.mubr.f32.mxu0 0.0
    %1138 = vmatmul.mubr.f32.gmra.mrb[0].mxu0 %v228
    %v1139 = vpop.f32.mrb[0].mxu0
    %v1140 = vadd.f32 0.0, %v1139
    %v1141 = vpop.f32.mrb[0].mxu0
    %1142 = vdwg.mxu0
    %s1143 = scalar_lea.vmem %s4, 1
    %v1144 = vld [vmem:[%s1143] sm:$0x1]
    %s1145 = scalar_lea.vmem %s5, 1
    %v1146 = vld [vmem:[%s1145] sm:$0x1]
    %v1147 = vmul.f32 %v365, %v1144
    %v1148 = vlaneseq
    %v1149 = vshrl.u32 %v1148, 7
    %v1150 = vsub.s32 0, %v1149
    %v1151 = vrot.slane %v1147, %v1150
    %v1152 = vmul.f32 %v340, %v1151
    %v1153 = vmul.f32 %v341, %v1151
    %v1154 = vmul.f32 %v342, %v1151
    %v1155 = vmul.f32 %v343, %v1151
    %v1156 = vmul.f32 %v344, %v1151
    %v1157 = vmul.f32 %v345, %v1151
    %v1159 = vlaneseq
    %v1160 = vshrl.u32 %v1159, 7
    %v1161 = vsub.s32 0, %v1160
    %v1162 = vrot.slane %v1146, %v1161
    %v1164 = vadd.f32 %v1152, %v1162
    %v1165 = vadd.f32 %v1153, %v1162
    %v1166 = vadd.f32 %v1154, %v1162
    %v1167 = vadd.f32 %v1155, %v1162
    %v1168 = vadd.f32 %v1156, %v1162
    %v1169 = vadd.f32 %v1157, %v1162
    %s1170 = scalar_lea.vmem %s6, 1
    %v1171 = vld [vmem:[%s1170] sm:$0x1]
    %s1172 = scalar_lea.vmem %s7, 1
    %v1173 = vld [vmem:[%s1172] sm:$0x1]
    %v1174 = vadd.f32 %v1115, %v1120
    %v1175 = vadd.f32 %v1174, %v1125
    %v1176 = vadd.f32 %v1175, %v1130
    %v1177 = vadd.f32 %v1176, %v1135
    %v1178 = vadd.f32 %v1177, %v1140
    %v1179 = vrot.slane %v1178, 4
    %v1180 = vadd.f32 %v1178, %v1179
    %v1181 = vrot.slane %v1180, 2
    %v1182 = vadd.f32 %v1180, %v1181
    %v1183 = vrot.slane %v1182, 1
    %v1184 = vadd.f32 %v1182, %v1183
    %v1185 = vmul.f32 %v1184, %v338
    %v1186 = vsub.f32 %v1115, %v1185
    %v1187 = vsub.f32 %v1120, %v1185
    %v1188 = vsub.f32 %v1125, %v1185
    %v1189 = vsub.f32 %v1130, %v1185
    %v1190 = vsub.f32 %v1135, %v1185
    %v1191 = vsub.f32 %v1140, %v1185
    %v1192 = vmul.f32 %v1186, %v1186
    %v1193 = vmul.f32 %v1187, %v1187
    %v1194 = vmul.f32 %v1188, %v1188
    %v1195 = vmul.f32 %v1189, %v1189
    %v1196 = vmul.f32 %v1190, %v1190
    %v1197 = vmul.f32 %v1191, %v1191
    %v1198 = vadd.f32 %v1192, %v1193
    %v1199 = vadd.f32 %v1198, %v1194
    %v1200 = vadd.f32 %v1199, %v1195
    %v1201 = vadd.f32 %v1200, %v1196
    %v1202 = vadd.f32 %v1201, %v1197
    %v1203 = vrot.slane %v1202, 4
    %v1204 = vadd.f32 %v1202, %v1203
    %v1205 = vrot.slane %v1204, 2
    %v1206 = vadd.f32 %v1204, %v1205
    %v1207 = vrot.slane %v1206, 1
    %v1208 = vadd.f32 %v1206, %v1207
    %v1209 = vmul.f32 %v1208, %v338
    %v1210 = vadd.f32 %v1209, 1e-05
    %v1211 = vrsqrt.pop %v1210
    %v1212 = vmul.f32 %v1211, %v1171
    %v1213 = vlaneseq
    %v1214 = vshrl.u32 %v1213, 7
    %v1215 = vsub.s32 0, %v1214
    %v1216 = vrot.slane %v1212, %v1215
    %v1217 = vmul.f32 %v1186, %v1216
    %v1218 = vmul.f32 %v1187, %v1216
    %v1219 = vmul.f32 %v1188, %v1216
    %v1220 = vmul.f32 %v1189, %v1216
    %v1221 = vmul.f32 %v1190, %v1216
    %v1222 = vmul.f32 %v1191, %v1216
    %v1224 = vlaneseq
    %v1225 = vshrl.u32 %v1224, 7
    %v1226 = vsub.s32 0, %v1225
    %v1227 = vrot.slane %v1173, %v1226
    %v1229 = vadd.f32 %v1217, %v1227
    %v1230 = vadd.f32 %v1218, %v1227
    %v1231 = vadd.f32 %v1219, %v1227
    %v1232 = vadd.f32 %v1220, %v1227
    %v1233 = vadd.f32 %v1221, %v1227
    %v1234 = vadd.f32 %v1222, %v1227
    %s1235 = scalar_lea.vmem [#allocation7], 128
    %v1236 = vld [vmem:[%s1235] sm:$0xff]
    %v1237 = vld [vmem:[%s1235 + $0x8] sm:$0xff]
    %v1238 = vld [vmem:[%s1235 + $0x10] sm:$0xff]
    %v1239 = vld [vmem:[%s1235 + $0x18] sm:$0xff]
    %v1240 = vld [vmem:[%s1235 + $0x20] sm:$0xff]
    %v1241 = vld [vmem:[%s1235 + $0x28] sm:$0xff]
    %v1242 = vld [vmem:[%s1235 + $0x30] sm:$0xff]
    %v1243 = vld [vmem:[%s1235 + $0x38] sm:$0xff]
    %v1244 = vld [vmem:[%s1235 + $0x40] sm:$0xff]
    %v1245 = vld [vmem:[%s1235 + $0x48] sm:$0xff]
    %v1246 = vld [vmem:[%s1235 + $0x50] sm:$0xff]
    %v1247 = vld [vmem:[%s1235 + $0x58] sm:$0xff]
    %v1248 = vld [vmem:[%s1235 + $0x60] sm:$0xff]
    %v1249 = vld [vmem:[%s1235 + $0x68] sm:$0xff]
    %v1250 = vld [vmem:[%s1235 + $0x70] sm:$0xff]
    %v1251 = vld [vmem:[%s1235 + $0x78] sm:$0xff]
    %s1252 = scalar_lea.vmem [#allocation8], 128
    %v1253 = vld [vmem:[%s1252] sm:$0xff]
    %v1254 = vld [vmem:[%s1252 + $0x8] sm:$0xff]
    %v1255 = vld [vmem:[%s1252 + $0x10] sm:$0xff]
    %v1256 = vld [vmem:[%s1252 + $0x18] sm:$0xff]
    %v1257 = vld [vmem:[%s1252 + $0x20] sm:$0xff]
    %v1258 = vld [vmem:[%s1252 + $0x28] sm:$0xff]
    %v1259 = vld [vmem:[%s1252 + $0x30] sm:$0xff]
    %v1260 = vld [vmem:[%s1252 + $0x38] sm:$0xff]
    %v1261 = vld [vmem:[%s1252 + $0x40] sm:$0xff]
    %v1262 = vld [vmem:[%s1252 + $0x48] sm:$0xff]
    %v1263 = vld [vmem:[%s1252 + $0x50] sm:$0xff]
    %v1264 = vld [vmem:[%s1252 + $0x58] sm:$0xff]
    %v1265 = vld [vmem:[%s1252 + $0x60] sm:$0xff]
    %v1266 = vld [vmem:[%s1252 + $0x68] sm:$0xff]
    %v1267 = vld [vmem:[%s1252 + $0x70] sm:$0xff]
    %v1268 = vld [vmem:[%s1252 + $0x78] sm:$0xff]
    %1269 = vmatprep.subr.mxu0 0.0
    %1270 = vmatpush1.msra.mxu0 %v1253
    %1271 = vmatprep.subr.mxu0 0.0
    %1272 = vmatpush1.msra.mxu0 %v1254
    %1273 = vmatprep.subr.mxu0 0.0
    %1274 = vmatpush1.msra.mxu0 %v1255
    %1275 = vmatprep.subr.mxu0 0.0
    %1276 = vmatpush1.msra.mxu0 %v1256
    %1277 = vmatprep.subr.mxu0 0.0
    %1278 = vmatpush1.msra.mxu0 %v1257
    %1279 = vmatprep.subr.mxu0 0.0
    %1280 = vmatpush1.msra.mxu0 %v1258
    %1281 = vmatprep.subr.mxu0 0.0
    %1282 = vmatpush1.msra.mxu0 %v1259
    %1283 = vmatprep.subr.mxu0 0.0
    %1284 = vmatpush1.msra.mxu0 %v1260
    %1285 = vmatprep.subr.mxu0 0.0
    %1286 = vmatpush1.msra.mxu0 %v1261
    %1287 = vmatprep.subr.mxu0 0.0
    %1288 = vmatpush1.msra.mxu0 %v1262
    %1289 = vmatprep.subr.mxu0 0.0
    %1290 = vmatpush1.msra.mxu0 %v1263
    %1291 = vmatprep.subr.mxu0 0.0
    %1292 = vmatpush1.msra.mxu0 %v1264
    %1293 = vmatprep.subr.mxu0 0.0
    %1294 = vmatpush1.msra.mxu0 %v1265
    %1295 = vmatprep.subr.mxu0 0.0
    %1296 = vmatpush1.msra.mxu0 %v1266
    %1297 = vmatprep.subr.mxu0 0.0
    %1298 = vmatpush1.msra.mxu0 %v1267
    %1299 = vmatprep.subr.mxu0 0.0
    %1300 = vmatpush1.msra.mxu0 %v1268
    %1301 = vmatprep.subr.mxu0 0.0
    %1302 = vmatpush1.msra.mxu0 0.0
    %1303 = vmatprep.subr.mxu0 0.0
    %1304 = vmatpush1.msra.mxu0 0.0
    %1305 = vmatprep.subr.mxu0 0.0
    %1306 = vmatpush1.msra.mxu0 0.0
    %1307 = vmatprep.subr.mxu0 0.0
    %1308 = vmatpush1.msra.mxu0 0.0
    %1309 = vmatprep.subr.mxu0 0.0
    %1310 = vmatpush1.msra.mxu0 0.0
    %1311 = vmatprep.subr.mxu0 0.0
    %1312 = vmatpush1.msra.mxu0 0.0
    %1313 = vmatprep.subr.mxu0 0.0
    %1314 = vmatpush1.msra.mxu0 0.0
    %1315 = vmatprep.subr.mxu0 0.0
    %1316 = vmatpush1.msra.mxu0 0.0
    %1317 = vmatprep.subr.mxu0 0.0
    %1318 = vmatpush1.msra.mxu0 0.0
    %1319 = vmatprep.subr.mxu0 0.0
    %1320 = vmatpush1.msra.mxu0 0.0
    %1321 = vmatprep.subr.mxu0 0.0
    %1322 = vmatpush1.msra.mxu0 0.0
    %1323 = vmatprep.subr.mxu0 0.0
    %1324 = vmatpush1.msra.mxu0 0.0
    %1325 = vmatprep.subr.mxu0 0.0
    %1326 = vmatpush1.msra.mxu0 0.0
    %1327 = vmatprep.subr.mxu0 0.0
    %1328 = vmatpush1.msra.mxu0 0.0
    %1329 = vmatprep.subr.mxu0 0.0
    %1330 = vmatpush1.msra.mxu0 0.0
    %1331 = vmatprep.subr.mxu0 0.0
    %1332 = vmatpush1.msra.mxu0 0.0
    %1333 = vmatprep.mubr.f32.mxu0 0.0
    %1334 = vmatmul.mubr.f32.gmra.mrb[0].mxu0 %v1229
    %v1335 = vpop.f32.mrb[0].mxu0
    %v1336 = vadd.f32 0.0, %v1335
    %v1337 = vpop.f32.mrb[0].mxu0
    %1338 = vmatprep.mubr.f32.mxu0 0.0
    %1339 = vmatmul.mubr.f32.gmra.mrb[0].mxu0 %v1230
    %v1340 = vpop.f32.mrb[0].mxu0
    %v1341 = vadd.f32 0.0, %v1340
    %v1342 = vpop.f32.mrb[0].mxu0
    %1343 = vmatprep.mubr.f32.mxu0 0.0
    %1344 = vmatmul.mubr.f32.gmra.mrb[0].mxu0 %v1231
    %v1345 = vpop.f32.mrb[0].mxu0
    %v1346 = vadd.f32 0.0, %v1345
    %v1347 = vpop.f32.mrb[0].mxu0
    %1348 = vmatprep.mubr.f32.mxu0 0.0
    %1349 = vmatmul.mubr.f32.gmra.mrb[0].mxu0 %v1232
    %v1350 = vpop.f32.mrb[0].mxu0
    %v1351 = vadd.f32 0.0, %v1350
    %v1352 = vpop.f32.mrb[0].mxu0
    %1353 = vmatprep.mubr.f32.mxu0 0.0
    %1354 = vmatmul.mubr.f32.gmra.mrb[0].mxu0 %v1233
    %v1355 = vpop.f32.mrb[0].mxu0
    %v1356 = vadd.f32 0.0, %v1355
    %v1357 = vpop.f32.mrb[0].mxu0
    %1358 = vmatprep.mubr.f32.mxu0 0.0
    %1359 = vmatmul.mubr.f32.gmra.mrb[0].mxu0 %v1234
    %v1360 = vpop.f32.mrb[0].mxu0
    %v1361 = vadd.f32 0.0, %v1360
    %v1362 = vpop.f32.mrb[0].mxu0
    %1363 = vdwg.mxu0
    %1364 = vmatprep.subr.mxu0 0.0
    %1365 = vmatpush1.msra.mxu0 %v1236
    %1366 = vmatprep.subr.mxu0 0.0
    %1367 = vmatpush1.msra.mxu0 %v1237
    %1368 = vmatprep.subr.mxu0 0.0
    %1369 = vmatpush1.msra.mxu0 %v1238
    %1370 = vmatprep.subr.mxu0 0.0
    %1371 = vmatpush1.msra.mxu0 %v1239
    %1372 = vmatprep.subr.mxu0 0.0
    %1373 = vmatpush1.msra.mxu0 %v1240
    %1374 = vmatprep.subr.mxu0 0.0
    %1375 = vmatpush1.msra.mxu0 %v1241
    %1376 = vmatprep.subr.mxu0 0.0
    %1377 = vmatpush1.msra.mxu0 %v1242
    %1378 = vmatprep.subr.mxu0 0.0
    %1379 = vmatpush1.msra.mxu0 %v1243
    %1380 = vmatprep.subr.mxu0 0.0
    %1381 = vmatpush1.msra.mxu0 %v1244
    %1382 = vmatprep.subr.mxu0 0.0
    %1383 = vmatpush1.msra.mxu0 %v1245
    %1384 = vmatprep.subr.mxu0 0.0
    %1385 = vmatpush1.msra.mxu0 %v1246
    %1386 = vmatprep.subr.mxu0 0.0
    %1387 = vmatpush1.msra.mxu0 %v1247
    %1388 = vmatprep.subr.mxu0 0.0
    %1389 = vmatpush1.msra.mxu0 %v1248
    %1390 = vmatprep.subr.mxu0 0.0
    %1391 = vmatpush1.msra.mxu0 %v1249
    %1392 = vmatprep.subr.mxu0 0.0
    %1393 = vmatpush1.msra.mxu0 %v1250
    %1394 = vmatprep.subr.mxu0 0.0
    %1395 = vmatpush1.msra.mxu0 %v1251
    %1396 = vmatprep.subr.mxu0 0.0
    %1397 = vmatpush1.msra.mxu0 0.0
    %1398 = vmatprep.subr.mxu0 0.0
    %1399 = vmatpush1.msra.mxu0 0.0
    %1400 = vmatprep.subr.mxu0 0.0
    %1401 = vmatpush1.msra.mxu0 0.0
    %1402 = vmatprep.subr.mxu0 0.0
    %1403 = vmatpush1.msra.mxu0 0.0
    %1404 = vmatprep.subr.mxu0 0.0
    %1405 = vmatpush1.msra.mxu0 0.0
    %1406 = vmatprep.subr.mxu0 0.0
    %1407 = vmatpush1.msra.mxu0 0.0
    %1408 = vmatprep.subr.mxu0 0.0
    %1409 = vmatpush1.msra.mxu0 0.0
    %1410 = vmatprep.subr.mxu0 0.0
    %1411 = vmatpush1.msra.mxu0 0.0
    %1412 = vmatprep.subr.mxu0 0.0
    %1413 = vmatpush1.msra.mxu0 0.0
    %1414 = vmatprep.subr.mxu0 0.0
    %1415 = vmatpush1.msra.mxu0 0.0
    %1416 = vmatprep.subr.mxu0 0.0
    %1417 = vmatpush1.msra.mxu0 0.0
    %1418 = vmatprep.subr.mxu0 0.0
    %1419 = vmatpush1.msra.mxu0 0.0
    %1420 = vmatprep.subr.mxu0 0.0
    %1421 = vmatpush1.msra.mxu0 0.0
    %1422 = vmatprep.subr.mxu0 0.0
    %1423 = vmatpush1.msra.mxu0 0.0
    %1424 = vmatprep.subr.mxu0 0.0
    %1425 = vmatpush1.msra.mxu0 0.0
    %1426 = vmatprep.subr.mxu0 0.0
    %1427 = vmatpush1.msra.mxu0 0.0
    %1428 = vmatprep.mubr.f32.mxu0 0.0
    %1429 = vmatmul.mubr.f32.gmra.mrb[0].mxu0 %v1164
    %v1430 = vpop.f32.mrb[0].mxu0
    %v1431 = vadd.f32 %v1336, %v1430
    %v1432 = vpop.f32.mrb[0].mxu0
    %1433 = vmatprep.mubr.f32.mxu0 0.0
    %1434 = vmatmul.mubr.f32.gmra.mrb[0].mxu0 %v1165
    %v1435 = vpop.f32.mrb[0].mxu0
    %v1436 = vadd.f32 %v1341, %v1435
    %v1437 = vpop.f32.mrb[0].mxu0
    %1438 = vmatprep.mubr.f32.mxu0 0.0
    %1439 = vmatmul.mubr.f32.gmra.mrb[0].mxu0 %v1166
    %v1440 = vpop.f32.mrb[0].mxu0
    %v1441 = vadd.f32 %v1346, %v1440
    %v1442 = vpop.f32.mrb[0].mxu0
    %1443 = vmatprep.mubr.f32.mxu0 0.0
    %1444 = vmatmul.mubr.f32.gmra.mrb[0].mxu0 %v1167
    %v1445 = vpop.f32.mrb[0].mxu0
    %v1446 = vadd.f32 %v1351, %v1445
    %v1447 = vpop.f32.mrb[0].mxu0
    %1448 = vmatprep.mubr.f32.mxu0 0.0
    %1449 = vmatmul.mubr.f32.gmra.mrb[0].mxu0 %v1168
    %v1450 = vpop.f32.mrb[0].mxu0
    %v1451 = vadd.f32 %v1356, %v1450
    %v1452 = vpop.f32.mrb[0].mxu0
    %1453 = vmatprep.mubr.f32.mxu0 0.0
    %1454 = vmatmul.mubr.f32.gmra.mrb[0].mxu0 %v1169
    %v1455 = vpop.f32.mrb[0].mxu0
    %v1456 = vadd.f32 %v1361, %v1455
    %v1457 = vpop.f32.mrb[0].mxu0
    %1458 = vdwg.mxu0
    %s1459 = scalar_lea.vmem %s10, 1
    %v1460 = vld [vmem:[%s1459] sm:$0x1]
    %v1462 = vlaneseq
    %v1463 = vshrl.u32 %v1462, 7
    %v1464 = vsub.s32 0, %v1463
    %v1465 = vrot.slane %v1460, %v1464
    %v1467 = vadd.f32 %v1431, %v1465
    %v1468 = vadd.f32 %v1436, %v1465
    %v1469 = vadd.f32 %v1441, %v1465
    %v1470 = vadd.f32 %v1446, %v1465
    %v1471 = vadd.f32 %v1451, %v1465
    %v1472 = vadd.f32 %v1456, %v1465
    %v1473 = vmax.f32 %v1467, 0.0
    %v1474 = vmax.f32 %v1468, 0.0
    %v1475 = vmax.f32 %v1469, 0.0
    %v1476 = vmax.f32 %v1470, 0.0
    %v1477 = vmax.f32 %v1471, 0.0
    %v1478 = vmax.f32 %v1472, 0.0
    %1479 = vmatprep.subr.mxu0 0.0
    %1480 = vmatpush1.msra.mxu0 %v1473
    %1481 = vmatprep.subr.mxu0 0.0
    %1482 = vmatpush1.msra.mxu0 %v1474
    %1483 = vmatprep.subr.mxu0 0.0
    %1484 = vmatpush1.msra.mxu0 %v1475
    %1485 = vmatprep.subr.mxu0 0.0
    %1486 = vmatpush1.msra.mxu0 %v1476
    %1487 = vmatprep.subr.mxu0 0.0
    %1488 = vmatpush1.msra.mxu0 %v1477
    %1489 = vmatprep.subr.mxu0 0.0
    %1490 = vmatpush1.msra.mxu0 %v1478
    %1491 = vmatprep.subr.mxu0 0.0
    %1492 = vmatpush1.msra.mxu0 0.0
    %1493 = vmatprep.subr.mxu0 0.0
    %1494 = vmatpush1.msra.mxu0 0.0
    %1495 = vmatprep.subr.mxu0 0.0
    %1496 = vmatpush1.msra.mxu0 0.0
    %1497 = vmatprep.subr.mxu0 0.0
    %1498 = vmatpush1.msra.mxu0 0.0
    %1499 = vmatprep.subr.mxu0 0.0
    %1500 = vmatpush1.msra.mxu0 0.0
    %1501 = vmatprep.subr.mxu0 0.0
    %1502 = vmatpush1.msra.mxu0 0.0
    %1503 = vmatprep.subr.mxu0 0.0
    %1504 = vmatpush1.msra.mxu0 0.0
    %1505 = vmatprep.subr.mxu0 0.0
    %1506 = vmatpush1.msra.mxu0 0.0
    %1507 = vmatprep.subr.mxu0 0.0
    %1508 = vmatpush1.msra.mxu0 0.0
    %1509 = vmatprep.subr.mxu0 0.0
    %1510 = vmatpush1.msra.mxu0 0.0
    %1511 = vmatprep.subr.mxu0 0.0
    %1512 = vmatpush1.msra.mxu0 0.0
    %1513 = vmatprep.subr.mxu0 0.0
    %1514 = vmatpush1.msra.mxu0 0.0
    %1515 = vmatprep.subr.mxu0 0.0
    %1516 = vmatpush1.msra.mxu0 0.0
    %1517 = vmatprep.subr.mxu0 0.0
    %1518 = vmatpush1.msra.mxu0 0.0
    %1519 = vmatprep.subr.mxu0 0.0
    %1520 = vmatpush1.msra.mxu0 0.0
    %1521 = vmatprep.subr.mxu0 0.0
    %1522 = vmatpush1.msra.mxu0 0.0
    %1523 = vmatprep.subr.mxu0 0.0
    %1524 = vmatpush1.msra.mxu0 0.0
    %1525 = vmatprep.subr.mxu0 0.0
    %1526 = vmatpush1.msra.mxu0 0.0
    %1527 = vmatprep.subr.mxu0 0.0
    %1528 = vmatpush1.msra.mxu0 0.0
    %1529 = vmatprep.subr.mxu0 0.0
    %1530 = vmatpush1.msra.mxu0 0.0
    %1531 = vmatprep.subr.mxu0 0.0
    %1532 = vmatpush1.msra.mxu0 0.0
    %1533 = vmatprep.subr.mxu0 0.0
    %1534 = vmatpush1.msra.mxu0 0.0
    %1535 = vmatprep.subr.mxu0 0.0
    %1536 = vmatpush1.msra.mxu0 0.0
    %1537 = vmatprep.subr.mxu0 0.0
    %1538 = vmatpush1.msra.mxu0 0.0
    %1539 = vmatprep.subr.mxu0 0.0
    %1540 = vmatpush1.msra.mxu0 0.0
    %1541 = vmatprep.subr.mxu0 0.0
    %1542 = vmatpush1.msra.mxu0 0.0
    %1543 = vmatprep.mubr.f32.mxu0 0.0
    %1544 = vmatmul.mubr.f32.gmra.mrb[0].mxu0 %v694
    %v1545 = vpop.f32.mrb[0].mxu0
    %v1546 = vadd.f32 0.0, %v1545
    %v1547 = vpop.f32.mrb[0].mxu0
    %1548 = vmatprep.mubr.f32.mxu0 0.0
    %1549 = vmatmul.mubr.f32.gmra.mrb[0].mxu0 %v697
    %v1550 = vpop.f32.mrb[0].mxu0
    %v1551 = vadd.f32 0.0, %v1550
    %v1552 = vpop.f32.mrb[0].mxu0
    %1553 = vdwg.mxu0
    %v1554 = vmul.f32 %v1546, %v200
    %v1555 = vmul.f32 %v1551, %v202
    %s1556 = scalar_lea.vmem %s11, 1
    %v1557 = vld [vmem:[%s1556] sm:$0x1]
    %s1558 = scalar_lea.vmem %s12, 1
    %v1559 = vld [vmem:[%s1558] sm:$0x1]
    %v1560 = vadd.f32 %v1554, %v1555
    %v1561 = vrot.slane %v1560, 4
    %v1562 = vadd.f32 %v1560, %v1561
    %v1563 = vrot.slane %v1562, 2
    %v1564 = vadd.f32 %v1562, %v1563
    %v1565 = vrot.slane %v1564, 1
    %v1566 = vadd.f32 %v1564, %v1565
    %v1567 = vmul.f32 %v1566, %v785
    %v1568 = vsub.f32 %v1554, %v1567
    %v1569 = vsub.f32 %v1555, %v1567
    %v1570 = vmul.f32 %v1568, %v1568
    %v1571 = vmul.f32 %v1569, %v1569
    %v1572 = vadd.f32 %v1570, %v1571
    %v1573 = vrot.slane %v1572, 4
    %v1574 = vadd.f32 %v1572, %v1573
    %v1575 = vrot.slane %v1574, 2
    %v1576 = vadd.f32 %v1574, %v1575
    %v1577 = vrot.slane %v1576, 1
    %v1578 = vadd.f32 %v1576, %v1577
    %v1579 = vmul.f32 %v1578, %v785
    %v1580 = vadd.f32 %v1579, 1e-05
    %v1581 = vrsqrt.pop %v1580
    %v1582 = vmul.f32 %v1581, %v1557
    %v1583 = vlaneseq
    %v1584 = vshrl.u32 %v1583, 7
    %v1585 = vsub.s32 0, %v1584
    %v1586 = vrot.slane %v1582, %v1585
    %v1587 = vmul.f32 %v1568, %v1586
    %v1588 = vmul.f32 %v1569, %v1586
    %v1590 = vlaneseq
    %v1591 = vshrl.u32 %v1590, 7
    %v1592 = vsub.s32 0, %v1591
    %v1593 = vrot.slane %v1559, %v1592
    %v1595 = vadd.f32 %v1587, %v1593
    %v1596 = vadd.f32 %v1588, %v1593
    %s1597 = scalar_lea.vmem %s13, 1
    %v1598 = vld [vmem:[%s1597] sm:$0x1]
    %s1599 = scalar_lea.vmem %s14, 1
    %v1600 = vld [vmem:[%s1599] sm:$0x1]
    %v1601 = vadd.f32 %v1046, %v1047
    %v1602 = vrot.slane %v1601, 4
    %v1603 = vadd.f32 %v1601, %v1602
    %v1604 = vrot.slane %v1603, 2
    %v1605 = vadd.f32 %v1603, %v1604
    %v1606 = vrot.slane %v1605, 1
    %v1607 = vadd.f32 %v1605, %v1606
    %v1608 = vmul.f32 %v1607, %v785
    %v1609 = vsub.f32 %v1046, %v1608
    %v1610 = vsub.f32 %v1047, %v1608
    %v1611 = vmul.f32 %v1609, %v1609
    %v1612 = vmul.f32 %v1610, %v1610
    %v1613 = vadd.f32 %v1611, %v1612
    %v1614 = vrot.slane %v1613, 4
    %v1615 = vadd.f32 %v1613, %v1614
    %v1616 = vrot.slane %v1615, 2
    %v1617 = vadd.f32 %v1615, %v1616
    %v1618 = vrot.slane %v1617, 1
    %v1619 = vadd.f32 %v1617, %v1618
    %v1620 = vmul.f32 %v1619, %v785
    %v1621 = vadd.f32 %v1620, 1e-05
    %v1622 = vrsqrt.pop %v1621
    %v1623 = vmul.f32 %v1622, %v1598
    %v1624 = vlaneseq
    %v1625 = vshrl.u32 %v1624, 7
    %v1626 = vsub.s32 0, %v1625
    %v1627 = vrot.slane %v1623, %v1626
    %v1628 = vmul.f32 %v1609, %v1627
    %v1629 = vmul.f32 %v1610, %v1627
    %v1631 = vlaneseq
    %v1632 = vshrl.u32 %v1631, 7
    %v1633 = vsub.s32 0, %v1632
    %v1634 = vrot.slane %v1600, %v1633
    %v1636 = vadd.f32 %v1628, %v1634
    %v1637 = vadd.f32 %v1629, %v1634
    %s1638 = scalar_lea.vmem [#allocation10], 128
    %v1639 = vld [vmem:[%s1638] sm:$0xff]
    %v1640 = vld [vmem:[%s1638 + $0x8] sm:$0xff]
    %v1641 = vld [vmem:[%s1638 + $0x10] sm:$0xff]
    %v1642 = vld [vmem:[%s1638 + $0x18] sm:$0xff]
    %v1643 = vld [vmem:[%s1638 + $0x20] sm:$0xff]
    %v1644 = vld [vmem:[%s1638 + $0x28] sm:$0xff]
    %v1645 = vld [vmem:[%s1638 + $0x30] sm:$0xff]
    %v1646 = vld [vmem:[%s1638 + $0x38] sm:$0xff]
    %v1647 = vld [vmem:[%s1638 + $0x40] sm:$0xff]
    %v1648 = vld [vmem:[%s1638 + $0x48] sm:$0xff]
    %v1649 = vld [vmem:[%s1638 + $0x50] sm:$0xff]
    %v1650 = vld [vmem:[%s1638 + $0x58] sm:$0xff]
    %v1651 = vld [vmem:[%s1638 + $0x60] sm:$0xff]
    %v1652 = vld [vmem:[%s1638 + $0x68] sm:$0xff]
    %v1653 = vld [vmem:[%s1638 + $0x70] sm:$0xff]
    %v1654 = vld [vmem:[%s1638 + $0x78] sm:$0xff]
    %s1655 = scalar_lea.vmem [#allocation11], 128
    %v1656 = vld [vmem:[%s1655] sm:$0xff]
    %v1657 = vld [vmem:[%s1655 + $0x8] sm:$0xff]
    %v1658 = vld [vmem:[%s1655 + $0x10] sm:$0xff]
    %v1659 = vld [vmem:[%s1655 + $0x18] sm:$0xff]
    %v1660 = vld [vmem:[%s1655 + $0x20] sm:$0xff]
    %v1661 = vld [vmem:[%s1655 + $0x28] sm:$0xff]
    %v1662 = vld [vmem:[%s1655 + $0x30] sm:$0xff]
    %v1663 = vld [vmem:[%s1655 + $0x38] sm:$0xff]
    %v1664 = vld [vmem:[%s1655 + $0x40] sm:$0xff]
    %v1665 = vld [vmem:[%s1655 + $0x48] sm:$0xff]
    %v1666 = vld [vmem:[%s1655 + $0x50] sm:$0xff]
    %v1667 = vld [vmem:[%s1655 + $0x58] sm:$0xff]
    %v1668 = vld [vmem:[%s1655 + $0x60] sm:$0xff]
    %v1669 = vld [vmem:[%s1655 + $0x68] sm:$0xff]
    %v1670 = vld [vmem:[%s1655 + $0x70] sm:$0xff]
    %v1671 = vld [vmem:[%s1655 + $0x78] sm:$0xff]
    %1672 = vmatprep.subr.mxu0 0.0
    %1673 = vmatpush1.msra.mxu0 %v1656
    %1674 = vmatprep.subr.mxu0 0.0
    %1675 = vmatpush1.msra.mxu0 %v1657
    %1676 = vmatprep.subr.mxu0 0.0
    %1677 = vmatpush1.msra.mxu0 %v1658
    %1678 = vmatprep.subr.mxu0 0.0
    %1679 = vmatpush1.msra.mxu0 %v1659
    %1680 = vmatprep.subr.mxu0 0.0
    %1681 = vmatpush1.msra.mxu0 %v1660
    %1682 = vmatprep.subr.mxu0 0.0
    %1683 = vmatpush1.msra.mxu0 %v1661
    %1684 = vmatprep.subr.mxu0 0.0
    %1685 = vmatpush1.msra.mxu0 %v1662
    %1686 = vmatprep.subr.mxu0 0.0
    %1687 = vmatpush1.msra.mxu0 %v1663
    %1688 = vmatprep.subr.mxu0 0.0
    %1689 = vmatpush1.msra.mxu0 %v1664
    %1690 = vmatprep.subr.mxu0 0.0
    %1691 = vmatpush1.msra.mxu0 %v1665
    %1692 = vmatprep.subr.mxu0 0.0
    %1693 = vmatpush1.msra.mxu0 %v1666
    %1694 = vmatprep.subr.mxu0 0.0
    %1695 = vmatpush1.msra.mxu0 %v1667
    %1696 = vmatprep.subr.mxu0 0.0
    %1697 = vmatpush1.msra.mxu0 %v1668
    %1698 = vmatprep.subr.mxu0 0.0
    %1699 = vmatpush1.msra.mxu0 %v1669
    %1700 = vmatprep.subr.mxu0 0.0
    %1701 = vmatpush1.msra.mxu0 %v1670
    %1702 = vmatprep.subr.mxu0 0.0
    %1703 = vmatpush1.msra.mxu0 %v1671
    %1704 = vmatprep.subr.mxu0 0.0
    %1705 = vmatpush1.msra.mxu0 0.0
    %1706 = vmatprep.subr.mxu0 0.0
    %1707 = vmatpush1.msra.mxu0 0.0
    %1708 = vmatprep.subr.mxu0 0.0
    %1709 = vmatpush1.msra.mxu0 0.0
    %1710 = vmatprep.subr.mxu0 0.0
    %1711 = vmatpush1.msra.mxu0 0.0
    %1712 = vmatprep.subr.mxu0 0.0
    %1713 = vmatpush1.msra.mxu0 0.0
    %1714 = vmatprep.subr.mxu0 0.0
    %1715 = vmatpush1.msra.mxu0 0.0
    %1716 = vmatprep.subr.mxu0 0.0
    %1717 = vmatpush1.msra.mxu0 0.0
    %1718 = vmatprep.subr.mxu0 0.0
    %1719 = vmatpush1.msra.mxu0 0.0
    %1720 = vmatprep.subr.mxu0 0.0
    %1721 = vmatpush1.msra.mxu0 0.0
    %1722 = vmatprep.subr.mxu0 0.0
    %1723 = vmatpush1.msra.mxu0 0.0
    %1724 = vmatprep.subr.mxu0 0.0
    %1725 = vmatpush1.msra.mxu0 0.0
    %1726 = vmatprep.subr.mxu0 0.0
    %1727 = vmatpush1.msra.mxu0 0.0
    %1728 = vmatprep.subr.mxu0 0.0
    %1729 = vmatpush1.msra.mxu0 0.0
    %1730 = vmatprep.subr.mxu0 0.0
    %1731 = vmatpush1.msra.mxu0 0.0
    %1732 = vmatprep.subr.mxu0 0.0
    %1733 = vmatpush1.msra.mxu0 0.0
    %1734 = vmatprep.subr.mxu0 0.0
    %1735 = vmatpush1.msra.mxu0 0.0
    %1736 = vmatprep.mubr.f32.mxu0 0.0
    %1737 = vmatmul.mubr.f32.gmra.mrb[0].mxu0 %v1636
    %v1738 = vpop.f32.mrb[0].mxu0
    %v1739 = vadd.f32 0.0, %v1738
    %v1740 = vpop.f32.mrb[0].mxu0
    %1741 = vmatprep.mubr.f32.mxu0 0.0
    %1742 = vmatmul.mubr.f32.gmra.mrb[0].mxu0 %v1637
    %v1743 = vpop.f32.mrb[0].mxu0
    %v1744 = vadd.f32 0.0, %v1743
    %v1745 = vpop.f32.mrb[0].mxu0
    %1746 = vdwg.mxu0
    %1747 = vmatprep.subr.mxu0 0.0
    %1748 = vmatpush1.msra.mxu0 %v1639
    %1749 = vmatprep.subr.mxu0 0.0
    %1750 = vmatpush1.msra.mxu0 %v1640
    %1751 = vmatprep.subr.mxu0 0.0
    %1752 = vmatpush1.msra.mxu0 %v1641
    %1753 = vmatprep.subr.mxu0 0.0
    %1754 = vmatpush1.msra.mxu0 %v1642
    %1755 = vmatprep.subr.mxu0 0.0
    %1756 = vmatpush1.msra.mxu0 %v1643
    %1757 = vmatprep.subr.mxu0 0.0
    %1758 = vmatpush1.msra.mxu0 %v1644
    %1759 = vmatprep.subr.mxu0 0.0
    %1760 = vmatpush1.msra.mxu0 %v1645
    %1761 = vmatprep.subr.mxu0 0.0
    %1762 = vmatpush1.msra.mxu0 %v1646
    %1763 = vmatprep.subr.mxu0 0.0
    %1764 = vmatpush1.msra.mxu0 %v1647
    %1765 = vmatprep.subr.mxu0 0.0
    %1766 = vmatpush1.msra.mxu0 %v1648
    %1767 = vmatprep.subr.mxu0 0.0
    %1768 = vmatpush1.msra.mxu0 %v1649
    %1769 = vmatprep.subr.mxu0 0.0
    %1770 = vmatpush1.msra.mxu0 %v1650
    %1771 = vmatprep.subr.mxu0 0.0
    %1772 = vmatpush1.msra.mxu0 %v1651
    %1773 = vmatprep.subr.mxu0 0.0
    %1774 = vmatpush1.msra.mxu0 %v1652
    %1775 = vmatprep.subr.mxu0 0.0
    %1776 = vmatpush1.msra.mxu0 %v1653
    %1777 = vmatprep.subr.mxu0 0.0
    %1778 = vmatpush1.msra.mxu0 %v1654
    %1779 = vmatprep.subr.mxu0 0.0
    %1780 = vmatpush1.msra.mxu0 0.0
    %1781 = vmatprep.subr.mxu0 0.0
    %1782 = vmatpush1.msra.mxu0 0.0
    %1783 = vmatprep.subr.mxu0 0.0
    %1784 = vmatpush1.msra.mxu0 0.0
    %1785 = vmatprep.subr.mxu0 0.0
    %1786 = vmatpush1.msra.mxu0 0.0
    %1787 = vmatprep.subr.mxu0 0.0
    %1788 = vmatpush1.msra.mxu0 0.0
    %1789 = vmatprep.subr.mxu0 0.0
    %1790 = vmatpush1.msra.mxu0 0.0
    %1791 = vmatprep.subr.mxu0 0.0
    %1792 = vmatpush1.msra.mxu0 0.0
    %1793 = vmatprep.subr.mxu0 0.0
    %1794 = vmatpush1.msra.mxu0 0.0
    %1795 = vmatprep.subr.mxu0 0.0
    %1796 = vmatpush1.msra.mxu0 0.0
    %1797 = vmatprep.subr.mxu0 0.0
    %1798 = vmatpush1.msra.mxu0 0.0
    %1799 = vmatprep.subr.mxu0 0.0
    %1800 = vmatpush1.msra.mxu0 0.0
    %1801 = vmatprep.subr.mxu0 0.0
    %1802 = vmatpush1.msra.mxu0 0.0
    %1803 = vmatprep.subr.mxu0 0.0
    %1804 = vmatpush1.msra.mxu0 0.0
    %1805 = vmatprep.subr.mxu0 0.0
    %1806 = vmatpush1.msra.mxu0 0.0
    %1807 = vmatprep.subr.mxu0 0.0
    %1808 = vmatpush1.msra.mxu0 0.0
    %1809 = vmatprep.subr.mxu0 0.0
    %1810 = vmatpush1.msra.mxu0 0.0
    %1811 = vmatprep.mubr.f32.mxu0 0.0
    %1812 = vmatmul.mubr.f32.gmra.mrb[0].mxu0 %v1595
    %v1813 = vpop.f32.mrb[0].mxu0
    %v1814 = vadd.f32 %v1739, %v1813
    %v1815 = vpop.f32.mrb[0].mxu0
    %1816 = vmatprep.mubr.f32.mxu0 0.0
    %1817 = vmatmul.mubr.f32.gmra.mrb[0].mxu0 %v1596
    %v1818 = vpop.f32.mrb[0].mxu0
    %v1819 = vadd.f32 %v1744, %v1818
    %v1820 = vpop.f32.mrb[0].mxu0
    %1821 = vdwg.mxu0
    %s1822 = scalar_lea.vmem %s17, 1
    %v1823 = vld [vmem:[%s1822] sm:$0x1]
    %v1825 = vlaneseq
    %v1826 = vshrl.u32 %v1825, 7
    %v1827 = vsub.s32 0, %v1826
    %v1828 = vrot.slane %v1823, %v1827
    %v1830 = vadd.f32 %v1814, %v1828
    %v1831 = vadd.f32 %v1819, %v1828
    %v1832 = vmax.f32 %v1830, 0.0
    %v1833 = vmax.f32 %v1831, 0.0
    %1834 = vmatprep.subr.mxu0 0.0
    %1835 = vmatpush1.msra.mxu0 %v1832
    %1836 = vmatprep.subr.mxu0 0.0
    %1837 = vmatpush1.msra.mxu0 %v1833
    %1838 = vmatprep.subr.mxu0 0.0
    %1839 = vmatpush1.msra.mxu0 0.0
    %1840 = vmatprep.subr.mxu0 0.0
    %1841 = vmatpush1.msra.mxu0 0.0
    %1842 = vmatprep.subr.mxu0 0.0
    %1843 = vmatpush1.msra.mxu0 0.0
    %1844 = vmatprep.subr.mxu0 0.0
    %1845 = vmatpush1.msra.mxu0 0.0
    %1846 = vmatprep.subr.mxu0 0.0
    %1847 = vmatpush1.msra.mxu0 0.0
    %1848 = vmatprep.subr.mxu0 0.0
    %1849 = vmatpush1.msra.mxu0 0.0
    %1850 = vmatprep.subr.mxu0 0.0
    %1851 = vmatpush1.msra.mxu0 0.0
    %1852 = vmatprep.subr.mxu0 0.0
    %1853 = vmatpush1.msra.mxu0 0.0
    %1854 = vmatprep.subr.mxu0 0.0
    %1855 = vmatpush1.msra.mxu0 0.0
    %1856 = vmatprep.subr.mxu0 0.0
    %1857 = vmatpush1.msra.mxu0 0.0
    %1858 = vmatprep.subr.mxu0 0.0
    %1859 = vmatpush1.msra.mxu0 0.0
    %1860 = vmatprep.subr.mxu0 0.0
    %1861 = vmatpush1.msra.mxu0 0.0
    %1862 = vmatprep.subr.mxu0 0.0
    %1863 = vmatpush1.msra.mxu0 0.0
    %1864 = vmatprep.subr.mxu0 0.0
    %1865 = vmatpush1.msra.mxu0 0.0
    %1866 = vmatprep.subr.mxu0 0.0
    %1867 = vmatpush1.msra.mxu0 0.0
    %1868 = vmatprep.subr.mxu0 0.0
    %1869 = vmatpush1.msra.mxu0 0.0
    %1870 = vmatprep.subr.mxu0 0.0
    %1871 = vmatpush1.msra.mxu0 0.0
    %1872 = vmatprep.subr.mxu0 0.0
    %1873 = vmatpush1.msra.mxu0 0.0
    %1874 = vmatprep.subr.mxu0 0.0
    %1875 = vmatpush1.msra.mxu0 0.0
    %1876 = vmatprep.subr.mxu0 0.0
    %1877 = vmatpush1.msra.mxu0 0.0
    %1878 = vmatprep.subr.mxu0 0.0
    %1879 = vmatpush1.msra.mxu0 0.0
    %1880 = vmatprep.subr.mxu0 0.0
    %1881 = vmatpush1.msra.mxu0 0.0
    %1882 = vmatprep.subr.mxu0 0.0
    %1883 = vmatpush1.msra.mxu0 0.0
    %1884 = vmatprep.subr.mxu0 0.0
    %1885 = vmatpush1.msra.mxu0 0.0
    %1886 = vmatprep.subr.mxu0 0.0
    %1887 = vmatpush1.msra.mxu0 0.0
    %1888 = vmatprep.subr.mxu0 0.0
    %1889 = vmatpush1.msra.mxu0 0.0
    %1890 = vmatprep.subr.mxu0 0.0
    %1891 = vmatpush1.msra.mxu0 0.0
    %1892 = vmatprep.subr.mxu0 0.0
    %1893 = vmatpush1.msra.mxu0 0.0
    %1894 = vmatprep.subr.mxu0 0.0
    %1895 = vmatpush1.msra.mxu0 0.0
    %1896 = vmatprep.subr.mxu0 0.0
    %1897 = vmatpush1.msra.mxu0 0.0
    %1898 = vmatprep.mubr.f32.mxu0 0.0
    %1899 = vmatmul.mubr.f32.gmra.mrb[0].mxu0 %v213
    %v1900 = vpop.f32.mrb[0].mxu0
    %v1901 = vadd.f32 0.0, %v1900
    %v1902 = vpop.f32.mrb[0].mxu0
    %1903 = vmatprep.mubr.f32.mxu0 0.0
    %1904 = vmatmul.mubr.f32.gmra.mrb[0].mxu0 %v216
    %v1905 = vpop.f32.mrb[0].mxu0
    %v1906 = vadd.f32 0.0, %v1905
    %v1907 = vpop.f32.mrb[0].mxu0
    %1908 = vmatprep.mubr.f32.mxu0 0.0
    %1909 = vmatmul.mubr.f32.gmra.mrb[0].mxu0 %v219
    %v1910 = vpop.f32.mrb[0].mxu0
    %v1911 = vadd.f32 0.0, %v1910
    %v1912 = vpop.f32.mrb[0].mxu0
    %1913 = vmatprep.mubr.f32.mxu0 0.0
    %1914 = vmatmul.mubr.f32.gmra.mrb[0].mxu0 %v222
    %v1915 = vpop.f32.mrb[0].mxu0
    %v1916 = vadd.f32 0.0, %v1915
    %v1917 = vpop.f32.mrb[0].mxu0
    %1918 = vmatprep.mubr.f32.mxu0 0.0
    %1919 = vmatmul.mubr.f32.gmra.mrb[0].mxu0 %v225
    %v1920 = vpop.f32.mrb[0].mxu0
    %v1921 = vadd.f32 0.0, %v1920
    %v1922 = vpop.f32.mrb[0].mxu0
    %1923 = vmatprep.mubr.f32.mxu0 0.0
    %1924 = vmatmul.mubr.f32.gmra.mrb[0].mxu0 %v228
    %v1925 = vpop.f32.mrb[0].mxu0
    %v1926 = vadd.f32 0.0, %v1925
    %v1927 = vpop.f32.mrb[0].mxu0
    %1928 = vdwg.mxu0
    %s1929 = scalar_lea.vmem %s4, 2
    %v1930 = vld [vmem:[%s1929] sm:$0x1]
    %s1931 = scalar_lea.vmem %s5, 2
    %v1932 = vld [vmem:[%s1931] sm:$0x1]
    %v1933 = vmul.f32 %v365, %v1930
    %v1934 = vlaneseq
    %v1935 = vshrl.u32 %v1934, 7
    %v1936 = vsub.s32 0, %v1935
    %v1937 = vrot.slane %v1933, %v1936
    %v1938 = vmul.f32 %v340, %v1937
    %v1939 = vmul.f32 %v341, %v1937
    %v1940 = vmul.f32 %v342, %v1937
    %v1941 = vmul.f32 %v343, %v1937
    %v1942 = vmul.f32 %v344, %v1937
    %v1943 = vmul.f32 %v345, %v1937
    %v1945 = vlaneseq
    %v1946 = vshrl.u32 %v1945, 7
    %v1947 = vsub.s32 0, %v1946
    %v1948 = vrot.slane %v1932, %v1947
    %v1950 = vadd.f32 %v1938, %v1948
    %v1951 = vadd.f32 %v1939, %v1948
    %v1952 = vadd.f32 %v1940, %v1948
    %v1953 = vadd.f32 %v1941, %v1948
    %v1954 = vadd.f32 %v1942, %v1948
    %v1955 = vadd.f32 %v1943, %v1948
    %s1956 = scalar_lea.vmem %s6, 2
    %v1957 = vld [vmem:[%s1956] sm:$0x1]
    %s1958 = scalar_lea.vmem %s7, 2
    %v1959 = vld [vmem:[%s1958] sm:$0x1]
    %v1960 = vadd.f32 %v1901, %v1906
    %v1961 = vadd.f32 %v1960, %v1911
    %v1962 = vadd.f32 %v1961, %v1916
    %v1963 = vadd.f32 %v1962, %v1921
    %v1964 = vadd.f32 %v1963, %v1926
    %v1965 = vrot.slane %v1964, 4
    %v1966 = vadd.f32 %v1964, %v1965
    %v1967 = vrot.slane %v1966, 2
    %v1968 = vadd.f32 %v1966, %v1967
    %v1969 = vrot.slane %v1968, 1
    %v1970 = vadd.f32 %v1968, %v1969
    %v1971 = vmul.f32 %v1970, %v338
    %v1972 = vsub.f32 %v1901, %v1971
    %v1973 = vsub.f32 %v1906, %v1971
    %v1974 = vsub.f32 %v1911, %v1971
    %v1975 = vsub.f32 %v1916, %v1971
    %v1976 = vsub.f32 %v1921, %v1971
    %v1977 = vsub.f32 %v1926, %v1971
    %v1978 = vmul.f32 %v1972, %v1972
    %v1979 = vmul.f32 %v1973, %v1973
    %v1980 = vmul.f32 %v1974, %v1974
    %v1981 = vmul.f32 %v1975, %v1975
    %v1982 = vmul.f32 %v1976, %v1976
    %v1983 = vmul.f32 %v1977, %v1977
    %v1984 = vadd.f32 %v1978, %v1979
    %v1985 = vadd.f32 %v1984, %v1980
    %v1986 = vadd.f32 %v1985, %v1981
    %v1987 = vadd.f32 %v1986, %v1982
    %v1988 = vadd.f32 %v1987, %v1983
    %v1989 = vrot.slane %v1988, 4
    %v1990 = vadd.f32 %v1988, %v1989
    %v1991 = vrot.slane %v1990, 2
    %v1992 = vadd.f32 %v1990, %v1991
    %v1993 = vrot.slane %v1992, 1
    %v1994 = vadd.f32 %v1992, %v1993
    %v1995 = vmul.f32 %v1994, %v338
    %v1996 = vadd.f32 %v1995, 1e-05
    %v1997 = vrsqrt.pop %v1996
    %v1998 = vmul.f32 %v1997, %v1957
    %v1999 = vlaneseq
    %v2000 = vshrl.u32 %v1999, 7
    %v2001 = vsub.s32 0, %v2000
    %v2002 = vrot.slane %v1998, %v2001
    %v2003 = vmul.f32 %v1972, %v2002
    %v2004 = vmul.f32 %v1973, %v2002
    %v2005 = vmul.f32 %v1974, %v2002
    %v2006 = vmul.f32 %v1975, %v2002
    %v2007 = vmul.f32 %v1976, %v2002
    %v2008 = vmul.f32 %v1977, %v2002
    %v2010 = vlaneseq
    %v2011 = vshrl.u32 %v2010, 7
    %v2012 = vsub.s32 0, %v2011
    %v2013 = vrot.slane %v1959, %v2012
    %v2015 = vadd.f32 %v2003, %v2013
    %v2016 = vadd.f32 %v2004, %v2013
    %v2017 = vadd.f32 %v2005, %v2013
    %v2018 = vadd.f32 %v2006, %v2013
    %v2019 = vadd.f32 %v2007, %v2013
    %v2020 = vadd.f32 %v2008, %v2013
    %s2021 = scalar_lea.vmem [#allocation7], 256
    %v2022 = vld [vmem:[%s2021] sm:$0xff]
    %v2023 = vld [vmem:[%s2021 + $0x8] sm:$0xff]
    %v2024 = vld [vmem:[%s2021 + $0x10] sm:$0xff]
    %v2025 = vld [vmem:[%s2021 + $0x18] sm:$0xff]
    %v2026 = vld [vmem:[%s2021 + $0x20] sm:$0xff]
    %v2027 = vld [vmem:[%s2021 + $0x28] sm:$0xff]
    %v2028 = vld [vmem:[%s2021 + $0x30] sm:$0xff]
    %v2029 = vld [vmem:[%s2021 + $0x38] sm:$0xff]
    %v2030 = vld [vmem:[%s2021 + $0x40] sm:$0xff]
    %v2031 = vld [vmem:[%s2021 + $0x48] sm:$0xff]
    %v2032 = vld [vmem:[%s2021 + $0x50] sm:$0xff]
    %v2033 = vld [vmem:[%s2021 + $0x58] sm:$0xff]
    %v2034 = vld [vmem:[%s2021 + $0x60] sm:$0xff]
    %v2035 = vld [vmem:[%s2021 + $0x68] sm:$0xff]
    %v2036 = vld [vmem:[%s2021 + $0x70] sm:$0xff]
    %v2037 = vld [vmem:[%s2021 + $0x78] sm:$0xff]
    %s2038 = scalar_lea.vmem [#allocation8], 256
    %v2039 = vld [vmem:[%s2038] sm:$0xff]
    %v2040 = vld [vmem:[%s2038 + $0x8] sm:$0xff]
    %v2041 = vld [vmem:[%s2038 + $0x10] sm:$0xff]
    %v2042 = vld [vmem:[%s2038 + $0x18] sm:$0xff]
    %v2043 = vld [vmem:[%s2038 + $0x20] sm:$0xff]
    %v2044 = vld [vmem:[%s2038 + $0x28] sm:$0xff]
    %v2045 = vld [vmem:[%s2038 + $0x30] sm:$0xff]
    %v2046 = vld [vmem:[%s2038 + $0x38] sm:$0xff]
    %v2047 = vld [vmem:[%s2038 + $0x40] sm:$0xff]
    %v2048 = vld [vmem:[%s2038 + $0x48] sm:$0xff]
    %v2049 = vld [vmem:[%s2038 + $0x50] sm:$0xff]
    %v2050 = vld [vmem:[%s2038 + $0x58] sm:$0xff]
    %v2051 = vld [vmem:[%s2038 + $0x60] sm:$0xff]
    %v2052 = vld [vmem:[%s2038 + $0x68] sm:$0xff]
    %v2053 = vld [vmem:[%s2038 + $0x70] sm:$0xff]
    %v2054 = vld [vmem:[%s2038 + $0x78] sm:$0xff]
    %2055 = vmatprep.subr.mxu0 0.0
    %2056 = vmatpush1.msra.mxu0 %v2039
    %2057 = vmatprep.subr.mxu0 0.0
    %2058 = vmatpush1.msra.mxu0 %v2040
    %2059 = vmatprep.subr.mxu0 0.0
    %2060 = vmatpush1.msra.mxu0 %v2041
    %2061 = vmatprep.subr.mxu0 0.0
    %2062 = vmatpush1.msra.mxu0 %v2042
    %2063 = vmatprep.subr.mxu0 0.0
    %2064 = vmatpush1.msra.mxu0 %v2043
    %2065 = vmatprep.subr.mxu0 0.0
    %2066 = vmatpush1.msra.mxu0 %v2044
    %2067 = vmatprep.subr.mxu0 0.0
    %2068 = vmatpush1.msra.mxu0 %v2045
    %2069 = vmatprep.subr.mxu0 0.0
    %2070 = vmatpush1.msra.mxu0 %v2046
    %2071 = vmatprep.subr.mxu0 0.0
    %2072 = vmatpush1.msra.mxu0 %v2047
    %2073 = vmatprep.subr.mxu0 0.0
    %2074 = vmatpush1.msra.mxu0 %v2048
    %2075 = vmatprep.subr.mxu0 0.0
    %2076 = vmatpush1.msra.mxu0 %v2049
    %2077 = vmatprep.subr.mxu0 0.0
    %2078 = vmatpush1.msra.mxu0 %v2050
    %2079 = vmatprep.subr.mxu0 0.0
    %2080 = vmatpush1.msra.mxu0 %v2051
    %2081 = vmatprep.subr.mxu0 0.0
    %2082 = vmatpush1.msra.mxu0 %v2052
    %2083 = vmatprep.subr.mxu0 0.0
    %2084 = vmatpush1.msra.mxu0 %v2053
    %2085 = vmatprep.subr.mxu0 0.0
    %2086 = vmatpush1.msra.mxu0 %v2054
    %2087 = vmatprep.subr.mxu0 0.0
    %2088 = vmatpush1.msra.mxu0 0.0
    %2089 = vmatprep.subr.mxu0 0.0
    %2090 = vmatpush1.msra.mxu0 0.0
    %2091 = vmatprep.subr.mxu0 0.0
    %2092 = vmatpush1.msra.mxu0 0.0
    %2093 = vmatprep.subr.mxu0 0.0
    %2094 = vmatpush1.msra.mxu0 0.0
    %2095 = vmatprep.subr.mxu0 0.0
    %2096 = vmatpush1.msra.mxu0 0.0
    %2097 = vmatprep.subr.mxu0 0.0
    %2098 = vmatpush1.msra.mxu0 0.0
    %2099 = vmatprep.subr.mxu0 0.0
    %2100 = vmatpush1.msra.mxu0 0.0
    %2101 = vmatprep.subr.mxu0 0.0
    %2102 = vmatpush1.msra.mxu0 0.0
    %2103 = vmatprep.subr.mxu0 0.0
    %2104 = vmatpush1.msra.mxu0 0.0
    %2105 = vmatprep.subr.mxu0 0.0
    %2106 = vmatpush1.msra.mxu0 0.0
    %2107 = vmatprep.subr.mxu0 0.0
    %2108 = vmatpush1.msra.mxu0 0.0
    %2109 = vmatprep.subr.mxu0 0.0
    %2110 = vmatpush1.msra.mxu0 0.0
    %2111 = vmatprep.subr.mxu0 0.0
    %2112 = vmatpush1.msra.mxu0 0.0
    %2113 = vmatprep.subr.mxu0 0.0
    %2114 = vmatpush1.msra.mxu0 0.0
    %2115 = vmatprep.subr.mxu0 0.0
    %2116 = vmatpush1.msra.mxu0 0.0
    %2117 = vmatprep.subr.mxu0 0.0
    %2118 = vmatpush1.msra.mxu0 0.0
    %2119 = vmatprep.mubr.f32.mxu0 0.0
    %2120 = vmatmul.mubr.f32.gmra.mrb[0].mxu0 %v2015
    %v2121 = vpop.f32.mrb[0].mxu0
    %v2122 = vadd.f32 0.0, %v2121
    %v2123 = vpop.f32.mrb[0].mxu0
    %2124 = vmatprep.mubr.f32.mxu0 0.0
    %2125 = vmatmul.mubr.f32.gmra.mrb[0].mxu0 %v2016
    %v2126 = vpop.f32.mrb[0].mxu0
    %v2127 = vadd.f32 0.0, %v2126
    %v2128 = vpop.f32.mrb[0].mxu0
    %2129 = vmatprep.mubr.f32.mxu0 0.0
    %2130 = vmatmul.mubr.f32.gmra.mrb[0].mxu0 %v2017
    %v2131 = vpop.f32.mrb[0].mxu0
    %v2132 = vadd.f32 0.0, %v2131
    %v2133 = vpop.f32.mrb[0].mxu0
    %2134 = vmatprep.mubr.f32.mxu0 0.0
    %2135 = vmatmul.mubr.f32.gmra.mrb[0].mxu0 %v2018
    %v2136 = vpop.f32.mrb[0].mxu0
    %v2137 = vadd.f32 0.0, %v2136
    %v2138 = vpop.f32.mrb[0].mxu0
    %2139 = vmatprep.mubr.f32.mxu0 0.0
    %2140 = vmatmul.mubr.f32.gmra.mrb[0].mxu0 %v2019
    %v2141 = vpop.f32.mrb[0].mxu0
    %v2142 = vadd.f32 0.0, %v2141
    %v2143 = vpop.f32.mrb[0].mxu0
    %2144 = vmatprep.mubr.f32.mxu0 0.0
    %2145 = vmatmul.mubr.f32.gmra.mrb[0].mxu0 %v2020
    %v2146 = vpop.f32.mrb[0].mxu0
    %v2147 = vadd.f32 0.0, %v2146
    %v2148 = vpop.f32.mrb[0].mxu0
    %2149 = vdwg.mxu0
    %2150 = vmatprep.subr.mxu0 0.0
    %2151 = vmatpush1.msra.mxu0 %v2022
    %2152 = vmatprep.subr.mxu0 0.0
    %2153 = vmatpush1.msra.mxu0 %v2023
    %2154 = vmatprep.subr.mxu0 0.0
    %2155 = vmatpush1.msra.mxu0 %v2024
    %2156 = vmatprep.subr.mxu0 0.0
    %2157 = vmatpush1.msra.mxu0 %v2025
    %2158 = vmatprep.subr.mxu0 0.0
    %2159 = vmatpush1.msra.mxu0 %v2026
    %2160 = vmatprep.subr.mxu0 0.0
    %2161 = vmatpush1.msra.mxu0 %v2027
    %2162 = vmatprep.subr.mxu0 0.0
    %2163 = vmatpush1.msra.mxu0 %v2028
    %2164 = vmatprep.subr.mxu0 0.0
    %2165 = vmatpush1.msra.mxu0 %v2029
    %2166 = vmatprep.subr.mxu0 0.0
    %2167 = vmatpush1.msra.mxu0 %v2030
    %2168 = vmatprep.subr.mxu0 0.0
    %2169 = vmatpush1.msra.mxu0 %v2031
    %2170 = vmatprep.subr.mxu0 0.0
    %2171 = vmatpush1.msra.mxu0 %v2032
    %2172 = vmatprep.subr.mxu0 0.0
    %2173 = vmatpush1.msra.mxu0 %v2033
    %2174 = vmatprep.subr.mxu0 0.0
    %2175 = vmatpush1.msra.mxu0 %v2034
    %2176 = vmatprep.subr.mxu0 0.0
    %2177 = vmatpush1.msra.mxu0 %v2035
    %2178 = vmatprep.subr.mxu0 0.0
    %2179 = vmatpush1.msra.mxu0 %v2036
    %2180 = vmatprep.subr.mxu0 0.0
    %2181 = vmatpush1.msra.mxu0 %v2037
    %2182 = vmatprep.subr.mxu0 0.0
    %2183 = vmatpush1.msra.mxu0 0.0
    %2184 = vmatprep.subr.mxu0 0.0
    %2185 = vmatpush1.msra.mxu0 0.0
    %2186 = vmatprep.subr.mxu0 0.0
    %2187 = vmatpush1.msra.mxu0 0.0
    %2188 = vmatprep.subr.mxu0 0.0
    %2189 = vmatpush1.msra.mxu0 0.0
    %2190 = vmatprep.subr.mxu0 0.0
    %2191 = vmatpush1.msra.mxu0 0.0
    %2192 = vmatprep.subr.mxu0 0.0
    %2193 = vmatpush1.msra.mxu0 0.0
    %2194 = vmatprep.subr.mxu0 0.0
    %2195 = vmatpush1.msra.mxu0 0.0
    %2196 = vmatprep.subr.mxu0 0.0
    %2197 = vmatpush1.msra.mxu0 0.0
    %2198 = vmatprep.subr.mxu0 0.0
    %2199 = vmatpush1.msra.mxu0 0.0
    %2200 = vmatprep.subr.mxu0 0.0
    %2201 = vmatpush1.msra.mxu0 0.0
    %2202 = vmatprep.subr.mxu0 0.0
    %2203 = vmatpush1.msra.mxu0 0.0
    %2204 = vmatprep.subr.mxu0 0.0
    %2205 = vmatpush1.msra.mxu0 0.0
    %2206 = vmatprep.subr.mxu0 0.0
    %2207 = vmatpush1.msra.mxu0 0.0
    %2208 = vmatprep.subr.mxu0 0.0
    %2209 = vmatpush1.msra.mxu0 0.0
    %2210 = vmatprep.subr.mxu0 0.0
    %2211 = vmatpush1.msra.mxu0 0.0
    %2212 = vmatprep.subr.mxu0 0.0
    %2213 = vmatpush1.msra.mxu0 0.0
    %2214 = vmatprep.mubr.f32.mxu0 0.0
    %2215 = vmatmul.mubr.f32.gmra.mrb[0].mxu0 %v1950
    %v2216 = vpop.f32.mrb[0].mxu0
    %v2217 = vadd.f32 %v2122, %v2216
    %v2218 = vpop.f32.mrb[0].mxu0
    %2219 = vmatprep.mubr.f32.mxu0 0.0
    %2220 = vmatmul.mubr.f32.gmra.mrb[0].mxu0 %v1951
    %v2221 = vpop.f32.mrb[0].mxu0
    %v2222 = vadd.f32 %v2127, %v2221
    %v2223 = vpop.f32.mrb[0].mxu0
    %2224 = vmatprep.mubr.f32.mxu0 0.0
    %2225 = vmatmul.mubr.f32.gmra.mrb[0].mxu0 %v1952
    %v2226 = vpop.f32.mrb[0].mxu0
    %v2227 = vadd.f32 %v2132, %v2226
    %v2228 = vpop.f32.mrb[0].mxu0
    %2229 = vmatprep.mubr.f32.mxu0 0.0
    %2230 = vmatmul.mubr.f32.gmra.mrb[0].mxu0 %v1953
    %v2231 = vpop.f32.mrb[0].mxu0
    %v2232 = vadd.f32 %v2137, %v2231
    %v2233 = vpop.f32.mrb[0].mxu0
    %2234 = vmatprep.mubr.f32.mxu0 0.0
    %2235 = vmatmul.mubr.f32.gmra.mrb[0].mxu0 %v1954
    %v2236 = vpop.f32.mrb[0].mxu0
    %v2237 = vadd.f32 %v2142, %v2236
    %v2238 = vpop.f32.mrb[0].mxu0
    %2239 = vmatprep.mubr.f32.mxu0 0.0
    %2240 = vmatmul.mubr.f32.gmra.mrb[0].mxu0 %v1955
    %v2241 = vpop.f32.mrb[0].mxu0
    %v2242 = vadd.f32 %v2147, %v2241
    %v2243 = vpop.f32.mrb[0].mxu0
    %2244 = vdwg.mxu0
    %s2245 = scalar_lea.vmem %s10, 2
    %v2246 = vld [vmem:[%s2245] sm:$0x1]
    %v2248 = vlaneseq
    %v2249 = vshrl.u32 %v2248, 7
    %v2250 = vsub.s32 0, %v2249
    %v2251 = vrot.slane %v2246, %v2250
    %v2253 = vadd.f32 %v2217, %v2251
    %v2254 = vadd.f32 %v2222, %v2251
    %v2255 = vadd.f32 %v2227, %v2251
    %v2256 = vadd.f32 %v2232, %v2251
    %v2257 = vadd.f32 %v2237, %v2251
    %v2258 = vadd.f32 %v2242, %v2251
    %v2259 = vmax.f32 %v2253, 0.0
    %v2260 = vmax.f32 %v2254, 0.0
    %v2261 = vmax.f32 %v2255, 0.0
    %v2262 = vmax.f32 %v2256, 0.0
    %v2263 = vmax.f32 %v2257, 0.0
    %v2264 = vmax.f32 %v2258, 0.0
    %2265 = vmatprep.subr.mxu0 0.0
    %2266 = vmatpush1.msra.mxu0 %v2259
    %2267 = vmatprep.subr.mxu0 0.0
    %2268 = vmatpush1.msra.mxu0 %v2260
    %2269 = vmatprep.subr.mxu0 0.0
    %2270 = vmatpush1.msra.mxu0 %v2261
    %2271 = vmatprep.subr.mxu0 0.0
    %2272 = vmatpush1.msra.mxu0 %v2262
    %2273 = vmatprep.subr.mxu0 0.0
    %2274 = vmatpush1.msra.mxu0 %v2263
    %2275 = vmatprep.subr.mxu0 0.0
    %2276 = vmatpush1.msra.mxu0 %v2264
    %2277 = vmatprep.subr.mxu0 0.0
    %2278 = vmatpush1.msra.mxu0 0.0
    %2279 = vmatprep.subr.mxu0 0.0
    %2280 = vmatpush1.msra.mxu0 0.0
    %2281 = vmatprep.subr.mxu0 0.0
    %2282 = vmatpush1.msra.mxu0 0.0
    %2283 = vmatprep.subr.mxu0 0.0
    %2284 = vmatpush1.msra.mxu0 0.0
    %2285 = vmatprep.subr.mxu0 0.0
    %2286 = vmatpush1.msra.mxu0 0.0
    %2287 = vmatprep.subr.mxu0 0.0
    %2288 = vmatpush1.msra.mxu0 0.0
    %2289 = vmatprep.subr.mxu0 0.0
    %2290 = vmatpush1.msra.mxu0 0.0
    %2291 = vmatprep.subr.mxu0 0.0
    %2292 = vmatpush1.msra.mxu0 0.0
    %2293 = vmatprep.subr.mxu0 0.0
    %2294 = vmatpush1.msra.mxu0 0.0
    %2295 = vmatprep.subr.mxu0 0.0
    %2296 = vmatpush1.msra.mxu0 0.0
    %2297 = vmatprep.subr.mxu0 0.0
    %2298 = vmatpush1.msra.mxu0 0.0
    %2299 = vmatprep.subr.mxu0 0.0
    %2300 = vmatpush1.msra.mxu0 0.0
    %2301 = vmatprep.subr.mxu0 0.0
    %2302 = vmatpush1.msra.mxu0 0.0
    %2303 = vmatprep.subr.mxu0 0.0
    %2304 = vmatpush1.msra.mxu0 0.0
    %2305 = vmatprep.subr.mxu0 0.0
    %2306 = vmatpush1.msra.mxu0 0.0
    %2307 = vmatprep.subr.mxu0 0.0
    %2308 = vmatpush1.msra.mxu0 0.0
    %2309 = vmatprep.subr.mxu0 0.0
    %2310 = vmatpush1.msra.mxu0 0.0
    %2311 = vmatprep.subr.mxu0 0.0
    %2312 = vmatpush1.msra.mxu0 0.0
    %2313 = vmatprep.subr.mxu0 0.0
    %2314 = vmatpush1.msra.mxu0 0.0
    %2315 = vmatprep.subr.mxu0 0.0
    %2316 = vmatpush1.msra.mxu0 0.0
    %2317 = vmatprep.subr.mxu0 0.0
    %2318 = vmatpush1.msra.mxu0 0.0
    %2319 = vmatprep.subr.mxu0 0.0
    %2320 = vmatpush1.msra.mxu0 0.0
    %2321 = vmatprep.subr.mxu0 0.0
    %2322 = vmatpush1.msra.mxu0 0.0
    %2323 = vmatprep.subr.mxu0 0.0
    %2324 = vmatpush1.msra.mxu0 0.0
    %2325 = vmatprep.subr.mxu0 0.0
    %2326 = vmatpush1.msra.mxu0 0.0
    %2327 = vmatprep.subr.mxu0 0.0
    %2328 = vmatpush1.msra.mxu0 0.0
    %2329 = vmatprep.mubr.f32.mxu0 0.0
    %2330 = vmatmul.mubr.f32.gmra.mrb[0].mxu0 %v694
    %v2331 = vpop.f32.mrb[0].mxu0
    %v2332 = vadd.f32 0.0, %v2331
    %v2333 = vpop.f32.mrb[0].mxu0
    %2334 = vmatprep.mubr.f32.mxu0 0.0
    %2335 = vmatmul.mubr.f32.gmra.mrb[0].mxu0 %v697
    %v2336 = vpop.f32.mrb[0].mxu0
    %v2337 = vadd.f32 0.0, %v2336
    %v2338 = vpop.f32.mrb[0].mxu0
    %2339 = vdwg.mxu0
    %v2340 = vmul.f32 %v2332, %v200
    %v2341 = vmul.f32 %v2337, %v202
    %s2342 = scalar_lea.vmem %s11, 2
    %v2343 = vld [vmem:[%s2342] sm:$0x1]
    %s2344 = scalar_lea.vmem %s12, 2
    %v2345 = vld [vmem:[%s2344] sm:$0x1]
    %v2346 = vadd.f32 %v2340, %v2341
    %v2347 = vrot.slane %v2346, 4
    %v2348 = vadd.f32 %v2346, %v2347
    %v2349 = vrot.slane %v2348, 2
    %v2350 = vadd.f32 %v2348, %v2349
    %v2351 = vrot.slane %v2350, 1
    %v2352 = vadd.f32 %v2350, %v2351
    %v2353 = vmul.f32 %v2352, %v785
    %v2354 = vsub.f32 %v2340, %v2353
    %v2355 = vsub.f32 %v2341, %v2353
    %v2356 = vmul.f32 %v2354, %v2354
    %v2357 = vmul.f32 %v2355, %v2355
    %v2358 = vadd.f32 %v2356, %v2357
    %v2359 = vrot.slane %v2358, 4
    %v2360 = vadd.f32 %v2358, %v2359
    %v2361 = vrot.slane %v2360, 2
    %v2362 = vadd.f32 %v2360, %v2361
    %v2363 = vrot.slane %v2362, 1
    %v2364 = vadd.f32 %v2362, %v2363
    %v2365 = vmul.f32 %v2364, %v785
    %v2366 = vadd.f32 %v2365, 1e-05
    %v2367 = vrsqrt.pop %v2366
    %v2368 = vmul.f32 %v2367, %v2343
    %v2369 = vlaneseq
    %v2370 = vshrl.u32 %v2369, 7
    %v2371 = vsub.s32 0, %v2370
    %v2372 = vrot.slane %v2368, %v2371
    %v2373 = vmul.f32 %v2354, %v2372
    %v2374 = vmul.f32 %v2355, %v2372
    %v2376 = vlaneseq
    %v2377 = vshrl.u32 %v2376, 7
    %v2378 = vsub.s32 0, %v2377
    %v2379 = vrot.slane %v2345, %v2378
    %v2381 = vadd.f32 %v2373, %v2379
    %v2382 = vadd.f32 %v2374, %v2379
    %s2383 = scalar_lea.vmem %s13, 2
    %v2384 = vld [vmem:[%s2383] sm:$0x1]
    %s2385 = scalar_lea.vmem %s14, 2
    %v2386 = vld [vmem:[%s2385] sm:$0x1]
    %v2387 = vadd.f32 %v1832, %v1833
    %v2388 = vrot.slane %v2387, 4
    %v2389 = vadd.f32 %v2387, %v2388
    %v2390 = vrot.slane %v2389, 2
    %v2391 = vadd.f32 %v2389, %v2390
    %v2392 = vrot.slane %v2391, 1
    %v2393 = vadd.f32 %v2391, %v2392
    %v2394 = vmul.f32 %v2393, %v785
    %v2395 = vsub.f32 %v1832, %v2394
    %v2396 = vsub.f32 %v1833, %v2394
    %v2397 = vmul.f32 %v2395, %v2395
    %v2398 = vmul.f32 %v2396, %v2396
    %v2399 = vadd.f32 %v2397, %v2398
    %v2400 = vrot.slane %v2399, 4
    %v2401 = vadd.f32 %v2399, %v2400
    %v2402 = vrot.slane %v2401, 2
    %v2403 = vadd.f32 %v2401, %v2402
    %v2404 = vrot.slane %v2403, 1
    %v2405 = vadd.f32 %v2403, %v2404
    %v2406 = vmul.f32 %v2405, %v785
    %v2407 = vadd.f32 %v2406, 1e-05
    %v2408 = vrsqrt.pop %v2407
    %v2409 = vmul.f32 %v2408, %v2384
    %v2410 = vlaneseq
    %v2411 = vshrl.u32 %v2410, 7
    %v2412 = vsub.s32 0, %v2411
    %v2413 = vrot.slane %v2409, %v2412
    %v2414 = vmul.f32 %v2395, %v2413
    %v2415 = vmul.f32 %v2396, %v2413
    %v2417 = vlaneseq
    %v2418 = vshrl.u32 %v2417, 7
    %v2419 = vsub.s32 0, %v2418
    %v2420 = vrot.slane %v2386, %v2419
    %v2422 = vadd.f32 %v2414, %v2420
    %v2423 = vadd.f32 %v2415, %v2420
    %s2424 = scalar_lea.vmem [#allocation10], 256
    %v2425 = vld [vmem:[%s2424] sm:$0xff]
    %v2426 = vld [vmem:[%s2424 + $0x8] sm:$0xff]
    %v2427 = vld [vmem:[%s2424 + $0x10] sm:$0xff]
    %v2428 = vld [vmem:[%s2424 + $0x18] sm:$0xff]
    %v2429 = vld [vmem:[%s2424 + $0x20] sm:$0xff]
    %v2430 = vld [vmem:[%s2424 + $0x28] sm:$0xff]
    %v2431 = vld [vmem:[%s2424 + $0x30] sm:$0xff]
    %v2432 = vld [vmem:[%s2424 + $0x38] sm:$0xff]
    %v2433 = vld [vmem:[%s2424 + $0x40] sm:$0xff]
    %v2434 = vld [vmem:[%s2424 + $0x48] sm:$0xff]
    %v2435 = vld [vmem:[%s2424 + $0x50] sm:$0xff]
    %v2436 = vld [vmem:[%s2424 + $0x58] sm:$0xff]
    %v2437 = vld [vmem:[%s2424 + $0x60] sm:$0xff]
    %v2438 = vld [vmem:[%s2424 + $0x68] sm:$0xff]
    %v2439 = vld [vmem:[%s2424 + $0x70] sm:$0xff]
    %v2440 = vld [vmem:[%s2424 + $0x78] sm:$0xff]
    %s2441 = scalar_lea.vmem [#allocation11], 256
    %v2442 = vld [vmem:[%s2441] sm:$0xff]
    %v2443 = vld [vmem:[%s2441 + $0x8] sm:$0xff]
    %v2444 = vld [vmem:[%s2441 + $0x10] sm:$0xff]
    %v2445 = vld [vmem:[%s2441 + $0x18] sm:$0xff]
    %v2446 = vld [vmem:[%s2441 + $0x20] sm:$0xff]
    %v2447 = vld [vmem:[%s2441 + $0x28] sm:$0xff]
    %v2448 = vld [vmem:[%s2441 + $0x30] sm:$0xff]
    %v2449 = vld [vmem:[%s2441 + $0x38] sm:$0xff]
    %v2450 = vld [vmem:[%s2441 + $0x40] sm:$0xff]
    %v2451 = vld [vmem:[%s2441 + $0x48] sm:$0xff]
    %v2452 = vld [vmem:[%s2441 + $0x50] sm:$0xff]
    %v2453 = vld [vmem:[%s2441 + $0x58] sm:$0xff]
    %v2454 = vld [vmem:[%s2441 + $0x60] sm:$0xff]
    %v2455 = vld [vmem:[%s2441 + $0x68] sm:$0xff]
    %v2456 = vld [vmem:[%s2441 + $0x70] sm:$0xff]
    %v2457 = vld [vmem:[%s2441 + $0x78] sm:$0xff]
    %2458 = vmatprep.subr.mxu0 0.0
    %2459 = vmatpush1.msra.mxu0 %v2442
    %2460 = vmatprep.subr.mxu0 0.0
    %2461 = vmatpush1.msra.mxu0 %v2443
    %2462 = vmatprep.subr.mxu0 0.0
    %2463 = vmatpush1.msra.mxu0 %v2444
    %2464 = vmatprep.subr.mxu0 0.0
    %2465 = vmatpush1.msra.mxu0 %v2445
    %2466 = vmatprep.subr.mxu0 0.0
    %2467 = vmatpush1.msra.mxu0 %v2446
    %2468 = vmatprep.subr.mxu0 0.0
    %2469 = vmatpush1.msra.mxu0 %v2447
    %2470 = vmatprep.subr.mxu0 0.0
    %2471 = vmatpush1.msra.mxu0 %v2448
    %2472 = vmatprep.subr.mxu0 0.0
    %2473 = vmatpush1.msra.mxu0 %v2449
    %2474 = vmatprep.subr.mxu0 0.0
    %2475 = vmatpush1.msra.mxu0 %v2450
    %2476 = vmatprep.subr.mxu0 0.0
    %2477 = vmatpush1.msra.mxu0 %v2451
    %2478 = vmatprep.subr.mxu0 0.0
    %2479 = vmatpush1.msra.mxu0 %v2452
    %2480 = vmatprep.subr.mxu0 0.0
    %2481 = vmatpush1.msra.mxu0 %v2453
    %2482 = vmatprep.subr.mxu0 0.0
    %2483 = vmatpush1.msra.mxu0 %v2454
    %2484 = vmatprep.subr.mxu0 0.0
    %2485 = vmatpush1.msra.mxu0 %v2455
    %2486 = vmatprep.subr.mxu0 0.0
    %2487 = vmatpush1.msra.mxu0 %v2456
    %2488 = vmatprep.subr.mxu0 0.0
    %2489 = vmatpush1.msra.mxu0 %v2457
    %2490 = vmatprep.subr.mxu0 0.0
    %2491 = vmatpush1.msra.mxu0 0.0
    %2492 = vmatprep.subr.mxu0 0.0
    %2493 = vmatpush1.msra.mxu0 0.0
    %2494 = vmatprep.subr.mxu0 0.0
    %2495 = vmatpush1.msra.mxu0 0.0
    %2496 = vmatprep.subr.mxu0 0.0
    %2497 = vmatpush1.msra.mxu0 0.0
    %2498 = vmatprep.subr.mxu0 0.0
    %2499 = vmatpush1.msra.mxu0 0.0
    %2500 = vmatprep.subr.mxu0 0.0
    %2501 = vmatpush1.msra.mxu0 0.0
    %2502 = vmatprep.subr.mxu0 0.0
    %2503 = vmatpush1.msra.mxu0 0.0
    %2504 = vmatprep.subr.mxu0 0.0
    %2505 = vmatpush1.msra.mxu0 0.0
    %2506 = vmatprep.subr.mxu0 0.0
    %2507 = vmatpush1.msra.mxu0 0.0
    %2508 = vmatprep.subr.mxu0 0.0
    %2509 = vmatpush1.msra.mxu0 0.0
    %2510 = vmatprep.subr.mxu0 0.0
    %2511 = vmatpush1.msra.mxu0 0.0
    %2512 = vmatprep.subr.mxu0 0.0
    %2513 = vmatpush1.msra.mxu0 0.0
    %2514 = vmatprep.subr.mxu0 0.0
    %2515 = vmatpush1.msra.mxu0 0.0
    %2516 = vmatprep.subr.mxu0 0.0
    %2517 = vmatpush1.msra.mxu0 0.0
    %2518 = vmatprep.subr.mxu0 0.0
    %2519 = vmatpush1.msra.mxu0 0.0
    %2520 = vmatprep.subr.mxu0 0.0
    %2521 = vmatpush1.msra.mxu0 0.0
    %2522 = vmatprep.mubr.f32.mxu0 0.0
    %2523 = vmatmul.mubr.f32.gmra.mrb[0].mxu0 %v2422
    %v2524 = vpop.f32.mrb[0].mxu0
    %v2525 = vadd.f32 0.0, %v2524
    %v2526 = vpop.f32.mrb[0].mxu0
    %2527 = vmatprep.mubr.f32.mxu0 0.0
    %2528 = vmatmul.mubr.f32.gmra.mrb[0].mxu0 %v2423
    %v2529 = vpop.f32.mrb[0].mxu0
    %v2530 = vadd.f32 0.0, %v2529
    %v2531 = vpop.f32.mrb[0].mxu0
    %2532 = vdwg.mxu0
    %2533 = vmatprep.subr.mxu0 0.0
    %2534 = vmatpush1.msra.mxu0 %v2425
    %2535 = vmatprep.subr.mxu0 0.0
    %2536 = vmatpush1.msra.mxu0 %v2426
    %2537 = vmatprep.subr.mxu0 0.0
    %2538 = vmatpush1.msra.mxu0 %v2427
    %2539 = vmatprep.subr.mxu0 0.0
    %2540 = vmatpush1.msra.mxu0 %v2428
    %2541 = vmatprep.subr.mxu0 0.0
    %2542 = vmatpush1.msra.mxu0 %v2429
    %2543 = vmatprep.subr.mxu0 0.0
    %2544 = vmatpush1.msra.mxu0 %v2430
    %2545 = vmatprep.subr.mxu0 0.0
    %2546 = vmatpush1.msra.mxu0 %v2431
    %2547 = vmatprep.subr.mxu0 0.0
    %2548 = vmatpush1.msra.mxu0 %v2432
    %2549 = vmatprep.subr.mxu0 0.0
    %2550 = vmatpush1.msra.mxu0 %v2433
    %2551 = vmatprep.subr.mxu0 0.0
    %2552 = vmatpush1.msra.mxu0 %v2434
    %2553 = vmatprep.subr.mxu0 0.0
    %2554 = vmatpush1.msra.mxu0 %v2435
    %2555 = vmatprep.subr.mxu0 0.0
    %2556 = vmatpush1.msra.mxu0 %v2436
    %2557 = vmatprep.subr.mxu0 0.0
    %2558 = vmatpush1.msra.mxu0 %v2437
    %2559 = vmatprep.subr.mxu0 0.0
    %2560 = vmatpush1.msra.mxu0 %v2438
    %2561 = vmatprep.subr.mxu0 0.0
    %2562 = vmatpush1.msra.mxu0 %v2439
    %2563 = vmatprep.subr.mxu0 0.0
    %2564 = vmatpush1.msra.mxu0 %v2440
    %2565 = vmatprep.subr.mxu0 0.0
    %2566 = vmatpush1.msra.mxu0 0.0
    %2567 = vmatprep.subr.mxu0 0.0
    %2568 = vmatpush1.msra.mxu0 0.0
    %2569 = vmatprep.subr.mxu0 0.0
    %2570 = vmatpush1.msra.mxu0 0.0
    %2571 = vmatprep.subr.mxu0 0.0
    %2572 = vmatpush1.msra.mxu0 0.0
    %2573 = vmatprep.subr.mxu0 0.0
    %2574 = vmatpush1.msra.mxu0 0.0
    %2575 = vmatprep.subr.mxu0 0.0
    %2576 = vmatpush1.msra.mxu0 0.0
    %2577 = vmatprep.subr.mxu0 0.0
    %2578 = vmatpush1.msra.mxu0 0.0
    %2579 = vmatprep.subr.mxu0 0.0
    %2580 = vmatpush1.msra.mxu0 0.0
    %2581 = vmatprep.subr.mxu0 0.0
    %2582 = vmatpush1.msra.mxu0 0.0
    %2583 = vmatprep.subr.mxu0 0.0
    %2584 = vmatpush1.msra.mxu0 0.0
    %2585 = vmatprep.subr.mxu0 0.0
    %2586 = vmatpush1.msra.mxu0 0.0
    %2587 = vmatprep.subr.mxu0 0.0
    %2588 = vmatpush1.msra.mxu0 0.0
    %2589 = vmatprep.subr.mxu0 0.0
    %2590 = vmatpush1.msra.mxu0 0.0
    %2591 = vmatprep.subr.mxu0 0.0
    %2592 = vmatpush1.msra.mxu0 0.0
    %2593 = vmatprep.subr.mxu0 0.0
    %2594 = vmatpush1.msra.mxu0 0.0
    %2595 = vmatprep.subr.mxu0 0.0
    %2596 = vmatpush1.msra.mxu0 0.0
    %2597 = vmatprep.mubr.f32.mxu0 0.0
    %2598 = vmatmul.mubr.f32.gmra.mrb[0].mxu0 %v2381
    %v2599 = vpop.f32.mrb[0].mxu0
    %v2600 = vadd.f32 %v2525, %v2599
    %v2601 = vpop.f32.mrb[0].mxu0
    %2602 = vmatprep.mubr.f32.mxu0 0.0
    %2603 = vmatmul.mubr.f32.gmra.mrb[0].mxu0 %v2382
    %v2604 = vpop.f32.mrb[0].mxu0
    %v2605 = vadd.f32 %v2530, %v2604
    %v2606 = vpop.f32.mrb[0].mxu0
    %2607 = vdwg.mxu0
    %s2608 = scalar_lea.vmem %s17, 2
    %v2609 = vld [vmem:[%s2608] sm:$0x1]
    %v2611 = vlaneseq
    %v2612 = vshrl.u32 %v2611, 7
    %v2613 = vsub.s32 0, %v2612
    %v2614 = vrot.slane %v2609, %v2613
    %v2616 = vadd.f32 %v2600, %v2614
    %v2617 = vadd.f32 %v2605, %v2614
    %v2618 = vmax.f32 %v2616, 0.0
    %v2619 = vmax.f32 %v2617, 0.0
    %2620 = vmatprep.subr.mxu0 0.0
    %2621 = vmatpush1.msra.mxu0 %v2618
    %2622 = vmatprep.subr.mxu0 0.0
    %2623 = vmatpush1.msra.mxu0 %v2619
    %2624 = vmatprep.subr.mxu0 0.0
    %2625 = vmatpush1.msra.mxu0 0.0
    %2626 = vmatprep.subr.mxu0 0.0
    %2627 = vmatpush1.msra.mxu0 0.0
    %2628 = vmatprep.subr.mxu0 0.0
    %2629 = vmatpush1.msra.mxu0 0.0
    %2630 = vmatprep.subr.mxu0 0.0
    %2631 = vmatpush1.msra.mxu0 0.0
    %2632 = vmatprep.subr.mxu0 0.0
    %2633 = vmatpush1.msra.mxu0 0.0
    %2634 = vmatprep.subr.mxu0 0.0
    %2635 = vmatpush1.msra.mxu0 0.0
    %2636 = vmatprep.subr.mxu0 0.0
    %2637 = vmatpush1.msra.mxu0 0.0
    %2638 = vmatprep.subr.mxu0 0.0
    %2639 = vmatpush1.msra.mxu0 0.0
    %2640 = vmatprep.subr.mxu0 0.0
    %2641 = vmatpush1.msra.mxu0 0.0
    %2642 = vmatprep.subr.mxu0 0.0
    %2643 = vmatpush1.msra.mxu0 0.0
    %2644 = vmatprep.subr.mxu0 0.0
    %2645 = vmatpush1.msra.mxu0 0.0
    %2646 = vmatprep.subr.mxu0 0.0
    %2647 = vmatpush1.msra.mxu0 0.0
    %2648 = vmatprep.subr.mxu0 0.0
    %2649 = vmatpush1.msra.mxu0 0.0
    %2650 = vmatprep.subr.mxu0 0.0
    %2651 = vmatpush1.msra.mxu0 0.0
    %2652 = vmatprep.subr.mxu0 0.0
    %2653 = vmatpush1.msra.mxu0 0.0
    %2654 = vmatprep.subr.mxu0 0.0
    %2655 = vmatpush1.msra.mxu0 0.0
    %2656 = vmatprep.subr.mxu0 0.0
    %2657 = vmatpush1.msra.mxu0 0.0
    %2658 = vmatprep.subr.mxu0 0.0
    %2659 = vmatpush1.msra.mxu0 0.0
    %2660 = vmatprep.subr.mxu0 0.0
    %2661 = vmatpush1.msra.mxu0 0.0
    %2662 = vmatprep.subr.mxu0 0.0
    %2663 = vmatpush1.msra.mxu0 0.0
    %2664 = vmatprep.subr.mxu0 0.0
    %2665 = vmatpush1.msra.mxu0 0.0
    %2666 = vmatprep.subr.mxu0 0.0
    %2667 = vmatpush1.msra.mxu0 0.0
    %2668 = vmatprep.subr.mxu0 0.0
    %2669 = vmatpush1.msra.mxu0 0.0
    %2670 = vmatprep.subr.mxu0 0.0
    %2671 = vmatpush1.msra.mxu0 0.0
    %2672 = vmatprep.subr.mxu0 0.0
    %2673 = vmatpush1.msra.mxu0 0.0
    %2674 = vmatprep.subr.mxu0 0.0
    %2675 = vmatpush1.msra.mxu0 0.0
    %2676 = vmatprep.subr.mxu0 0.0
    %2677 = vmatpush1.msra.mxu0 0.0
    %2678 = vmatprep.subr.mxu0 0.0
    %2679 = vmatpush1.msra.mxu0 0.0
    %2680 = vmatprep.subr.mxu0 0.0
    %2681 = vmatpush1.msra.mxu0 0.0
    %2682 = vmatprep.subr.mxu0 0.0
    %2683 = vmatpush1.msra.mxu0 0.0
    %2684 = vmatprep.mubr.f32.mxu0 0.0
    %2685 = vmatmul.mubr.f32.gmra.mrb[0].mxu0 %v213
    %v2686 = vpop.f32.mrb[0].mxu0
    %v2687 = vadd.f32 0.0, %v2686
    %v2688 = vpop.f32.mrb[0].mxu0
    %2689 = vmatprep.mubr.f32.mxu0 0.0
    %2690 = vmatmul.mubr.f32.gmra.mrb[0].mxu0 %v216
    %v2691 = vpop.f32.mrb[0].mxu0
    %v2692 = vadd.f32 0.0, %v2691
    %v2693 = vpop.f32.mrb[0].mxu0
    %2694 = vmatprep.mubr.f32.mxu0 0.0
    %2695 = vmatmul.mubr.f32.gmra.mrb[0].mxu0 %v219
    %v2696 = vpop.f32.mrb[0].mxu0
    %v2697 = vadd.f32 0.0, %v2696
    %v2698 = vpop.f32.mrb[0].mxu0
    %2699 = vmatprep.mubr.f32.mxu0 0.0
    %2700 = vmatmul.mubr.f32.gmra.mrb[0].mxu0 %v222
    %v2701 = vpop.f32.mrb[0].mxu0
    %v2702 = vadd.f32 0.0, %v2701
    %v2703 = vpop.f32.mrb[0].mxu0
    %2704 = vmatprep.mubr.f32.mxu0 0.0
    %2705 = vmatmul.mubr.f32.gmra.mrb[0].mxu0 %v225
    %v2706 = vpop.f32.mrb[0].mxu0
    %v2707 = vadd.f32 0.0, %v2706
    %v2708 = vpop.f32.mrb[0].mxu0
    %2709 = vmatprep.mubr.f32.mxu0 0.0
    %2710 = vmatmul.mubr.f32.gmra.mrb[0].mxu0 %v228
    %v2711 = vpop.f32.mrb[0].mxu0
    %v2712 = vadd.f32 0.0, %v2711
    %v2713 = vpop.f32.mrb[0].mxu0
    %2714 = vdwg.mxu0
    %s2715 = scalar_lea.vmem %s4, 3
    %v2716 = vld [vmem:[%s2715] sm:$0x1]
    %s2717 = scalar_lea.vmem %s5, 3
    %v2718 = vld [vmem:[%s2717] sm:$0x1]
    %v2719 = vmul.f32 %v365, %v2716
    %v2720 = vlaneseq
    %v2721 = vshrl.u32 %v2720, 7
    %v2722 = vsub.s32 0, %v2721
    %v2723 = vrot.slane %v2719, %v2722
    %v2724 = vmul.f32 %v340, %v2723
    %v2725 = vmul.f32 %v341, %v2723
    %v2726 = vmul.f32 %v342, %v2723
    %v2727 = vmul.f32 %v343, %v2723
    %v2728 = vmul.f32 %v344, %v2723
    %v2729 = vmul.f32 %v345, %v2723
    %v2731 = vlaneseq
    %v2732 = vshrl.u32 %v2731, 7
    %v2733 = vsub.s32 0, %v2732
    %v2734 = vrot.slane %v2718, %v2733
    %v2736 = vadd.f32 %v2724, %v2734
    %v2737 = vadd.f32 %v2725, %v2734
    %v2738 = vadd.f32 %v2726, %v2734
    %v2739 = vadd.f32 %v2727, %v2734
    %v2740 = vadd.f32 %v2728, %v2734
    %v2741 = vadd.f32 %v2729, %v2734
    %s2742 = scalar_lea.vmem %s6, 3
    %v2743 = vld [vmem:[%s2742] sm:$0x1]
    %s2744 = scalar_lea.vmem %s7, 3
    %v2745 = vld [vmem:[%s2744] sm:$0x1]
    %v2746 = vadd.f32 %v2687, %v2692
    %v2747 = vadd.f32 %v2746, %v2697
    %v2748 = vadd.f32 %v2747, %v2702
    %v2749 = vadd.f32 %v2748, %v2707
    %v2750 = vadd.f32 %v2749, %v2712
    %v2751 = vrot.slane %v2750, 4
    %v2752 = vadd.f32 %v2750, %v2751
    %v2753 = vrot.slane %v2752, 2
    %v2754 = vadd.f32 %v2752, %v2753
    %v2755 = vrot.slane %v2754, 1
    %v2756 = vadd.f32 %v2754, %v2755
    %v2757 = vmul.f32 %v2756, %v338
    %v2758 = vsub.f32 %v2687, %v2757
    %v2759 = vsub.f32 %v2692, %v2757
    %v2760 = vsub.f32 %v2697, %v2757
    %v2761 = vsub.f32 %v2702, %v2757
    %v2762 = vsub.f32 %v2707, %v2757
    %v2763 = vsub.f32 %v2712, %v2757
    %v2764 = vmul.f32 %v2758, %v2758
    %v2765 = vmul.f32 %v2759, %v2759
    %v2766 = vmul.f32 %v2760, %v2760
    %v2767 = vmul.f32 %v2761, %v2761
    %v2768 = vmul.f32 %v2762, %v2762
    %v2769 = vmul.f32 %v2763, %v2763
    %v2770 = vadd.f32 %v2764, %v2765
    %v2771 = vadd.f32 %v2770, %v2766
    %v2772 = vadd.f32 %v2771, %v2767
    %v2773 = vadd.f32 %v2772, %v2768
    %v2774 = vadd.f32 %v2773, %v2769
    %v2775 = vrot.slane %v2774, 4
    %v2776 = vadd.f32 %v2774, %v2775
    %v2777 = vrot.slane %v2776, 2
    %v2778 = vadd.f32 %v2776, %v2777
    %v2779 = vrot.slane %v2778, 1
    %v2780 = vadd.f32 %v2778, %v2779
    %v2781 = vmul.f32 %v2780, %v338
    %v2782 = vadd.f32 %v2781, 1e-05
    %v2783 = vrsqrt.pop %v2782
    %v2784 = vmul.f32 %v2783, %v2743
    %v2785 = vlaneseq
    %v2786 = vshrl.u32 %v2785, 7
    %v2787 = vsub.s32 0, %v2786
    %v2788 = vrot.slane %v2784, %v2787
    %v2789 = vmul.f32 %v2758, %v2788
    %v2790 = vmul.f32 %v2759, %v2788
    %v2791 = vmul.f32 %v2760, %v2788
    %v2792 = vmul.f32 %v2761, %v2788
    %v2793 = vmul.f32 %v2762, %v2788
    %v2794 = vmul.f32 %v2763, %v2788
    %v2796 = vlaneseq
    %v2797 = vshrl.u32 %v2796, 7
    %v2798 = vsub.s32 0, %v2797
    %v2799 = vrot.slane %v2745, %v2798
    %v2801 = vadd.f32 %v2789, %v2799
    %v2802 = vadd.f32 %v2790, %v2799
    %v2803 = vadd.f32 %v2791, %v2799
    %v2804 = vadd.f32 %v2792, %v2799
    %v2805 = vadd.f32 %v2793, %v2799
    %v2806 = vadd.f32 %v2794, %v2799
    %s2807 = scalar_lea.vmem [#allocation7], 384
    %v2808 = vld [vmem:[%s2807] sm:$0xff]
    %v2809 = vld [vmem:[%s2807 + $0x8] sm:$0xff]
    %v2810 = vld [vmem:[%s2807 + $0x10] sm:$0xff]
    %v2811 = vld [vmem:[%s2807 + $0x18] sm:$0xff]
    %v2812 = vld [vmem:[%s2807 + $0x20] sm:$0xff]
    %v2813 = vld [vmem:[%s2807 + $0x28] sm:$0xff]
    %v2814 = vld [vmem:[%s2807 + $0x30] sm:$0xff]
    %v2815 = vld [vmem:[%s2807 + $0x38] sm:$0xff]
    %v2816 = vld [vmem:[%s2807 + $0x40] sm:$0xff]
    %v2817 = vld [vmem:[%s2807 + $0x48] sm:$0xff]
    %v2818 = vld [vmem:[%s2807 + $0x50] sm:$0xff]
    %v2819 = vld [vmem:[%s2807 + $0x58] sm:$0xff]
    %v2820 = vld [vmem:[%s2807 + $0x60] sm:$0xff]
    %v2821 = vld [vmem:[%s2807 + $0x68] sm:$0xff]
    %v2822 = vld [vmem:[%s2807 + $0x70] sm:$0xff]
    %v2823 = vld [vmem:[%s2807 + $0x78] sm:$0xff]
    %s2824 = scalar_lea.vmem [#allocation8], 384
    %v2825 = vld [vmem:[%s2824] sm:$0xff]
    %v2826 = vld [vmem:[%s2824 + $0x8] sm:$0xff]
    %v2827 = vld [vmem:[%s2824 + $0x10] sm:$0xff]
    %v2828 = vld [vmem:[%s2824 + $0x18] sm:$0xff]
    %v2829 = vld [vmem:[%s2824 + $0x20] sm:$0xff]
    %v2830 = vld [vmem:[%s2824 + $0x28] sm:$0xff]
    %v2831 = vld [vmem:[%s2824 + $0x30] sm:$0xff]
    %v2832 = vld [vmem:[%s2824 + $0x38] sm:$0xff]
    %v2833 = vld [vmem:[%s2824 + $0x40] sm:$0xff]
    %v2834 = vld [vmem:[%s2824 + $0x48] sm:$0xff]
    %v2835 = vld [vmem:[%s2824 + $0x50] sm:$0xff]
    %v2836 = vld [vmem:[%s2824 + $0x58] sm:$0xff]
    %v2837 = vld [vmem:[%s2824 + $0x60] sm:$0xff]
    %v2838 = vld [vmem:[%s2824 + $0x68] sm:$0xff]
    %v2839 = vld [vmem:[%s2824 + $0x70] sm:$0xff]
    %v2840 = vld [vmem:[%s2824 + $0x78] sm:$0xff]
    %2841 = vmatprep.subr.mxu0 0.0
    %2842 = vmatpush1.msra.mxu0 %v2825
    %2843 = vmatprep.subr.mxu0 0.0
    %2844 = vmatpush1.msra.mxu0 %v2826
    %2845 = vmatprep.subr.mxu0 0.0
    %2846 = vmatpush1.msra.mxu0 %v2827
    %2847 = vmatprep.subr.mxu0 0.0
    %2848 = vmatpush1.msra.mxu0 %v2828
    %2849 = vmatprep.subr.mxu0 0.0
    %2850 = vmatpush1.msra.mxu0 %v2829
    %2851 = vmatprep.subr.mxu0 0.0
    %2852 = vmatpush1.msra.mxu0 %v2830
    %2853 = vmatprep.subr.mxu0 0.0
    %2854 = vmatpush1.msra.mxu0 %v2831
    %2855 = vmatprep.subr.mxu0 0.0
    %2856 = vmatpush1.msra.mxu0 %v2832
    %2857 = vmatprep.subr.mxu0 0.0
    %2858 = vmatpush1.msra.mxu0 %v2833
    %2859 = vmatprep.subr.mxu0 0.0
    %2860 = vmatpush1.msra.mxu0 %v2834
    %2861 = vmatprep.subr.mxu0 0.0
    %2862 = vmatpush1.msra.mxu0 %v2835
    %2863 = vmatprep.subr.mxu0 0.0
    %2864 = vmatpush1.msra.mxu0 %v2836
    %2865 = vmatprep.subr.mxu0 0.0
    %2866 = vmatpush1.msra.mxu0 %v2837
    %2867 = vmatprep.subr.mxu0 0.0
    %2868 = vmatpush1.msra.mxu0 %v2838
    %2869 = vmatprep.subr.mxu0 0.0
    %2870 = vmatpush1.msra.mxu0 %v2839
    %2871 = vmatprep.subr.mxu0 0.0
    %2872 = vmatpush1.msra.mxu0 %v2840
    %2873 = vmatprep.subr.mxu0 0.0
    %2874 = vmatpush1.msra.mxu0 0.0
    %2875 = vmatprep.subr.mxu0 0.0
    %2876 = vmatpush1.msra.mxu0 0.0
    %2877 = vmatprep.subr.mxu0 0.0
    %2878 = vmatpush1.msra.mxu0 0.0
    %2879 = vmatprep.subr.mxu0 0.0
    %2880 = vmatpush1.msra.mxu0 0.0
    %2881 = vmatprep.subr.mxu0 0.0
    %2882 = vmatpush1.msra.mxu0 0.0
    %2883 = vmatprep.subr.mxu0 0.0
    %2884 = vmatpush1.msra.mxu0 0.0
    %2885 = vmatprep.subr.mxu0 0.0
    %2886 = vmatpush1.msra.mxu0 0.0
    %2887 = vmatprep.subr.mxu0 0.0
    %2888 = vmatpush1.msra.mxu0 0.0
    %2889 = vmatprep.subr.mxu0 0.0
    %2890 = vmatpush1.msra.mxu0 0.0
    %2891 = vmatprep.subr.mxu0 0.0
    %2892 = vmatpush1.msra.mxu0 0.0
    %2893 = vmatprep.subr.mxu0 0.0
    %2894 = vmatpush1.msra.mxu0 0.0
    %2895 = vmatprep.subr.mxu0 0.0
    %2896 = vmatpush1.msra.mxu0 0.0
    %2897 = vmatprep.subr.mxu0 0.0
    %2898 = vmatpush1.msra.mxu0 0.0
    %2899 = vmatprep.subr.mxu0 0.0
    %2900 = vmatpush1.msra.mxu0 0.0
    %2901 = vmatprep.subr.mxu0 0.0
    %2902 = vmatpush1.msra.mxu0 0.0
    %2903 = vmatprep.subr.mxu0 0.0
    %2904 = vmatpush1.msra.mxu0 0.0
    %2905 = vmatprep.mubr.f32.mxu0 0.0
    %2906 = vmatmul.mubr.f32.gmra.mrb[0].mxu0 %v2801
    %v2907 = vpop.f32.mrb[0].mxu0
    %v2908 = vadd.f32 0.0, %v2907
    %v2909 = vpop.f32.mrb[0].mxu0
    %2910 = vmatprep.mubr.f32.mxu0 0.0
    %2911 = vmatmul.mubr.f32.gmra.mrb[0].mxu0 %v2802
    %v2912 = vpop.f32.mrb[0].mxu0
    %v2913 = vadd.f32 0.0, %v2912
    %v2914 = vpop.f32.mrb[0].mxu0
    %2915 = vmatprep.mubr.f32.mxu0 0.0
    %2916 = vmatmul.mubr.f32.gmra.mrb[0].mxu0 %v2803
    %v2917 = vpop.f32.mrb[0].mxu0
    %v2918 = vadd.f32 0.0, %v2917
    %v2919 = vpop.f32.mrb[0].mxu0
    %2920 = vmatprep.mubr.f32.mxu0 0.0
    %2921 = vmatmul.mubr.f32.gmra.mrb[0].mxu0 %v2804
    %v2922 = vpop.f32.mrb[0].mxu0
    %v2923 = vadd.f32 0.0, %v2922
    %v2924 = vpop.f32.mrb[0].mxu0
    %2925 = vmatprep.mubr.f32.mxu0 0.0
    %2926 = vmatmul.mubr.f32.gmra.mrb[0].mxu0 %v2805
    %v2927 = vpop.f32.mrb[0].mxu0
    %v2928 = vadd.f32 0.0, %v2927
    %v2929 = vpop.f32.mrb[0].mxu0
    %2930 = vmatprep.mubr.f32.mxu0 0.0
    %2931 = vmatmul.mubr.f32.gmra.mrb[0].mxu0 %v2806
    %v2932 = vpop.f32.mrb[0].mxu0
    %v2933 = vadd.f32 0.0, %v2932
    %v2934 = vpop.f32.mrb[0].mxu0
    %2935 = vdwg.mxu0
    %2936 = vmatprep.subr.mxu0 0.0
    %2937 = vmatpush1.msra.mxu0 %v2808
    %2938 = vmatprep.subr.mxu0 0.0
    %2939 = vmatpush1.msra.mxu0 %v2809
    %2940 = vmatprep.subr.mxu0 0.0
    %2941 = vmatpush1.msra.mxu0 %v2810
    %2942 = vmatprep.subr.mxu0 0.0
    %2943 = vmatpush1.msra.mxu0 %v2811
    %2944 = vmatprep.subr.mxu0 0.0
    %2945 = vmatpush1.msra.mxu0 %v2812
    %2946 = vmatprep.subr.mxu0 0.0
    %2947 = vmatpush1.msra.mxu0 %v2813
    %2948 = vmatprep.subr.mxu0 0.0
    %2949 = vmatpush1.msra.mxu0 %v2814
    %2950 = vmatprep.subr.mxu0 0.0
    %2951 = vmatpush1.msra.mxu0 %v2815
    %2952 = vmatprep.subr.mxu0 0.0
    %2953 = vmatpush1.msra.mxu0 %v2816
    %2954 = vmatprep.subr.mxu0 0.0
    %2955 = vmatpush1.msra.mxu0 %v2817
    %2956 = vmatprep.subr.mxu0 0.0
    %2957 = vmatpush1.msra.mxu0 %v2818
    %2958 = vmatprep.subr.mxu0 0.0
    %2959 = vmatpush1.msra.mxu0 %v2819
    %2960 = vmatprep.subr.mxu0 0.0
    %2961 = vmatpush1.msra.mxu0 %v2820
    %2962 = vmatprep.subr.mxu0 0.0
    %2963 = vmatpush1.msra.mxu0 %v2821
    %2964 = vmatprep.subr.mxu0 0.0
    %2965 = vmatpush1.msra.mxu0 %v2822
    %2966 = vmatprep.subr.mxu0 0.0
    %2967 = vmatpush1.msra.mxu0 %v2823
    %2968 = vmatprep.subr.mxu0 0.0
    %2969 = vmatpush1.msra.mxu0 0.0
    %2970 = vmatprep.subr.mxu0 0.0
    %2971 = vmatpush1.msra.mxu0 0.0
    %2972 = vmatprep.subr.mxu0 0.0
    %2973 = vmatpush1.msra.mxu0 0.0
    %2974 = vmatprep.subr.mxu0 0.0
    %2975 = vmatpush1.msra.mxu0 0.0
    %2976 = vmatprep.subr.mxu0 0.0
    %2977 = vmatpush1.msra.mxu0 0.0
    %2978 = vmatprep.subr.mxu0 0.0
    %2979 = vmatpush1.msra.mxu0 0.0
    %2980 = vmatprep.subr.mxu0 0.0
    %2981 = vmatpush1.msra.mxu0 0.0
    %2982 = vmatprep.subr.mxu0 0.0
    %2983 = vmatpush1.msra.mxu0 0.0
    %2984 = vmatprep.subr.mxu0 0.0
    %2985 = vmatpush1.msra.mxu0 0.0
    %2986 = vmatprep.subr.mxu0 0.0
    %2987 = vmatpush1.msra.mxu0 0.0
    %2988 = vmatprep.subr.mxu0 0.0
    %2989 = vmatpush1.msra.mxu0 0.0
    %2990 = vmatprep.subr.mxu0 0.0
    %2991 = vmatpush1.msra.mxu0 0.0
    %2992 = vmatprep.subr.mxu0 0.0
    %2993 = vmatpush1.msra.mxu0 0.0
    %2994 = vmatprep.subr.mxu0 0.0
    %2995 = vmatpush1.msra.mxu0 0.0
    %2996 = vmatprep.subr.mxu0 0.0
    %2997 = vmatpush1.msra.mxu0 0.0
    %2998 = vmatprep.subr.mxu0 0.0
    %2999 = vmatpush1.msra.mxu0 0.0
    %3000 = vmatprep.mubr.f32.mxu0 0.0
    %3001 = vmatmul.mubr.f32.gmra.mrb[0].mxu0 %v2736
    %v3002 = vpop.f32.mrb[0].mxu0
    %v3003 = vadd.f32 %v2908, %v3002
    %v3004 = vpop.f32.mrb[0].mxu0
    %3005 = vmatprep.mubr.f32.mxu0 0.0
    %3006 = vmatmul.mubr.f32.gmra.mrb[0].mxu0 %v2737
    %v3007 = vpop.f32.mrb[0].mxu0
    %v3008 = vadd.f32 %v2913, %v3007
    %v3009 = vpop.f32.mrb[0].mxu0
    %3010 = vmatprep.mubr.f32.mxu0 0.0
    %3011 = vmatmul.mubr.f32.gmra.mrb[0].mxu0 %v2738
    %v3012 = vpop.f32.mrb[0].mxu0
    %v3013 = vadd.f32 %v2918, %v3012
    %v3014 = vpop.f32.mrb[0].mxu0
    %3015 = vmatprep.mubr.f32.mxu0 0.0
    %3016 = vmatmul.mubr.f32.gmra.mrb[0].mxu0 %v2739
    %v3017 = vpop.f32.mrb[0].mxu0
    %v3018 = vadd.f32 %v2923, %v3017
    %v3019 = vpop.f32.mrb[0].mxu0
    %3020 = vmatprep.mubr.f32.mxu0 0.0
    %3021 = vmatmul.mubr.f32.gmra.mrb[0].mxu0 %v2740
    %v3022 = vpop.f32.mrb[0].mxu0
    %v3023 = vadd.f32 %v2928, %v3022
    %v3024 = vpop.f32.mrb[0].mxu0
    %3025 = vmatprep.mubr.f32.mxu0 0.0
    %3026 = vmatmul.mubr.f32.gmra.mrb[0].mxu0 %v2741
    %v3027 = vpop.f32.mrb[0].mxu0
    %v3028 = vadd.f32 %v2933, %v3027
    %v3029 = vpop.f32.mrb[0].mxu0
    %3030 = vdwg.mxu0
    %s3031 = scalar_lea.vmem %s10, 3
    %v3032 = vld [vmem:[%s3031] sm:$0x1]
    %v3034 = vlaneseq
    %v3035 = vshrl.u32 %v3034, 7
    %v3036 = vsub.s32 0, %v3035
    %v3037 = vrot.slane %v3032, %v3036
    %v3039 = vadd.f32 %v3003, %v3037
    %v3040 = vadd.f32 %v3008, %v3037
    %v3041 = vadd.f32 %v3013, %v3037
    %v3042 = vadd.f32 %v3018, %v3037
    %v3043 = vadd.f32 %v3023, %v3037
    %v3044 = vadd.f32 %v3028, %v3037
    %v3045 = vmax.f32 %v3039, 0.0
    %v3046 = vmax.f32 %v3040, 0.0
    %v3047 = vmax.f32 %v3041, 0.0
    %v3048 = vmax.f32 %v3042, 0.0
    %v3049 = vmax.f32 %v3043, 0.0
    %v3050 = vmax.f32 %v3044, 0.0
    %3051 = vmatprep.subr.mxu0 0.0
    %3052 = vmatpush1.msra.mxu0 %v3045
    %3053 = vmatprep.subr.mxu0 0.0
    %3054 = vmatpush1.msra.mxu0 %v3046
    %3055 = vmatprep.subr.mxu0 0.0
    %3056 = vmatpush1.msra.mxu0 %v3047
    %3057 = vmatprep.subr.mxu0 0.0
    %3058 = vmatpush1.msra.mxu0 %v3048
    %3059 = vmatprep.subr.mxu0 0.0
    %3060 = vmatpush1.msra.mxu0 %v3049
    %3061 = vmatprep.subr.mxu0 0.0
    %3062 = vmatpush1.msra.mxu0 %v3050
    %3063 = vmatprep.subr.mxu0 0.0
    %3064 = vmatpush1.msra.mxu0 0.0
    %3065 = vmatprep.subr.mxu0 0.0
    %3066 = vmatpush1.msra.mxu0 0.0
    %3067 = vmatprep.subr.mxu0 0.0
    %3068 = vmatpush1.msra.mxu0 0.0
    %3069 = vmatprep.subr.mxu0 0.0
    %3070 = vmatpush1.msra.mxu0 0.0
    %3071 = vmatprep.subr.mxu0 0.0
    %3072 = vmatpush1.msra.mxu0 0.0
    %3073 = vmatprep.subr.mxu0 0.0
    %3074 = vmatpush1.msra.mxu0 0.0
    %3075 = vmatprep.subr.mxu0 0.0
    %3076 = vmatpush1.msra.mxu0 0.0
    %3077 = vmatprep.subr.mxu0 0.0
    %3078 = vmatpush1.msra.mxu0 0.0
    %3079 = vmatprep.subr.mxu0 0.0
    %3080 = vmatpush1.msra.mxu0 0.0
    %3081 = vmatprep.subr.mxu0 0.0
    %3082 = vmatpush1.msra.mxu0 0.0
    %3083 = vmatprep.subr.mxu0 0.0
    %3084 = vmatpush1.msra.mxu0 0.0
    %3085 = vmatprep.subr.mxu0 0.0
    %3086 = vmatpush1.msra.mxu0 0.0
    %3087 = vmatprep.subr.mxu0 0.0
    %3088 = vmatpush1.msra.mxu0 0.0
    %3089 = vmatprep.subr.mxu0 0.0
    %3090 = vmatpush1.msra.mxu0 0.0
    %3091 = vmatprep.subr.mxu0 0.0
    %3092 = vmatpush1.msra.mxu0 0.0
    %3093 = vmatprep.subr.mxu0 0.0
    %3094 = vmatpush1.msra.mxu0 0.0
    %3095 = vmatprep.subr.mxu0 0.0
    %3096 = vmatpush1.msra.mxu0 0.0
    %3097 = vmatprep.subr.mxu0 0.0
    %3098 = vmatpush1.msra.mxu0 0.0
    %3099 = vmatprep.subr.mxu0 0.0
    %3100 = vmatpush1.msra.mxu0 0.0
    %3101 = vmatprep.subr.mxu0 0.0
    %3102 = vmatpush1.msra.mxu0 0.0
    %3103 = vmatprep.subr.mxu0 0.0
    %3104 = vmatpush1.msra.mxu0 0.0
    %3105 = vmatprep.subr.mxu0 0.0
    %3106 = vmatpush1.msra.mxu0 0.0
    %3107 = vmatprep.subr.mxu0 0.0
    %3108 = vmatpush1.msra.mxu0 0.0
    %3109 = vmatprep.subr.mxu0 0.0
    %3110 = vmatpush1.msra.mxu0 0.0
    %3111 = vmatprep.subr.mxu0 0.0
    %3112 = vmatpush1.msra.mxu0 0.0
    %3113 = vmatprep.subr.mxu0 0.0
    %3114 = vmatpush1.msra.mxu0 0.0
    %3115 = vmatprep.mubr.f32.mxu0 0.0
    %3116 = vmatmul.mubr.f32.gmra.mrb[0].mxu0 %v694
    %v3117 = vpop.f32.mrb[0].mxu0
    %v3118 = vadd.f32 0.0, %v3117
    %v3119 = vpop.f32.mrb[0].mxu0
    %3120 = vmatprep.mubr.f32.mxu0 0.0
    %3121 = vmatmul.mubr.f32.gmra.mrb[0].mxu0 %v697
    %v3122 = vpop.f32.mrb[0].mxu0
    %v3123 = vadd.f32 0.0, %v3122
    %v3124 = vpop.f32.mrb[0].mxu0
    %3125 = vdwg.mxu0
    %v3126 = vmul.f32 %v3118, %v200
    %v3127 = vmul.f32 %v3123, %v202
    %s3128 = scalar_lea.vmem %s11, 3
    %v3129 = vld [vmem:[%s3128] sm:$0x1]
    %s3130 = scalar_lea.vmem %s12, 3
    %v3131 = vld [vmem:[%s3130] sm:$0x1]
    %v3132 = vadd.f32 %v3126, %v3127
    %v3133 = vrot.slane %v3132, 4
    %v3134 = vadd.f32 %v3132, %v3133
    %v3135 = vrot.slane %v3134, 2
    %v3136 = vadd.f32 %v3134, %v3135
    %v3137 = vrot.slane %v3136, 1
    %v3138 = vadd.f32 %v3136, %v3137
    %v3139 = vmul.f32 %v3138, %v785
    %v3140 = vsub.f32 %v3126, %v3139
    %v3141 = vsub.f32 %v3127, %v3139
    %v3142 = vmul.f32 %v3140, %v3140
    %v3143 = vmul.f32 %v3141, %v3141
    %v3144 = vadd.f32 %v3142, %v3143
    %v3145 = vrot.slane %v3144, 4
    %v3146 = vadd.f32 %v3144, %v3145
    %v3147 = vrot.slane %v3146, 2
    %v3148 = vadd.f32 %v3146, %v3147
    %v3149 = vrot.slane %v3148, 1
    %v3150 = vadd.f32 %v3148, %v3149
    %v3151 = vmul.f32 %v3150, %v785
    %v3152 = vadd.f32 %v3151, 1e-05
    %v3153 = vrsqrt.pop %v3152
    %v3154 = vmul.f32 %v3153, %v3129
    %v3155 = vlaneseq
    %v3156 = vshrl.u32 %v3155, 7
    %v3157 = vsub.s32 0, %v3156
    %v3158 = vrot.slane %v3154, %v3157
    %v3159 = vmul.f32 %v3140, %v3158
    %v3160 = vmul.f32 %v3141, %v3158
    %v3162 = vlaneseq
    %v3163 = vshrl.u32 %v3162, 7
    %v3164 = vsub.s32 0, %v3163
    %v3165 = vrot.slane %v3131, %v3164
    %v3167 = vadd.f32 %v3159, %v3165
    %v3168 = vadd.f32 %v3160, %v3165
    %s3169 = scalar_lea.vmem %s13, 3
    %v3170 = vld [vmem:[%s3169] sm:$0x1]
    %s3171 = scalar_lea.vmem %s14, 3
    %v3172 = vld [vmem:[%s3171] sm:$0x1]
    %v3173 = vadd.f32 %v2618, %v2619
    %v3174 = vrot.slane %v3173, 4
    %v3175 = vadd.f32 %v3173, %v3174
    %v3176 = vrot.slane %v3175, 2
    %v3177 = vadd.f32 %v3175, %v3176
    %v3178 = vrot.slane %v3177, 1
    %v3179 = vadd.f32 %v3177, %v3178
    %v3180 = vmul.f32 %v3179, %v785
    %v3181 = vsub.f32 %v2618, %v3180
    %v3182 = vsub.f32 %v2619, %v3180
    %v3183 = vmul.f32 %v3181, %v3181
    %v3184 = vmul.f32 %v3182, %v3182
    %v3185 = vadd.f32 %v3183, %v3184
    %v3186 = vrot.slane %v3185, 4
    %v3187 = vadd.f32 %v3185, %v3186
    %v3188 = vrot.slane %v3187, 2
    %v3189 = vadd.f32 %v3187, %v3188
    %v3190 = vrot.slane %v3189, 1
    %v3191 = vadd.f32 %v3189, %v3190
    %v3192 = vmul.f32 %v3191, %v785
    %v3193 = vadd.f32 %v3192, 1e-05
    %v3194 = vrsqrt.pop %v3193
    %v3195 = vmul.f32 %v3194, %v3170
    %v3196 = vlaneseq
    %v3197 = vshrl.u32 %v3196, 7
    %v3198 = vsub.s32 0, %v3197
    %v3199 = vrot.slane %v3195, %v3198
    %v3200 = vmul.f32 %v3181, %v3199
    %v3201 = vmul.f32 %v3182, %v3199
    %v3203 = vlaneseq
    %v3204 = vshrl.u32 %v3203, 7
    %v3205 = vsub.s32 0, %v3204
    %v3206 = vrot.slane %v3172, %v3205
    %v3208 = vadd.f32 %v3200, %v3206
    %v3209 = vadd.f32 %v3201, %v3206
    %s3210 = scalar_lea.vmem [#allocation10], 384
    %v3211 = vld [vmem:[%s3210] sm:$0xff]
    %v3212 = vld [vmem:[%s3210 + $0x8] sm:$0xff]
    %v3213 = vld [vmem:[%s3210 + $0x10] sm:$0xff]
    %v3214 = vld [vmem:[%s3210 + $0x18] sm:$0xff]
    %v3215 = vld [vmem:[%s3210 + $0x20] sm:$0xff]
    %v3216 = vld [vmem:[%s3210 + $0x28] sm:$0xff]
    %v3217 = vld [vmem:[%s3210 + $0x30] sm:$0xff]
    %v3218 = vld [vmem:[%s3210 + $0x38] sm:$0xff]
    %v3219 = vld [vmem:[%s3210 + $0x40] sm:$0xff]
    %v3220 = vld [vmem:[%s3210 + $0x48] sm:$0xff]
    %v3221 = vld [vmem:[%s3210 + $0x50] sm:$0xff]
    %v3222 = vld [vmem:[%s3210 + $0x58] sm:$0xff]
    %v3223 = vld [vmem:[%s3210 + $0x60] sm:$0xff]
    %v3224 = vld [vmem:[%s3210 + $0x68] sm:$0xff]
    %v3225 = vld [vmem:[%s3210 + $0x70] sm:$0xff]
    %v3226 = vld [vmem:[%s3210 + $0x78] sm:$0xff]
    %s3227 = scalar_lea.vmem [#allocation11], 384
    %v3228 = vld [vmem:[%s3227] sm:$0xff]
    %v3229 = vld [vmem:[%s3227 + $0x8] sm:$0xff]
    %v3230 = vld [vmem:[%s3227 + $0x10] sm:$0xff]
    %v3231 = vld [vmem:[%s3227 + $0x18] sm:$0xff]
    %v3232 = vld [vmem:[%s3227 + $0x20] sm:$0xff]
    %v3233 = vld [vmem:[%s3227 + $0x28] sm:$0xff]
    %v3234 = vld [vmem:[%s3227 + $0x30] sm:$0xff]
    %v3235 = vld [vmem:[%s3227 + $0x38] sm:$0xff]
    %v3236 = vld [vmem:[%s3227 + $0x40] sm:$0xff]
    %v3237 = vld [vmem:[%s3227 + $0x48] sm:$0xff]
    %v3238 = vld [vmem:[%s3227 + $0x50] sm:$0xff]
    %v3239 = vld [vmem:[%s3227 + $0x58] sm:$0xff]
    %v3240 = vld [vmem:[%s3227 + $0x60] sm:$0xff]
    %v3241 = vld [vmem:[%s3227 + $0x68] sm:$0xff]
    %v3242 = vld [vmem:[%s3227 + $0x70] sm:$0xff]
    %v3243 = vld [vmem:[%s3227 + $0x78] sm:$0xff]
    %3244 = vmatprep.subr.mxu0 0.0
    %3245 = vmatpush1.msra.mxu0 %v3228
    %3246 = vmatprep.subr.mxu0 0.0
    %3247 = vmatpush1.msra.mxu0 %v3229
    %3248 = vmatprep.subr.mxu0 0.0
    %3249 = vmatpush1.msra.mxu0 %v3230
    %3250 = vmatprep.subr.mxu0 0.0
    %3251 = vmatpush1.msra.mxu0 %v3231
    %3252 = vmatprep.subr.mxu0 0.0
    %3253 = vmatpush1.msra.mxu0 %v3232
    %3254 = vmatprep.subr.mxu0 0.0
    %3255 = vmatpush1.msra.mxu0 %v3233
    %3256 = vmatprep.subr.mxu0 0.0
    %3257 = vmatpush1.msra.mxu0 %v3234
    %3258 = vmatprep.subr.mxu0 0.0
    %3259 = vmatpush1.msra.mxu0 %v3235
    %3260 = vmatprep.subr.mxu0 0.0
    %3261 = vmatpush1.msra.mxu0 %v3236
    %3262 = vmatprep.subr.mxu0 0.0
    %3263 = vmatpush1.msra.mxu0 %v3237
    %3264 = vmatprep.subr.mxu0 0.0
    %3265 = vmatpush1.msra.mxu0 %v3238
    %3266 = vmatprep.subr.mxu0 0.0
    %3267 = vmatpush1.msra.mxu0 %v3239
    %3268 = vmatprep.subr.mxu0 0.0
    %3269 = vmatpush1.msra.mxu0 %v3240
    %3270 = vmatprep.subr.mxu0 0.0
    %3271 = vmatpush1.msra.mxu0 %v3241
    %3272 = vmatprep.subr.mxu0 0.0
    %3273 = vmatpush1.msra.mxu0 %v3242
    %3274 = vmatprep.subr.mxu0 0.0
    %3275 = vmatpush1.msra.mxu0 %v3243
    %3276 = vmatprep.subr.mxu0 0.0
    %3277 = vmatpush1.msra.mxu0 0.0
    %3278 = vmatprep.subr.mxu0 0.0
    %3279 = vmatpush1.msra.mxu0 0.0
    %3280 = vmatprep.subr.mxu0 0.0
    %3281 = vmatpush1.msra.mxu0 0.0
    %3282 = vmatprep.subr.mxu0 0.0
    %3283 = vmatpush1.msra.mxu0 0.0
    %3284 = vmatprep.subr.mxu0 0.0
    %3285 = vmatpush1.msra.mxu0 0.0
    %3286 = vmatprep.subr.mxu0 0.0
    %3287 = vmatpush1.msra.mxu0 0.0
    %3288 = vmatprep.subr.mxu0 0.0
    %3289 = vmatpush1.msra.mxu0 0.0
    %3290 = vmatprep.subr.mxu0 0.0
    %3291 = vmatpush1.msra.mxu0 0.0
    %3292 = vmatprep.subr.mxu0 0.0
    %3293 = vmatpush1.msra.mxu0 0.0
    %3294 = vmatprep.subr.mxu0 0.0
    %3295 = vmatpush1.msra.mxu0 0.0
    %3296 = vmatprep.subr.mxu0 0.0
    %3297 = vmatpush1.msra.mxu0 0.0
    %3298 = vmatprep.subr.mxu0 0.0
    %3299 = vmatpush1.msra.mxu0 0.0
    %3300 = vmatprep.subr.mxu0 0.0
    %3301 = vmatpush1.msra.mxu0 0.0
    %3302 = vmatprep.subr.mxu0 0.0
    %3303 = vmatpush1.msra.mxu0 0.0
    %3304 = vmatprep.subr.mxu0 0.0
    %3305 = vmatpush1.msra.mxu0 0.0
    %3306 = vmatprep.subr.mxu0 0.0
    %3307 = vmatpush1.msra.mxu0 0.0
    %3308 = vmatprep.mubr.f32.mxu0 0.0
    %3309 = vmatmul.mubr.f32.gmra.mrb[0].mxu0 %v3208
    %v3310 = vpop.f32.mrb[0].mxu0
    %v3311 = vadd.f32 0.0, %v3310
    %v3312 = vpop.f32.mrb[0].mxu0
    %3313 = vmatprep.mubr.f32.mxu0 0.0
    %3314 = vmatmul.mubr.f32.gmra.mrb[0].mxu0 %v3209
    %v3315 = vpop.f32.mrb[0].mxu0
    %v3316 = vadd.f32 0.0, %v3315
    %v3317 = vpop.f32.mrb[0].mxu0
    %3318 = vdwg.mxu0
    %3319 = vmatprep.subr.mxu0 0.0
    %3320 = vmatpush1.msra.mxu0 %v3211
    %3321 = vmatprep.subr.mxu0 0.0
    %3322 = vmatpush1.msra.mxu0 %v3212
    %3323 = vmatprep.subr.mxu0 0.0
    %3324 = vmatpush1.msra.mxu0 %v3213
    %3325 = vmatprep.subr.mxu0 0.0
    %3326 = vmatpush1.msra.mxu0 %v3214
    %3327 = vmatprep.subr.mxu0 0.0
    %3328 = vmatpush1.msra.mxu0 %v3215
    %3329 = vmatprep.subr.mxu0 0.0
    %3330 = vmatpush1.msra.mxu0 %v3216
    %3331 = vmatprep.subr.mxu0 0.0
    %3332 = vmatpush1.msra.mxu0 %v3217
    %3333 = vmatprep.subr.mxu0 0.0
    %3334 = vmatpush1.msra.mxu0 %v3218
    %3335 = vmatprep.subr.mxu0 0.0
    %3336 = vmatpush1.msra.mxu0 %v3219
    %3337 = vmatprep.subr.mxu0 0.0
    %3338 = vmatpush1.msra.mxu0 %v3220
    %3339 = vmatprep.subr.mxu0 0.0
    %3340 = vmatpush1.msra.mxu0 %v3221
    %3341 = vmatprep.subr.mxu0 0.0
    %3342 = vmatpush1.msra.mxu0 %v3222
    %3343 = vmatprep.subr.mxu0 0.0
    %3344 = vmatpush1.msra.mxu0 %v3223
    %3345 = vmatprep.subr.mxu0 0.0
    %3346 = vmatpush1.msra.mxu0 %v3224
    %3347 = vmatprep.subr.mxu0 0.0
    %3348 = vmatpush1.msra.mxu0 %v3225
    %3349 = vmatprep.subr.mxu0 0.0
    %3350 = vmatpush1.msra.mxu0 %v3226
    %3351 = vmatprep.subr.mxu0 0.0
    %3352 = vmatpush1.msra.mxu0 0.0
    %3353 = vmatprep.subr.mxu0 0.0
    %3354 = vmatpush1.msra.mxu0 0.0
    %3355 = vmatprep.subr.mxu0 0.0
    %3356 = vmatpush1.msra.mxu0 0.0
    %3357 = vmatprep.subr.mxu0 0.0
    %3358 = vmatpush1.msra.mxu0 0.0
    %3359 = vmatprep.subr.mxu0 0.0
    %3360 = vmatpush1.msra.mxu0 0.0
    %3361 = vmatprep.subr.mxu0 0.0
    %3362 = vmatpush1.msra.mxu0 0.0
    %3363 = vmatprep.subr.mxu0 0.0
    %3364 = vmatpush1.msra.mxu0 0.0
    %3365 = vmatprep.subr.mxu0 0.0
    %3366 = vmatpush1.msra.mxu0 0.0
    %3367 = vmatprep.subr.mxu0 0.0
    %3368 = vmatpush1.msra.mxu0 0.0
    %3369 = vmatprep.subr.mxu0 0.0
    %3370 = vmatpush1.msra.mxu0 0.0
    %3371 = vmatprep.subr.mxu0 0.0
    %3372 = vmatpush1.msra.mxu0 0.0
    %3373 = vmatprep.subr.mxu0 0.0
    %3374 = vmatpush1.msra.mxu0 0.0
    %3375 = vmatprep.subr.mxu0 0.0
    %3376 = vmatpush1.msra.mxu0 0.0
    %3377 = vmatprep.subr.mxu0 0.0
    %3378 = vmatpush1.msra.mxu0 0.0
    %3379 = vmatprep.subr.mxu0 0.0
    %3380 = vmatpush1.msra.mxu0 0.0
    %3381 = vmatprep.subr.mxu0 0.0
    %3382 = vmatpush1.msra.mxu0 0.0
    %3383 = vmatprep.mubr.f32.mxu0 0.0
    %3384 = vmatmul.mubr.f32.gmra.mrb[0].mxu0 %v3167
    %v3385 = vpop.f32.mrb[0].mxu0
    %v3386 = vadd.f32 %v3311, %v3385
    %v3387 = vpop.f32.mrb[0].mxu0
    %3388 = vmatprep.mubr.f32.mxu0 0.0
    %3389 = vmatmul.mubr.f32.gmra.mrb[0].mxu0 %v3168
    %v3390 = vpop.f32.mrb[0].mxu0
    %v3391 = vadd.f32 %v3316, %v3390
    %v3392 = vpop.f32.mrb[0].mxu0
    %3393 = vdwg.mxu0
    %s3394 = scalar_lea.vmem %s17, 3
    %v3395 = vld [vmem:[%s3394] sm:$0x1]
    %v3397 = vlaneseq
    %v3398 = vshrl.u32 %v3397, 7
    %v3399 = vsub.s32 0, %v3398
    %v3400 = vrot.slane %v3395, %v3399
    %v3402 = vadd.f32 %v3386, %v3400
    %v3403 = vadd.f32 %v3391, %v3400
    %v3404 = vmax.f32 %v3402, 0.0
    %v3405 = vmax.f32 %v3403, 0.0
    %3406 = vst [vmem:[#allocation13] sm:$0xff] %v3404
    %3407 = vst [vmem:[#allocation13 + $0x8] sm:$0xff] %v3405
    // Predicated region
    $region98: #{tpu_custom_call.1} parent=1 // pred_check
      _
    $region99: #{tpu_custom_call.1} parent=1 // pred_check_branch
      %3409 = sbr.rel (0) target = $region101
    $region100: #{tpu_custom_call.1} parent=1 // pred_region
      %s3411 = ssub.s32 256, 256
      %3412 = vsyncadd [#allocation4], %s3411
      %s3413 = sshll.u32 [#allocation13], 4
      %s3414 = int_to_ptr.vmem [resolvable:$true] %s3413
      %3419 = dma.vmem_to_hbm [thread:$0]  %s3414, 256, %s18, [#allocation4], 128, 128, 8
    $region101: #{tpu_custom_call.1} parent=1 // pred_fallthru
      _
    // Predicated region
    $region102: #{tpu_custom_call.1} parent=1 // pred_check
      _
    $region103: #{tpu_custom_call.1} parent=1 // pred_check_branch
      %3421 = sbr.rel (0) target = $region105
    $region104: #{tpu_custom_call.1} parent=1 // pred_region
      %3422 = dma.done [#allocation4], 256
    $region105: #{tpu_custom_call.1} parent=1 // pred_fallthru
      _
    %3423 = vsyncpa [#allocation3], 1
    %3424 = vsyncpa [#allocation6], 1
    %3425 = vsyncpa [#allocation9], 1
    %3426 = vsyncpa [#allocation12], 1
    %3427 = vsyncpa [#allocation4], 1

</llo_original>
